<compile_context>
chip_gen: v7x
topology: tpu7x:2x2x1
jax: 0.10.0
libtpu: 0.0.40
codegen_flags: <defaults>
</compile_context>

<pallas_src>
import jax
import jax.numpy as jnp
from jax import lax
from jax.experimental import pallas as pl
from jax.experimental.pallas import tpu as pltpu

NUM_HEADS = 8
LN_EPS = 1e-5


# ----------------------------- small helpers --------------------------------

def _layernorm(x, gamma, beta):
    mu = jnp.mean(x, axis=-1, keepdims=True)
    var = jnp.mean((x - mu) ** 2, axis=-1, keepdims=True)
    return (x - mu) * lax.rsqrt(var + LN_EPS) * gamma + beta


def _erf(x):
    # Abramowitz & Stegun 7.1.26 (|err| <= ~1e-4 incl. approx reciprocal);
    # uses only mul/add/exp/reciprocal so it always lowers in Mosaic.
    a1, a2, a3, a4, a5 = (0.254829592, -0.284496736, 1.421413741,
                          -1.453152027, 1.061405429)
    p = 0.3275911
    sgn = jnp.where(x >= 0.0, 1.0, -1.0)
    ax = jnp.abs(x)
    t = pl.reciprocal(1.0 + p * ax, approx=True)          # EUP, not a VALU divide
    poly = ((((a5 * t + a4) * t + a3) * t + a2) * t + a1) * t
    return sgn * (1.0 - poly * jnp.exp(-ax * ax))


def _gelu_exact(z):
    # torch.nn.GELU default (erf form)
    return 0.5 * z * (1.0 + _erf(z * 0.7071067811865476))


def _device_kind():
    try:
        return jax.devices()[0].device_kind.lower()
    except Exception:
        return ""


def _vmem_capacity_bytes():
    try:
        cap = int(pltpu.get_tpu_info().vmem_capacity_bytes)
        if cap > 0:
            return cap
    except Exception:
        pass
    kind = _device_kind()
    if "v5" in kind or "v6" in kind:
        return 128 << 20
    return 64 << 20          # conservative default (v7x per-TensorCore)


def _has_bf16_vpu():
    # v6e / v7x have packed bf16 VALU; v5e and earlier do not.
    kind = _device_kind()
    return not any(t in kind for t in ("v2", "v3", "v4", "v5"))


def _pick_bt(B, N, C, Hm, vmem_cap):
    """Batch-pack factor: pack Bt batch items (Bt*N rows) per grid step so the
    MXU M dimension is filled, while (a) the grid keeps >= 2 steps (both v7x
    TensorCores busy) and (b) the per-step VMEM footprint fits the device."""
    weight_b = 2 * (4 * C * C + 2 * C * Hm)                 # resident bf16 weights
    budget = max(1 << 20, int(0.55 * vmem_cap) - weight_b - (4 << 20))
    per_row = 4 * C * 14 + 2 * C * 6                        # ~14 f32 + ~6 bf16 C-wide temps/row
    max_rows = max(8, budget // per_row)

    cands = [bt for bt in range(1, B + 1)
             if B % bt == 0 and ((bt * N) % 8 == 0 or bt == B)]
    multi = [bt for bt in cands if B // bt >= 2] or cands or [B]
    good = [bt for bt in multi if bt * N <= max_rows]
    if not good:
        return min(multi)
    pref = [bt for bt in good if bt * N >= 256]
    return min(pref) if pref else max(good)


def _pick_mlp_chunk(btn, Hm, requested=None):
    """Row-chunk for the norm2+MLP section so the (rows, Hm) f32 GELU temp is
    bounded (~4 MiB).  chunk must divide btn and be a multiple of 8."""
    if requested is not None:
        if requested >= btn:
            return btn
        assert btn % requested == 0 and requested % 8 == 0, \
            "mlp_row_chunk must divide Bt*N and be a multiple of 8"
        return requested
    limit = max(8, (4 << 20) // (4 * max(Hm, 1)))
    if btn <= limit or btn % 8 != 0:
        return btn
    divs = [d for d in range(8, btn + 1, 8) if btn % d == 0]
    if not divs:
        return btn
    fit = [d for d in divs if d <= limit]
    return max(fit) if fit else min(divs)


# ------------------------------- the kernel ---------------------------------

def _build_kernel(Bt, N, C, H, Hm, mlp_chunk, use_bf16_vpu):
    BtN = Bt * N
    f32, bf16 = jnp.float32, jnp.bfloat16

    def kernel(x_ref,                    # (BtN, C)  packed rows of Bt batch items
               cls_ref,                  # (Bt, BtN) bf16  one-hot of each item's CLS row
               seg_ref,                  # (Bt, BtN) bf16  1 if row belongs to item b
               rep_ref,                  # (BtN, Bt) bf16  = seg.T  (per-item broadcast)
               e_ref, et_ref,            # (C, H) / (H, C) bf16  head selectors
               g1_ref, b1_ref,           # (1, C) f32
               wq_ref,                   # (C, C)  bf16  (pre-scaled by head_dim**-0.5)
               wkv_ref,                  # (C, 2C) bf16  [wk | wv]
               wp_ref, bp_ref,           # (C, C) bf16, (1, C) f32
               g2_ref, b2_ref,           # (1, C) f32
               w1_ref, b1m_ref,          # (C, Hm) bf16, (1, Hm) f32
               w2_ref, b2m_ref,          # (Hm, C) bf16, (1, C) f32
               o_ref):                   # (BtN, C)
        x = x_ref[...].astype(f32)

        # ---- norm1 ----
        h1b = _layernorm(x, g1_ref[...], b1_ref[...]).astype(bf16)

        # ---- K/V: one fused pass of h1b through the MXU ----
        kv = jnp.dot(h1b, wkv_ref[...], preferred_element_type=f32)       # (BtN, 2C)
        k = kv[:, :C]
        v = kv[:, C:]

        # ---- Q from each packed batch item's CLS row ----
        q_in = jnp.dot(cls_ref[...], h1b, preferred_element_type=f32)     # (Bt, C)
        q = jnp.dot(q_in.astype(bf16), wq_ref[...],
                    preferred_element_type=f32)                           # (Bt, C), scaled
        q_rows = jnp.dot(rep_ref[...], q.astype(bf16),
                         preferred_element_type=f32)                      # (BtN, C)

        # per-(row, head) scores: s[r,h] = sum_{c in head h} q[item(r),c]*k[r,c]
        if use_bf16_vpu:
            kq = k.astype(bf16) * q_rows.astype(bf16)
        else:
            kq = (k * q_rows).astype(bf16)          # v5e: product in f32, cast for MXU
        s = jnp.dot(kq, e_ref[...], preferred_element_type=f32)           # (BtN, H)

        # ---- softmax over each item's N key rows (per-segment max: robust) ----
        s3 = s.reshape(Bt, N, H)
        m = jnp.max(s3, axis=1, keepdims=True)                            # (Bt, 1, H)
        p3 = jnp.exp(s3 - m)
        denom = jnp.sum(p3, axis=1, keepdims=True)                        # >= 1
        a = (p3 * pl.reciprocal(denom, approx=True)).reshape(BtN, H)

        # attn_out[b,c] = sum_{rows r of item b} a[r, head(c)] * v[r,c]  (MXU segment-sum)
        a_c = jnp.dot(a.astype(bf16), et_ref[...], preferred_element_type=f32)  # (BtN, C)
        if use_bf16_vpu:
            av = a_c.astype(bf16) * v.astype(bf16)
        else:
            av = (a_c * v).astype(bf16)
        attn = jnp.dot(seg_ref[...], av, preferred_element_type=f32)      # (Bt, C)
        proj = (jnp.dot(attn.astype(bf16), wp_ref[...],
                        preferred_element_type=f32) + bp_ref[...])        # (Bt, C)

        # residual: attention output is (B,1,C) repeated over N  ==  per-item broadcast add
        x2 = x + jnp.dot(rep_ref[...], proj.astype(bf16),
                         preferred_element_type=f32)                      # (BtN, C)

        # ---- norm2 + MLP (optionally row-tiled to bound the (rows, Hm) temp) ----
        def mlp_rows(rows):
            h2 = _layernorm(rows, g2_ref[...], b2_ref[...])
            z = (jnp.dot(h2.astype(bf16), w1_ref[...],
                         preferred_element_type=f32) + b1m_ref[...])
            z = _gelu_exact(z)
            return rows + (jnp.dot(z.astype(bf16), w2_ref[...],
                                   preferred_element_type=f32) + b2m_ref[...])

        if mlp_chunk >= BtN:
            o_ref[...] = mlp_rows(x2).astype(o_ref.dtype)
        else:
            # stash the residual stream in the output block, then rewrite it
            # chunk by chunk (keeps the GELU intermediate at chunk x Hm).
            o_ref[...] = x2.astype(o_ref.dtype)
            n_chunks = BtN // mlp_chunk

            def body(i, carry):
                r0 = pl.multiple_of(i * mlp_chunk, mlp_chunk)
                rows = o_ref[pl.ds(r0, mlp_chunk), :].astype(f32)
                o_ref[pl.ds(r0, mlp_chunk), :] = mlp_rows(rows).astype(o_ref.dtype)
                return carry

            lax.fori_loop(0, n_chunks, body, 0, unroll=(n_chunks <= 4))

    return kernel


# ------------------------------- the wrapper ---------------------------------

def prepare_params(params, *, num_heads=NUM_HEADS):
    """One-time weight prep (hoisted out of the per-call path): bf16 casts,
    1/sqrt(head_dim) folded into wq, wk|wv packed into one matrix."""
    C = params["wq"].shape[0]
    dh = C // num_heads
    bf16 = jnp.bfloat16
    return dict(
        g1=params["g1"], b1=params["b1"],
        wq=(params["wq"] * (dh ** -0.5)).astype(bf16),
        wkv=jnp.concatenate([params["wk"], params["wv"]], axis=1).astype(bf16),
        wp=params["wp"].astype(bf16), bp=params["bp"],
        g2=params["g2"], b2=params["b2"],
        w1=params["w1"].astype(bf16), b1m=params["b1m"],
        w2=params["w2"].astype(bf16), b2m=params["b2m"],
    )


def repeat_cls_block(x, prepped, *, num_heads=NUM_HEADS, mlp_row_chunk=None):
    B, N, C = x.shape
    assert C % num_heads == 0, "dim must be divisible by num_heads"
    H = num_heads
    dh = C // H
    Hm = prepped["w1"].shape[1]

    vmem_cap = _vmem_capacity_bytes()
    use_bf16_vpu = _has_bf16_vpu()

    Bt = _pick_bt(B, N, C, Hm, vmem_cap)
    BtN = Bt * N
    grid = (B // Bt,)
    mlp_chunk = _pick_mlp_chunk(BtN, Hm, mlp_row_chunk)

    f32, bf16 = jnp.float32, jnp.bfloat16

    # 0/1 selection matrices, exact in bf16, resident in VMEM (constant index_map).
    rows = jnp.arange(BtN)
    bidx = jnp.arange(Bt)
    seg = (rows[None, :] // N == bidx[:, None]).astype(bf16)     # (Bt, BtN)
    cls = (rows[None, :] == (bidx * N)[:, None]).astype(bf16)    # (Bt, BtN)
    rep = seg.T                                                  # (BtN, Bt)
    ch = jnp.arange(C)
    e_mat = (ch[:, None] // dh == jnp.arange(H)[None, :]).astype(bf16)   # (C, H)
    et_mat = e_mat.T                                                     # (H, C)

    x2d = x.reshape(B * N, C)
    kernel = _build_kernel(Bt, N, C, H, Hm, mlp_chunk, use_bf16_vpu)

    def _run(use_buffered):
        def const_spec(shape):
            idx = lambda *_: (0,) * len(shape)
            if use_buffered:
                return pl.BlockSpec(shape, idx, pipeline_mode=pl.Buffered(1))
            return pl.BlockSpec(shape, idx)

        in_specs = [
            pl.BlockSpec((BtN, C), lambda b: (b, 0)),                   # x (packed rows)
            const_spec((Bt, BtN)), const_spec((Bt, BtN)),               # cls, seg
            const_spec((BtN, Bt)),                                      # rep
            const_spec((C, H)), const_spec((H, C)),                     # E, ET
            const_spec((1, C)), const_spec((1, C)),                     # g1, b1
            const_spec((C, C)), const_spec((C, 2 * C)),                 # wq, wkv
            const_spec((C, C)), const_spec((1, C)),                     # wp, bp
            const_spec((1, C)), const_spec((1, C)),                     # g2, b2
            const_spec((C, Hm)), const_spec((1, Hm)),                   # w1, b1m
            const_spec((Hm, C)), const_spec((1, C)),                    # w2, b2m
        ]

        # VMEM budget (generation-aware, no double-hedge).
        wbuf = 1 if use_buffered else 2
        const_b = wbuf * (2 * (4 * C * C + 2 * C * Hm)                  # bf16 weights
                          + 4 * (6 * C + Hm)                            # f32 gains/biases
                          + 2 * (3 * Bt * BtN + 2 * C * H))             # bf16 selectors
        io_b = 2 * 2 * (BtN * C * 4)                                    # x + out, 2x buffered
        act_b = 4 * BtN * 7 * C + 2 * BtN * 3 * C + 4 * mlp_chunk * (Hm + C)
        est = const_b + io_b + act_b
        vmem_limit = int(min(int(0.85 * vmem_cap), max(32 << 20, est + (8 << 20))))

        return pl.pallas_call(
            kernel,
            out_shape=jax.ShapeDtypeStruct((B * N, C), x.dtype),
            grid_spec=pltpu.PrefetchScalarGridSpec(
                num_scalar_prefetch=0,
                grid=grid,
                in_specs=in_specs,
                out_specs=pl.BlockSpec((BtN, C), lambda b: (b, 0)),
            ),
            compiler_params=pltpu.CompilerParams(
                dimension_semantics=("parallel",),
                vmem_limit_bytes=vmem_limit,
            ),
        )(
            x2d, cls, seg, rep, e_mat, et_mat,
            prepped["g1"], prepped["b1"],
            prepped["wq"], prepped["wkv"], prepped["wp"], prepped["bp"],
            prepped["g2"], prepped["b2"],
            prepped["w1"], prepped["b1m"], prepped["w2"], prepped["b2m"],
        )

    if hasattr(pl, "Buffered"):
        try:
            out2d = _run(True)
        except Exception:
            out2d = _run(False)        # fall back to default double-buffering
    else:
        out2d = _run(False)

    return out2d.reshape(B, N, C)


# ------------------------------- reference -----------------------------------

def ref_forward(x, p, num_heads=NUM_HEADS):
    """Pure-JAX f32 reference mirroring the PyTorch module exactly."""
    B, N, C = x.shape
    dh = C // num_heads

    def ln(y, g, b):
        mu = y.mean(-1, keepdims=True)
        var = ((y - mu) ** 2).mean(-1, keepdims=True)
        return (y - mu) / jnp.sqrt(var + LN_EPS) * g + b

    h = ln(x, p["g1"][0], p["b1"][0])
    q = (h[:, :1] @ p["wq"]).reshape(B, 1, num_heads, dh).transpose(0, 2, 1, 3)
    k = (h @ p["wk"]).reshape(B, N, num_heads, dh).transpose(0, 2, 1, 3)
    v = (h @ p["wv"]).reshape(B, N, num_heads, dh).transpose(0, 2, 1, 3)
    attn = jax.nn.softmax((q @ k.transpose(0, 1, 3, 2)) * dh ** -0.5, axis=-1)
    out = (attn @ v).transpose(0, 2, 1, 3).reshape(B, 1, C)
    out = out @ p["wp"] + p["bp"][0]
    x = x + out                                    # .repeat(1, N, 1) residual
    h2 = ln(x, p["g2"][0], p["b2"][0])
    z = jax.nn.gelu(h2 @ p["w1"] + p["b1m"][0], approximate=False)
    return x + (z @ p["w2"] + p["b2m"][0])


# --------------------------------- demo ---------------------------------------

if __name__ == "__main__":
    def make_params(key, C, Hm):
        ks = jax.random.split(key, 13)
        s = 0.05
        return {
            "g1": 1.0 + s * jax.random.normal(ks[0], (1, C), jnp.float32),
            "b1": s * jax.random.normal(ks[1], (1, C), jnp.float32),
            "wq": s * jax.random.normal(ks[2], (C, C), jnp.float32),
            "wk": s * jax.random.normal(ks[3], (C, C), jnp.float32),
            "wv": s * jax.random.normal(ks[4], (C, C), jnp.float32),
            "wp": s * jax.random.normal(ks[5], (C, C), jnp.float32),
            "bp": s * jax.random.normal(ks[6], (1, C), jnp.float32),
            "g2": 1.0 + s * jax.random.normal(ks[7], (1, C), jnp.float32),
            "b2": s * jax.random.normal(ks[8], (1, C), jnp.float32),
            "w1": s * jax.random.normal(ks[9], (C, Hm), jnp.float32),
            "b1m": s * jax.random.normal(ks[10], (1, Hm), jnp.float32),
            "w2": s * jax.random.normal(ks[11], (Hm, C), jnp.float32),
            "b2m": s * jax.random.normal(ks[12], (1, C), jnp.float32),
        }

    key = jax.random.PRNGKey(0)
    C = 32
    Hm = int(C * 4.0)
    params = make_params(key, C, Hm)
    prepped = prepare_params(params)

    # test 1: B=2, N=8 -> Bt=1 packing, single-shot MLP path
    x1 = jax.random.normal(jax.random.fold_in(key, 7), (2, 8, C), jnp.float32)
    out1 = jax.block_until_ready(repeat_cls_block(x1, prepped))
    ref1 = jax.block_until_ready(ref_forward(x1, params))
    assert out1.shape == x1.shape
    assert jnp.allclose(out1, ref1, atol=2e-2, rtol=2e-2), (
        f"test1 max abs err {jnp.max(jnp.abs(out1 - ref1))}")

    # test 2: B=4, N=8 -> Bt=2 batch packing + forced row-tiled MLP path
    x2 = jax.random.normal(jax.random.fold_in(key, 11), (4, 8, C), jnp.float32)
    out2 = jax.block_until_ready(repeat_cls_block(x2, prepped, mlp_row_chunk=8))
    ref2 = jax.block_until_ready(ref_forward(x2, params))
    assert out2.shape == x2.shape
    assert jnp.allclose(out2, ref2, atol=2e-2, rtol=2e-2), (
        f"test2 max abs err {jnp.max(jnp.abs(out2 - ref2))}")

    print("KERNEL_OK")
</pallas_src>

<mosaic_0001>
module attributes {stable_mosaic.version = 11 : i64} {
  func.func @kernel(%arg0: i32, %arg1: memref<8x32xf32, #tpu.memory_space<vmem>>, %arg2: memref<1x8xbf16, #tpu.memory_space<vmem>>, %arg3: memref<1x8xbf16, #tpu.memory_space<vmem>>, %arg4: memref<8x1xbf16, #tpu.memory_space<vmem>>, %arg5: memref<32x8xbf16, #tpu.memory_space<vmem>>, %arg6: memref<8x32xbf16, #tpu.memory_space<vmem>>, %arg7: memref<1x32xf32, #tpu.memory_space<vmem>>, %arg8: memref<1x32xf32, #tpu.memory_space<vmem>>, %arg9: memref<32x32xbf16, #tpu.memory_space<vmem>>, %arg10: memref<32x64xbf16, #tpu.memory_space<vmem>>, %arg11: memref<32x32xbf16, #tpu.memory_space<vmem>>, %arg12: memref<1x32xf32, #tpu.memory_space<vmem>>, %arg13: memref<1x32xf32, #tpu.memory_space<vmem>>, %arg14: memref<1x32xf32, #tpu.memory_space<vmem>>, %arg15: memref<32x128xbf16, #tpu.memory_space<vmem>>, %arg16: memref<1x128xf32, #tpu.memory_space<vmem>>, %arg17: memref<128x32xbf16, #tpu.memory_space<vmem>>, %arg18: memref<1x32xf32, #tpu.memory_space<vmem>>, %arg19: memref<8x32xf32, #tpu.memory_space<vmem>>) attributes {dimension_semantics = [#tpu.dimension_semantics<parallel>], iteration_bounds = array<i64: 2>, scalar_prefetch = 0 : i64, scratch_operands = 0 : i64, tpu.core_type = #tpu.core_type<tc>, window_params = [{transform_indices = @transform_0, window_bounds = array<i64: 8, 32>}, {pipeline_mode = #tpu.pipeline_mode<synchronous>, transform_indices = @transform_1, window_bounds = array<i64: 1, 8>}, {pipeline_mode = #tpu.pipeline_mode<synchronous>, transform_indices = @transform_2, window_bounds = array<i64: 1, 8>}, {pipeline_mode = #tpu.pipeline_mode<synchronous>, transform_indices = @transform_3, window_bounds = array<i64: 8, 1>}, {pipeline_mode = #tpu.pipeline_mode<synchronous>, transform_indices = @transform_4, window_bounds = array<i64: 32, 8>}, {pipeline_mode = #tpu.pipeline_mode<synchronous>, transform_indices = @transform_5, window_bounds = array<i64: 8, 32>}, {pipeline_mode = #tpu.pipeline_mode<synchronous>, transform_indices = @transform_6, window_bounds = array<i64: 1, 32>}, {pipeline_mode = #tpu.pipeline_mode<synchronous>, transform_indices = @transform_7, window_bounds = array<i64: 1, 32>}, {pipeline_mode = #tpu.pipeline_mode<synchronous>, transform_indices = @transform_8, window_bounds = array<i64: 32, 32>}, {pipeline_mode = #tpu.pipeline_mode<synchronous>, transform_indices = @transform_9, window_bounds = array<i64: 32, 64>}, {pipeline_mode = #tpu.pipeline_mode<synchronous>, transform_indices = @transform_10, window_bounds = array<i64: 32, 32>}, {pipeline_mode = #tpu.pipeline_mode<synchronous>, transform_indices = @transform_11, window_bounds = array<i64: 1, 32>}, {pipeline_mode = #tpu.pipeline_mode<synchronous>, transform_indices = @transform_12, window_bounds = array<i64: 1, 32>}, {pipeline_mode = #tpu.pipeline_mode<synchronous>, transform_indices = @transform_13, window_bounds = array<i64: 1, 32>}, {pipeline_mode = #tpu.pipeline_mode<synchronous>, transform_indices = @transform_14, window_bounds = array<i64: 32, 128>}, {pipeline_mode = #tpu.pipeline_mode<synchronous>, transform_indices = @transform_15, window_bounds = array<i64: 1, 128>}, {pipeline_mode = #tpu.pipeline_mode<synchronous>, transform_indices = @transform_16, window_bounds = array<i64: 128, 32>}, {pipeline_mode = #tpu.pipeline_mode<synchronous>, transform_indices = @transform_17, window_bounds = array<i64: 1, 32>}, {transform_indices = @transform_18, window_bounds = array<i64: 8, 32>}]} {
    %c0 = arith.constant 0 : index
    %c0_0 = arith.constant 0 : index
    %0 = vector.load %arg1[%c0, %c0_0] : memref<8x32xf32, #tpu.memory_space<vmem>>, vector<8x32xf32>
    %c0_1 = arith.constant 0 : index
    %c0_2 = arith.constant 0 : index
    %1 = vector.load %arg7[%c0_1, %c0_2] : memref<1x32xf32, #tpu.memory_space<vmem>>, vector<1x32xf32>
    %c0_3 = arith.constant 0 : index
    %c0_4 = arith.constant 0 : index
    %2 = vector.load %arg8[%c0_3, %c0_4] : memref<1x32xf32, #tpu.memory_space<vmem>>, vector<1x32xf32>
    %cst = arith.constant dense<0.000000e+00> : vector<8xf32>
    %3 = vector.multi_reduction <add>, %0, %cst [1] : vector<8x32xf32> to vector<8xf32>
    %4 = vector.shape_cast %3 : vector<8xf32> to vector<8x1xf32>
    %cst_5 = arith.constant 3.200000e+01 : f32
    %5 = vector.broadcast %cst_5 : f32 to vector<8x1xf32>
    %6 = arith.divf %4, %5 : vector<8x1xf32>
    %7 = vector.broadcast %6 : vector<8x1xf32> to vector<8x32xf32>
    %8 = arith.subf %0, %7 : vector<8x32xf32>
    %9 = arith.mulf %8, %8 : vector<8x32xf32>
    %cst_6 = arith.constant dense<0.000000e+00> : vector<8xf32>
    %10 = vector.multi_reduction <add>, %9, %cst_6 [1] : vector<8x32xf32> to vector<8xf32>
    %11 = vector.shape_cast %10 : vector<8xf32> to vector<8x1xf32>
    %cst_7 = arith.constant 3.200000e+01 : f32
    %12 = vector.broadcast %cst_7 : f32 to vector<8x1xf32>
    %13 = arith.divf %11, %12 : vector<8x1xf32>
    %14 = vector.broadcast %6 : vector<8x1xf32> to vector<8x32xf32>
    %15 = arith.subf %0, %14 : vector<8x32xf32>
    %cst_8 = arith.constant 9.99999974E-6 : f32
    %16 = vector.broadcast %cst_8 : f32 to vector<8x1xf32>
    %17 = arith.addf %13, %16 : vector<8x1xf32>
    %18 = math.rsqrt %17 : vector<8x1xf32>
    %19 = vector.broadcast %18 : vector<8x1xf32> to vector<8x32xf32>
    %20 = arith.mulf %15, %19 : vector<8x32xf32>
    %21 = vector.broadcast %1 : vector<1x32xf32> to vector<8x32xf32>
    %22 = arith.mulf %20, %21 : vector<8x32xf32>
    %23 = vector.broadcast %2 : vector<1x32xf32> to vector<8x32xf32>
    %24 = arith.addf %22, %23 : vector<8x32xf32>
    %25 = arith.truncf %24 : vector<8x32xf32> to vector<8x32xbf16>
    %c0_9 = arith.constant 0 : index
    %c0_10 = arith.constant 0 : index
    %26 = vector.load %arg10[%c0_9, %c0_10] : memref<32x64xbf16, #tpu.memory_space<vmem>>, vector<32x64xbf16>
    %cst_11 = arith.constant dense<0.000000e+00> : vector<8x64xf32>
    %27 = tpu.matmul %25, %26, %cst_11 {dimension_numbers = #tpu.dot_dimension_numbers<[1], [0], [0], [1], [0, 0, 1, 1], [], []>} : vector<8x32xbf16>, vector<32x64xbf16>, vector<8x64xf32> -> vector<8x64xf32>
    %28 = vector.extract_strided_slice %27 {offsets = [0, 0], sizes = [8, 32], strides = [1, 1]} : vector<8x64xf32> to vector<8x32xf32>
    %29 = vector.extract_strided_slice %27 {offsets = [0, 32], sizes = [8, 32], strides = [1, 1]} : vector<8x64xf32> to vector<8x32xf32>
    %c0_12 = arith.constant 0 : index
    %c0_13 = arith.constant 0 : index
    %30 = vector.load %arg2[%c0_12, %c0_13] : memref<1x8xbf16, #tpu.memory_space<vmem>>, vector<1x8xbf16>
    %cst_14 = arith.constant dense<0.000000e+00> : vector<1x32xf32>
    %31 = tpu.matmul %30, %25, %cst_14 {dimension_numbers = #tpu.dot_dimension_numbers<[1], [0], [0], [1], [0, 0, 1, 1], [], []>} : vector<1x8xbf16>, vector<8x32xbf16>, vector<1x32xf32> -> vector<1x32xf32>
    %32 = arith.truncf %31 : vector<1x32xf32> to vector<1x32xbf16>
    %c0_15 = arith.constant 0 : index
    %c0_16 = arith.constant 0 : index
    %33 = vector.load %arg9[%c0_15, %c0_16] : memref<32x32xbf16, #tpu.memory_space<vmem>>, vector<32x32xbf16>
    %cst_17 = arith.constant dense<0.000000e+00> : vector<1x32xf32>
    %34 = tpu.matmul %32, %33, %cst_17 {dimension_numbers = #tpu.dot_dimension_numbers<[1], [0], [0], [1], [0, 0, 1, 1], [], []>} : vector<1x32xbf16>, vector<32x32xbf16>, vector<1x32xf32> -> vector<1x32xf32>
    %c0_18 = arith.constant 0 : index
    %c0_19 = arith.constant 0 : index
    %35 = vector.load %arg4[%c0_18, %c0_19] : memref<8x1xbf16, #tpu.memory_space<vmem>>, vector<8x1xbf16>
    %36 = arith.truncf %34 : vector<1x32xf32> to vector<1x32xbf16>
    %cst_20 = arith.constant dense<0.000000e+00> : vector<8x32xf32>
    %37 = tpu.matmul %35, %36, %cst_20 {dimension_numbers = #tpu.dot_dimension_numbers<[1], [0], [0], [1], [0, 0, 1, 1], [], []>} : vector<8x1xbf16>, vector<1x32xbf16>, vector<8x32xf32> -> vector<8x32xf32>
    %38 = arith.truncf %28 : vector<8x32xf32> to vector<8x32xbf16>
    %39 = arith.truncf %37 : vector<8x32xf32> to vector<8x32xbf16>
    %40 = arith.mulf %38, %39 : vector<8x32xbf16>
    %c0_21 = arith.constant 0 : index
    %c0_22 = arith.constant 0 : index
    %41 = vector.load %arg5[%c0_21, %c0_22] : memref<32x8xbf16, #tpu.memory_space<vmem>>, vector<32x8xbf16>
    %cst_23 = arith.constant dense<0.000000e+00> : vector<8x8xf32>
    %42 = tpu.matmul %40, %41, %cst_23 {dimension_numbers = #tpu.dot_dimension_numbers<[1], [0], [0], [1], [0, 0, 1, 1], [], []>} : vector<8x32xbf16>, vector<32x8xbf16>, vector<8x8xf32> -> vector<8x8xf32>
    %43 = vector.shape_cast %42 : vector<8x8xf32> to vector<1x8x8xf32>
    %cst_24 = arith.constant dense<0xFF800000> : vector<1x8xf32>
    %44 = vector.multi_reduction <maximumf>, %43, %cst_24 [1] : vector<1x8x8xf32> to vector<1x8xf32>
    %45 = vector.shape_cast %44 : vector<1x8xf32> to vector<1x1x8xf32>
    %46 = vector.broadcast %45 : vector<1x1x8xf32> to vector<1x8x8xf32>
    %47 = arith.subf %43, %46 : vector<1x8x8xf32>
    %48 = math.exp %47 : vector<1x8x8xf32>
    %cst_25 = arith.constant dense<0.000000e+00> : vector<1x8xf32>
    %49 = vector.multi_reduction <add>, %48, %cst_25 [1] : vector<1x8x8xf32> to vector<1x8xf32>
    %50 = vector.shape_cast %49 : vector<1x8xf32> to vector<1x1x8xf32>
    %51 = tpu.reciprocal %50 {approx = true} : vector<1x1x8xf32> -> vector<1x1x8xf32>
    %52 = vector.broadcast %51 : vector<1x1x8xf32> to vector<1x8x8xf32>
    %53 = arith.mulf %48, %52 : vector<1x8x8xf32>
    %54 = vector.shape_cast %53 : vector<1x8x8xf32> to vector<8x8xf32>
    %55 = arith.truncf %54 : vector<8x8xf32> to vector<8x8xbf16>
    %c0_26 = arith.constant 0 : index
    %c0_27 = arith.constant 0 : index
    %56 = vector.load %arg6[%c0_26, %c0_27] : memref<8x32xbf16, #tpu.memory_space<vmem>>, vector<8x32xbf16>
    %cst_28 = arith.constant dense<0.000000e+00> : vector<8x32xf32>
    %57 = tpu.matmul %55, %56, %cst_28 {dimension_numbers = #tpu.dot_dimension_numbers<[1], [0], [0], [1], [0, 0, 1, 1], [], []>} : vector<8x8xbf16>, vector<8x32xbf16>, vector<8x32xf32> -> vector<8x32xf32>
    %58 = arith.truncf %57 : vector<8x32xf32> to vector<8x32xbf16>
    %59 = arith.truncf %29 : vector<8x32xf32> to vector<8x32xbf16>
    %60 = arith.mulf %58, %59 : vector<8x32xbf16>
    %c0_29 = arith.constant 0 : index
    %c0_30 = arith.constant 0 : index
    %61 = vector.load %arg3[%c0_29, %c0_30] : memref<1x8xbf16, #tpu.memory_space<vmem>>, vector<1x8xbf16>
    %cst_31 = arith.constant dense<0.000000e+00> : vector<1x32xf32>
    %62 = tpu.matmul %61, %60, %cst_31 {dimension_numbers = #tpu.dot_dimension_numbers<[1], [0], [0], [1], [0, 0, 1, 1], [], []>} : vector<1x8xbf16>, vector<8x32xbf16>, vector<1x32xf32> -> vector<1x32xf32>
    %63 = arith.truncf %62 : vector<1x32xf32> to vector<1x32xbf16>
    %c0_32 = arith.constant 0 : index
    %c0_33 = arith.constant 0 : index
    %64 = vector.load %arg11[%c0_32, %c0_33] : memref<32x32xbf16, #tpu.memory_space<vmem>>, vector<32x32xbf16>
    %cst_34 = arith.constant dense<0.000000e+00> : vector<1x32xf32>
    %65 = tpu.matmul %63, %64, %cst_34 {dimension_numbers = #tpu.dot_dimension_numbers<[1], [0], [0], [1], [0, 0, 1, 1], [], []>} : vector<1x32xbf16>, vector<32x32xbf16>, vector<1x32xf32> -> vector<1x32xf32>
    %c0_35 = arith.constant 0 : index
    %c0_36 = arith.constant 0 : index
    %66 = vector.load %arg12[%c0_35, %c0_36] : memref<1x32xf32, #tpu.memory_space<vmem>>, vector<1x32xf32>
    %67 = arith.addf %65, %66 : vector<1x32xf32>
    %c0_37 = arith.constant 0 : index
    %c0_38 = arith.constant 0 : index
    %68 = vector.load %arg4[%c0_37, %c0_38] : memref<8x1xbf16, #tpu.memory_space<vmem>>, vector<8x1xbf16>
    %69 = arith.truncf %67 : vector<1x32xf32> to vector<1x32xbf16>
    %cst_39 = arith.constant dense<0.000000e+00> : vector<8x32xf32>
    %70 = tpu.matmul %68, %69, %cst_39 {dimension_numbers = #tpu.dot_dimension_numbers<[1], [0], [0], [1], [0, 0, 1, 1], [], []>} : vector<8x1xbf16>, vector<1x32xbf16>, vector<8x32xf32> -> vector<8x32xf32>
    %71 = arith.addf %0, %70 : vector<8x32xf32>
    %c0_40 = arith.constant 0 : index
    %c0_41 = arith.constant 0 : index
    %72 = vector.load %arg13[%c0_40, %c0_41] : memref<1x32xf32, #tpu.memory_space<vmem>>, vector<1x32xf32>
    %c0_42 = arith.constant 0 : index
    %c0_43 = arith.constant 0 : index
    %73 = vector.load %arg14[%c0_42, %c0_43] : memref<1x32xf32, #tpu.memory_space<vmem>>, vector<1x32xf32>
    %cst_44 = arith.constant dense<0.000000e+00> : vector<8xf32>
    %74 = vector.multi_reduction <add>, %71, %cst_44 [1] : vector<8x32xf32> to vector<8xf32>
    %75 = vector.shape_cast %74 : vector<8xf32> to vector<8x1xf32>
    %cst_45 = arith.constant 3.200000e+01 : f32
    %76 = vector.broadcast %cst_45 : f32 to vector<8x1xf32>
    %77 = arith.divf %75, %76 : vector<8x1xf32>
    %78 = vector.broadcast %77 : vector<8x1xf32> to vector<8x32xf32>
    %79 = arith.subf %71, %78 : vector<8x32xf32>
    %80 = arith.mulf %79, %79 : vector<8x32xf32>
    %cst_46 = arith.constant dense<0.000000e+00> : vector<8xf32>
    %81 = vector.multi_reduction <add>, %80, %cst_46 [1] : vector<8x32xf32> to vector<8xf32>
    %82 = vector.shape_cast %81 : vector<8xf32> to vector<8x1xf32>
    %cst_47 = arith.constant 3.200000e+01 : f32
    %83 = vector.broadcast %cst_47 : f32 to vector<8x1xf32>
    %84 = arith.divf %82, %83 : vector<8x1xf32>
    %85 = vector.broadcast %77 : vector<8x1xf32> to vector<8x32xf32>
    %86 = arith.subf %71, %85 : vector<8x32xf32>
    %cst_48 = arith.constant 9.99999974E-6 : f32
    %87 = vector.broadcast %cst_48 : f32 to vector<8x1xf32>
    %88 = arith.addf %84, %87 : vector<8x1xf32>
    %89 = math.rsqrt %88 : vector<8x1xf32>
    %90 = vector.broadcast %89 : vector<8x1xf32> to vector<8x32xf32>
    %91 = arith.mulf %86, %90 : vector<8x32xf32>
    %92 = vector.broadcast %72 : vector<1x32xf32> to vector<8x32xf32>
    %93 = arith.mulf %91, %92 : vector<8x32xf32>
    %94 = vector.broadcast %73 : vector<1x32xf32> to vector<8x32xf32>
    %95 = arith.addf %93, %94 : vector<8x32xf32>
    %96 = arith.truncf %95 : vector<8x32xf32> to vector<8x32xbf16>
    %c0_49 = arith.constant 0 : index
    %c0_50 = arith.constant 0 : index
    %97 = vector.load %arg15[%c0_49, %c0_50] : memref<32x128xbf16, #tpu.memory_space<vmem>>, vector<32x128xbf16>
    %cst_51 = arith.constant dense<0.000000e+00> : vector<8x128xf32>
    %98 = tpu.matmul %96, %97, %cst_51 {dimension_numbers = #tpu.dot_dimension_numbers<[1], [0], [0], [1], [0, 0, 1, 1], [], []>} : vector<8x32xbf16>, vector<32x128xbf16>, vector<8x128xf32> -> vector<8x128xf32>
    %c0_52 = arith.constant 0 : index
    %c0_53 = arith.constant 0 : index
    %99 = vector.load %arg16[%c0_52, %c0_53] : memref<1x128xf32, #tpu.memory_space<vmem>>, vector<1x128xf32>
    %100 = vector.broadcast %99 : vector<1x128xf32> to vector<8x128xf32>
    %101 = arith.addf %98, %100 : vector<8x128xf32>
    %cst_54 = arith.constant 5.000000e-01 : f32
    %102 = vector.broadcast %cst_54 : f32 to vector<8x128xf32>
    %103 = arith.mulf %102, %101 : vector<8x128xf32>
    %cst_55 = arith.constant 0.707106769 : f32
    %104 = vector.broadcast %cst_55 : f32 to vector<8x128xf32>
    %105 = arith.mulf %101, %104 : vector<8x128xf32>
    %cst_56 = arith.constant 0.000000e+00 : f32
    %106 = vector.broadcast %cst_56 : f32 to vector<8x128xf32>
    %107 = arith.cmpf oge, %105, %106 : vector<8x128xf32>
    %cst_57 = arith.constant 1.000000e+00 : f32
    %cst_58 = arith.constant -1.000000e+00 : f32
    %108 = vector.broadcast %cst_57 : f32 to vector<8x128xf32>
    %109 = vector.broadcast %cst_58 : f32 to vector<8x128xf32>
    %110 = arith.select %107, %108, %109 : vector<8x128xi1>, vector<8x128xf32>
    %111 = math.absf %105 : vector<8x128xf32>
    %cst_59 = arith.constant 0.327591091 : f32
    %112 = vector.broadcast %cst_59 : f32 to vector<8x128xf32>
    %113 = arith.mulf %112, %111 : vector<8x128xf32>
    %cst_60 = arith.constant 1.000000e+00 : f32
    %114 = vector.broadcast %cst_60 : f32 to vector<8x128xf32>
    %115 = arith.addf %114, %113 : vector<8x128xf32>
    %116 = tpu.reciprocal %115 {approx = true} : vector<8x128xf32> -> vector<8x128xf32>
    %cst_61 = arith.constant 1.06140542 : f32
    %117 = vector.broadcast %cst_61 : f32 to vector<8x128xf32>
    %118 = arith.mulf %117, %116 : vector<8x128xf32>
    %cst_62 = arith.constant -1.45315206 : f32
    %119 = vector.broadcast %cst_62 : f32 to vector<8x128xf32>
    %120 = arith.addf %118, %119 : vector<8x128xf32>
    %121 = arith.mulf %120, %116 : vector<8x128xf32>
    %cst_63 = arith.constant 1.42141378 : f32
    %122 = vector.broadcast %cst_63 : f32 to vector<8x128xf32>
    %123 = arith.addf %121, %122 : vector<8x128xf32>
    %124 = arith.mulf %123, %116 : vector<8x128xf32>
    %cst_64 = arith.constant -0.284496725 : f32
    %125 = vector.broadcast %cst_64 : f32 to vector<8x128xf32>
    %126 = arith.addf %124, %125 : vector<8x128xf32>
    %127 = arith.mulf %126, %116 : vector<8x128xf32>
    %cst_65 = arith.constant 0.254829586 : f32
    %128 = vector.broadcast %cst_65 : f32 to vector<8x128xf32>
    %129 = arith.addf %127, %128 : vector<8x128xf32>
    %130 = arith.mulf %129, %116 : vector<8x128xf32>
    %cst_66 = arith.constant 0.000000e+00 : f32
    %131 = vector.broadcast %cst_66 : f32 to vector<8x128xf32>
    %132 = arith.subf %131, %111 : vector<8x128xf32>
    %133 = arith.mulf %132, %111 : vector<8x128xf32>
    %134 = math.exp %133 : vector<8x128xf32>
    %135 = arith.mulf %130, %134 : vector<8x128xf32>
    %cst_67 = arith.constant 1.000000e+00 : f32
    %136 = vector.broadcast %cst_67 : f32 to vector<8x128xf32>
    %137 = arith.subf %136, %135 : vector<8x128xf32>
    %138 = arith.mulf %110, %137 : vector<8x128xf32>
    %cst_68 = arith.constant 1.000000e+00 : f32
    %139 = vector.broadcast %cst_68 : f32 to vector<8x128xf32>
    %140 = arith.addf %139, %138 : vector<8x128xf32>
    %141 = arith.mulf %103, %140 : vector<8x128xf32>
    %142 = arith.truncf %141 : vector<8x128xf32> to vector<8x128xbf16>
    %c0_69 = arith.constant 0 : index
    %c0_70 = arith.constant 0 : index
    %143 = vector.load %arg17[%c0_69, %c0_70] : memref<128x32xbf16, #tpu.memory_space<vmem>>, vector<128x32xbf16>
    %cst_71 = arith.constant dense<0.000000e+00> : vector<8x32xf32>
    %144 = tpu.matmul %142, %143, %cst_71 {dimension_numbers = #tpu.dot_dimension_numbers<[1], [0], [0], [1], [0, 0, 1, 1], [], []>} : vector<8x128xbf16>, vector<128x32xbf16>, vector<8x32xf32> -> vector<8x32xf32>
    %c0_72 = arith.constant 0 : index
    %c0_73 = arith.constant 0 : index
    %145 = vector.load %arg18[%c0_72, %c0_73] : memref<1x32xf32, #tpu.memory_space<vmem>>, vector<1x32xf32>
    %146 = vector.broadcast %145 : vector<1x32xf32> to vector<8x32xf32>
    %147 = arith.addf %144, %146 : vector<8x32xf32>
    %148 = arith.addf %71, %147 : vector<8x32xf32>
    %c0_74 = arith.constant 0 : index
    %c0_75 = arith.constant 0 : index
    %149 = vector.load %arg19[%c0_74, %c0_75] : memref<8x32xf32, #tpu.memory_space<vmem>>, vector<8x32xf32>
    tpu.vector_store %arg19[%c0_74, %c0_75], %148 {strides = array<i32>} : memref<8x32xf32, #tpu.memory_space<vmem>>, vector<8x32xf32>,
    return
  }
  func.func @transform_0(%arg0: i32) -> (i32, i32) {
    %c0_i32 = arith.constant 0 : i32
    %c0_i32_0 = arith.constant 0 : i32
    return %arg0, %c0_i32 : i32, i32
  }
  func.func @transform_1(%arg0: i32) -> (i32, i32) {
    %c0_i32 = arith.constant 0 : i32
    %c0_i32_0 = arith.constant 0 : i32
    %c0_i32_1 = arith.constant 0 : i32
    return %c0_i32, %c0_i32_0 : i32, i32
  }
  func.func @transform_2(%arg0: i32) -> (i32, i32) {
    %c0_i32 = arith.constant 0 : i32
    %c0_i32_0 = arith.constant 0 : i32
    %c0_i32_1 = arith.constant 0 : i32
    return %c0_i32, %c0_i32_0 : i32, i32
  }
  func.func @transform_3(%arg0: i32) -> (i32, i32) {
    %c0_i32 = arith.constant 0 : i32
    %c0_i32_0 = arith.constant 0 : i32
    %c0_i32_1 = arith.constant 0 : i32
    return %c0_i32, %c0_i32_0 : i32, i32
  }
  func.func @transform_4(%arg0: i32) -> (i32, i32) {
    %c0_i32 = arith.constant 0 : i32
    %c0_i32_0 = arith.constant 0 : i32
    %c0_i32_1 = arith.constant 0 : i32
    return %c0_i32, %c0_i32_0 : i32, i32
  }
  func.func @transform_5(%arg0: i32) -> (i32, i32) {
    %c0_i32 = arith.constant 0 : i32
    %c0_i32_0 = arith.constant 0 : i32
    %c0_i32_1 = arith.constant 0 : i32
    return %c0_i32, %c0_i32_0 : i32, i32
  }
  func.func @transform_6(%arg0: i32) -> (i32, i32) {
    %c0_i32 = arith.constant 0 : i32
    %c0_i32_0 = arith.constant 0 : i32
    %c0_i32_1 = arith.constant 0 : i32
    return %c0_i32, %c0_i32_0 : i32, i32
  }
  func.func @transform_7(%arg0: i32) -> (i32, i32) {
    %c0_i32 = arith.constant 0 : i32
    %c0_i32_0 = arith.constant 0 : i32
    %c0_i32_1 = arith.constant 0 : i32
    return %c0_i32, %c0_i32_0 : i32, i32
  }
  func.func @transform_8(%arg0: i32) -> (i32, i32) {
    %c0_i32 = arith.constant 0 : i32
    %c0_i32_0 = arith.constant 0 : i32
    %c0_i32_1 = arith.constant 0 : i32
    return %c0_i32, %c0_i32_0 : i32, i32
  }
  func.func @transform_9(%arg0: i32) -> (i32, i32) {
    %c0_i32 = arith.constant 0 : i32
    %c0_i32_0 = arith.constant 0 : i32
    %c0_i32_1 = arith.constant 0 : i32
    return %c0_i32, %c0_i32_0 : i32, i32
  }
  func.func @transform_10(%arg0: i32) -> (i32, i32) {
    %c0_i32 = arith.constant 0 : i32
    %c0_i32_0 = arith.constant 0 : i32
    %c0_i32_1 = arith.constant 0 : i32
    return %c0_i32, %c0_i32_0 : i32, i32
  }
  func.func @transform_11(%arg0: i32) -> (i32, i32) {
    %c0_i32 = arith.constant 0 : i32
    %c0_i32_0 = arith.constant 0 : i32
    %c0_i32_1 = arith.constant 0 : i32
    return %c0_i32, %c0_i32_0 : i32, i32
  }
  func.func @transform_12(%arg0: i32) -> (i32, i32) {
    %c0_i32 = arith.constant 0 : i32
    %c0_i32_0 = arith.constant 0 : i32
    %c0_i32_1 = arith.constant 0 : i32
    return %c0_i32, %c0_i32_0 : i32, i32
  }
  func.func @transform_13(%arg0: i32) -> (i32, i32) {
    %c0_i32 = arith.constant 0 : i32
    %c0_i32_0 = arith.constant 0 : i32
    %c0_i32_1 = arith.constant 0 : i32
    return %c0_i32, %c0_i32_0 : i32, i32
  }
  func.func @transform_14(%arg0: i32) -> (i32, i32) {
    %c0_i32 = arith.constant 0 : i32
    %c0_i32_0 = arith.constant 0 : i32
    %c0_i32_1 = arith.constant 0 : i32
    return %c0_i32, %c0_i32_0 : i32, i32
  }
  func.func @transform_15(%arg0: i32) -> (i32, i32) {
    %c0_i32 = arith.constant 0 : i32
    %c0_i32_0 = arith.constant 0 : i32
    %c0_i32_1 = arith.constant 0 : i32
    return %c0_i32, %c0_i32_0 : i32, i32
  }
  func.func @transform_16(%arg0: i32) -> (i32, i32) {
    %c0_i32 = arith.constant 0 : i32
    %c0_i32_0 = arith.constant 0 : i32
    %c0_i32_1 = arith.constant 0 : i32
    return %c0_i32, %c0_i32_0 : i32, i32
  }
  func.func @transform_17(%arg0: i32) -> (i32, i32) {
    %c0_i32 = arith.constant 0 : i32
    %c0_i32_0 = arith.constant 0 : i32
    %c0_i32_1 = arith.constant 0 : i32
    return %c0_i32, %c0_i32_0 : i32, i32
  }
  func.func @transform_18(%arg0: i32) -> (i32, i32) {
    %c0_i32 = arith.constant 0 : i32
    %c0_i32_0 = arith.constant 0 : i32
    return %arg0, %c0_i32 : i32, i32
  }
}

module attributes {stable_mosaic.version = 11 : i64} {
  func.func @kernel(%arg0: i32, %arg1: memref<8x32xf32, #tpu.memory_space<vmem>>, %arg2: memref<1x8xbf16, #tpu.memory_space<vmem>>, %arg3: memref<1x8xbf16, #tpu.memory_space<vmem>>, %arg4: memref<8x1xbf16, #tpu.memory_space<vmem>>, %arg5: memref<32x8xbf16, #tpu.memory_space<vmem>>, %arg6: memref<8x32xbf16, #tpu.memory_space<vmem>>, %arg7: memref<1x32xf32, #tpu.memory_space<vmem>>, %arg8: memref<1x32xf32, #tpu.memory_space<vmem>>, %arg9: memref<32x32xbf16, #tpu.memory_space<vmem>>, %arg10: memref<32x64xbf16, #tpu.memory_space<vmem>>, %arg11: memref<32x32xbf16, #tpu.memory_space<vmem>>, %arg12: memref<1x32xf32, #tpu.memory_space<vmem>>, %arg13: memref<1x32xf32, #tpu.memory_space<vmem>>, %arg14: memref<1x32xf32, #tpu.memory_space<vmem>>, %arg15: memref<32x128xbf16, #tpu.memory_space<vmem>>, %arg16: memref<1x128xf32, #tpu.memory_space<vmem>>, %arg17: memref<128x32xbf16, #tpu.memory_space<vmem>>, %arg18: memref<1x32xf32, #tpu.memory_space<vmem>>, %arg19: memref<8x32xf32, #tpu.memory_space<vmem>>) attributes {dimension_semantics = [#tpu.dimension_semantics<parallel>], iteration_bounds = array<i64: 2>, scalar_prefetch = 0 : i64, scratch_operands = 0 : i64, tpu.core_type = #tpu.core_type<tc>, window_params = [{transform_indices = @transform_0, window_bounds = array<i64: 8, 32>}, {pipeline_mode = #tpu.pipeline_mode<synchronous>, transform_indices = @transform_1, window_bounds = array<i64: 1, 8>}, {pipeline_mode = #tpu.pipeline_mode<synchronous>, transform_indices = @transform_2, window_bounds = array<i64: 1, 8>}, {pipeline_mode = #tpu.pipeline_mode<synchronous>, transform_indices = @transform_3, window_bounds = array<i64: 8, 1>}, {pipeline_mode = #tpu.pipeline_mode<synchronous>, transform_indices = @transform_4, window_bounds = array<i64: 32, 8>}, {pipeline_mode = #tpu.pipeline_mode<synchronous>, transform_indices = @transform_5, window_bounds = array<i64: 8, 32>}, {pipeline_mode = #tpu.pipeline_mode<synchronous>, transform_indices = @transform_6, window_bounds = array<i64: 1, 32>}, {pipeline_mode = #tpu.pipeline_mode<synchronous>, transform_indices = @transform_7, window_bounds = array<i64: 1, 32>}, {pipeline_mode = #tpu.pipeline_mode<synchronous>, transform_indices = @transform_8, window_bounds = array<i64: 32, 32>}, {pipeline_mode = #tpu.pipeline_mode<synchronous>, transform_indices = @transform_9, window_bounds = array<i64: 32, 64>}, {pipeline_mode = #tpu.pipeline_mode<synchronous>, transform_indices = @transform_10, window_bounds = array<i64: 32, 32>}, {pipeline_mode = #tpu.pipeline_mode<synchronous>, transform_indices = @transform_11, window_bounds = array<i64: 1, 32>}, {pipeline_mode = #tpu.pipeline_mode<synchronous>, transform_indices = @transform_12, window_bounds = array<i64: 1, 32>}, {pipeline_mode = #tpu.pipeline_mode<synchronous>, transform_indices = @transform_13, window_bounds = array<i64: 1, 32>}, {pipeline_mode = #tpu.pipeline_mode<synchronous>, transform_indices = @transform_14, window_bounds = array<i64: 32, 128>}, {pipeline_mode = #tpu.pipeline_mode<synchronous>, transform_indices = @transform_15, window_bounds = array<i64: 1, 128>}, {pipeline_mode = #tpu.pipeline_mode<synchronous>, transform_indices = @transform_16, window_bounds = array<i64: 128, 32>}, {pipeline_mode = #tpu.pipeline_mode<synchronous>, transform_indices = @transform_17, window_bounds = array<i64: 1, 32>}, {transform_indices = @transform_18, window_bounds = array<i64: 8, 32>}]} {
    %c0 = arith.constant 0 : index
    %c0_0 = arith.constant 0 : index
    %0 = vector.load %arg1[%c0, %c0_0] : memref<8x32xf32, #tpu.memory_space<vmem>>, vector<8x32xf32>
    %c0_1 = arith.constant 0 : index
    %c0_2 = arith.constant 0 : index
    %1 = vector.load %arg7[%c0_1, %c0_2] : memref<1x32xf32, #tpu.memory_space<vmem>>, vector<1x32xf32>
    %c0_3 = arith.constant 0 : index
    %c0_4 = arith.constant 0 : index
    %2 = vector.load %arg8[%c0_3, %c0_4] : memref<1x32xf32, #tpu.memory_space<vmem>>, vector<1x32xf32>
    %cst = arith.constant dense<0.000000e+00> : vector<8xf32>
    %3 = vector.multi_reduction <add>, %0, %cst [1] : vector<8x32xf32> to vector<8xf32>
    %4 = vector.shape_cast %3 : vector<8xf32> to vector<8x1xf32>
    %cst_5 = arith.constant 3.200000e+01 : f32
    %5 = vector.broadcast %cst_5 : f32 to vector<8x1xf32>
    %6 = arith.divf %4, %5 : vector<8x1xf32>
    %7 = vector.broadcast %6 : vector<8x1xf32> to vector<8x32xf32>
    %8 = arith.subf %0, %7 : vector<8x32xf32>
    %9 = arith.mulf %8, %8 : vector<8x32xf32>
    %cst_6 = arith.constant dense<0.000000e+00> : vector<8xf32>
    %10 = vector.multi_reduction <add>, %9, %cst_6 [1] : vector<8x32xf32> to vector<8xf32>
    %11 = vector.shape_cast %10 : vector<8xf32> to vector<8x1xf32>
    %cst_7 = arith.constant 3.200000e+01 : f32
    %12 = vector.broadcast %cst_7 : f32 to vector<8x1xf32>
    %13 = arith.divf %11, %12 : vector<8x1xf32>
    %14 = vector.broadcast %6 : vector<8x1xf32> to vector<8x32xf32>
    %15 = arith.subf %0, %14 : vector<8x32xf32>
    %cst_8 = arith.constant 9.99999974E-6 : f32
    %16 = vector.broadcast %cst_8 : f32 to vector<8x1xf32>
    %17 = arith.addf %13, %16 : vector<8x1xf32>
    %18 = math.rsqrt %17 : vector<8x1xf32>
    %19 = vector.broadcast %18 : vector<8x1xf32> to vector<8x32xf32>
    %20 = arith.mulf %15, %19 : vector<8x32xf32>
    %21 = vector.broadcast %1 : vector<1x32xf32> to vector<8x32xf32>
    %22 = arith.mulf %20, %21 : vector<8x32xf32>
    %23 = vector.broadcast %2 : vector<1x32xf32> to vector<8x32xf32>
    %24 = arith.addf %22, %23 : vector<8x32xf32>
    %25 = arith.truncf %24 : vector<8x32xf32> to vector<8x32xbf16>
    %c0_9 = arith.constant 0 : index
    %c0_10 = arith.constant 0 : index
    %26 = vector.load %arg10[%c0_9, %c0_10] : memref<32x64xbf16, #tpu.memory_space<vmem>>, vector<32x64xbf16>
    %cst_11 = arith.constant dense<0.000000e+00> : vector<8x64xf32>
    %27 = tpu.matmul %25, %26, %cst_11 {dimension_numbers = #tpu.dot_dimension_numbers<[1], [0], [0], [1], [0, 0, 1, 1], [], []>} : vector<8x32xbf16>, vector<32x64xbf16>, vector<8x64xf32> -> vector<8x64xf32>
    %28 = vector.extract_strided_slice %27 {offsets = [0, 0], sizes = [8, 32], strides = [1, 1]} : vector<8x64xf32> to vector<8x32xf32>
    %29 = vector.extract_strided_slice %27 {offsets = [0, 32], sizes = [8, 32], strides = [1, 1]} : vector<8x64xf32> to vector<8x32xf32>
    %c0_12 = arith.constant 0 : index
    %c0_13 = arith.constant 0 : index
    %30 = vector.load %arg2[%c0_12, %c0_13] : memref<1x8xbf16, #tpu.memory_space<vmem>>, vector<1x8xbf16>
    %cst_14 = arith.constant dense<0.000000e+00> : vector<1x32xf32>
    %31 = tpu.matmul %30, %25, %cst_14 {dimension_numbers = #tpu.dot_dimension_numbers<[1], [0], [0], [1], [0, 0, 1, 1], [], []>} : vector<1x8xbf16>, vector<8x32xbf16>, vector<1x32xf32> -> vector<1x32xf32>
    %32 = arith.truncf %31 : vector<1x32xf32> to vector<1x32xbf16>
    %c0_15 = arith.constant 0 : index
    %c0_16 = arith.constant 0 : index
    %33 = vector.load %arg9[%c0_15, %c0_16] : memref<32x32xbf16, #tpu.memory_space<vmem>>, vector<32x32xbf16>
    %cst_17 = arith.constant dense<0.000000e+00> : vector<1x32xf32>
    %34 = tpu.matmul %32, %33, %cst_17 {dimension_numbers = #tpu.dot_dimension_numbers<[1], [0], [0], [1], [0, 0, 1, 1], [], []>} : vector<1x32xbf16>, vector<32x32xbf16>, vector<1x32xf32> -> vector<1x32xf32>
    %c0_18 = arith.constant 0 : index
    %c0_19 = arith.constant 0 : index
    %35 = vector.load %arg4[%c0_18, %c0_19] : memref<8x1xbf16, #tpu.memory_space<vmem>>, vector<8x1xbf16>
    %36 = arith.truncf %34 : vector<1x32xf32> to vector<1x32xbf16>
    %cst_20 = arith.constant dense<0.000000e+00> : vector<8x32xf32>
    %37 = tpu.matmul %35, %36, %cst_20 {dimension_numbers = #tpu.dot_dimension_numbers<[1], [0], [0], [1], [0, 0, 1, 1], [], []>} : vector<8x1xbf16>, vector<1x32xbf16>, vector<8x32xf32> -> vector<8x32xf32>
    %38 = arith.truncf %28 : vector<8x32xf32> to vector<8x32xbf16>
    %39 = arith.truncf %37 : vector<8x32xf32> to vector<8x32xbf16>
    %40 = arith.mulf %38, %39 : vector<8x32xbf16>
    %c0_21 = arith.constant 0 : index
    %c0_22 = arith.constant 0 : index
    %41 = vector.load %arg5[%c0_21, %c0_22] : memref<32x8xbf16, #tpu.memory_space<vmem>>, vector<32x8xbf16>
    %cst_23 = arith.constant dense<0.000000e+00> : vector<8x8xf32>
    %42 = tpu.matmul %40, %41, %cst_23 {dimension_numbers = #tpu.dot_dimension_numbers<[1], [0], [0], [1], [0, 0, 1, 1], [], []>} : vector<8x32xbf16>, vector<32x8xbf16>, vector<8x8xf32> -> vector<8x8xf32>
    %43 = vector.shape_cast %42 : vector<8x8xf32> to vector<1x8x8xf32>
    %cst_24 = arith.constant dense<0xFF800000> : vector<1x8xf32>
    %44 = vector.multi_reduction <maximumf>, %43, %cst_24 [1] : vector<1x8x8xf32> to vector<1x8xf32>
    %45 = vector.shape_cast %44 : vector<1x8xf32> to vector<1x1x8xf32>
    %46 = vector.broadcast %45 : vector<1x1x8xf32> to vector<1x8x8xf32>
    %47 = arith.subf %43, %46 : vector<1x8x8xf32>
    %48 = math.exp %47 : vector<1x8x8xf32>
    %cst_25 = arith.constant dense<0.000000e+00> : vector<1x8xf32>
    %49 = vector.multi_reduction <add>, %48, %cst_25 [1] : vector<1x8x8xf32> to vector<1x8xf32>
    %50 = vector.shape_cast %49 : vector<1x8xf32> to vector<1x1x8xf32>
    %51 = tpu.reciprocal %50 {approx = true} : vector<1x1x8xf32> -> vector<1x1x8xf32>
    %52 = vector.broadcast %51 : vector<1x1x8xf32> to vector<1x8x8xf32>
    %53 = arith.mulf %48, %52 : vector<1x8x8xf32>
    %54 = vector.shape_cast %53 : vector<1x8x8xf32> to vector<8x8xf32>
    %55 = arith.truncf %54 : vector<8x8xf32> to vector<8x8xbf16>
    %c0_26 = arith.constant 0 : index
    %c0_27 = arith.constant 0 : index
    %56 = vector.load %arg6[%c0_26, %c0_27] : memref<8x32xbf16, #tpu.memory_space<vmem>>, vector<8x32xbf16>
    %cst_28 = arith.constant dense<0.000000e+00> : vector<8x32xf32>
    %57 = tpu.matmul %55, %56, %cst_28 {dimension_numbers = #tpu.dot_dimension_numbers<[1], [0], [0], [1], [0, 0, 1, 1], [], []>} : vector<8x8xbf16>, vector<8x32xbf16>, vector<8x32xf32> -> vector<8x32xf32>
    %58 = arith.truncf %57 : vector<8x32xf32> to vector<8x32xbf16>
    %59 = arith.truncf %29 : vector<8x32xf32> to vector<8x32xbf16>
    %60 = arith.mulf %58, %59 : vector<8x32xbf16>
    %c0_29 = arith.constant 0 : index
    %c0_30 = arith.constant 0 : index
    %61 = vector.load %arg3[%c0_29, %c0_30] : memref<1x8xbf16, #tpu.memory_space<vmem>>, vector<1x8xbf16>
    %cst_31 = arith.constant dense<0.000000e+00> : vector<1x32xf32>
    %62 = tpu.matmul %61, %60, %cst_31 {dimension_numbers = #tpu.dot_dimension_numbers<[1], [0], [0], [1], [0, 0, 1, 1], [], []>} : vector<1x8xbf16>, vector<8x32xbf16>, vector<1x32xf32> -> vector<1x32xf32>
    %63 = arith.truncf %62 : vector<1x32xf32> to vector<1x32xbf16>
    %c0_32 = arith.constant 0 : index
    %c0_33 = arith.constant 0 : index
    %64 = vector.load %arg11[%c0_32, %c0_33] : memref<32x32xbf16, #tpu.memory_space<vmem>>, vector<32x32xbf16>
    %cst_34 = arith.constant dense<0.000000e+00> : vector<1x32xf32>
    %65 = tpu.matmul %63, %64, %cst_34 {dimension_numbers = #tpu.dot_dimension_numbers<[1], [0], [0], [1], [0, 0, 1, 1], [], []>} : vector<1x32xbf16>, vector<32x32xbf16>, vector<1x32xf32> -> vector<1x32xf32>
    %c0_35 = arith.constant 0 : index
    %c0_36 = arith.constant 0 : index
    %66 = vector.load %arg12[%c0_35, %c0_36] : memref<1x32xf32, #tpu.memory_space<vmem>>, vector<1x32xf32>
    %67 = arith.addf %65, %66 : vector<1x32xf32>
    %c0_37 = arith.constant 0 : index
    %c0_38 = arith.constant 0 : index
    %68 = vector.load %arg4[%c0_37, %c0_38] : memref<8x1xbf16, #tpu.memory_space<vmem>>, vector<8x1xbf16>
    %69 = arith.truncf %67 : vector<1x32xf32> to vector<1x32xbf16>
    %cst_39 = arith.constant dense<0.000000e+00> : vector<8x32xf32>
    %70 = tpu.matmul %68, %69, %cst_39 {dimension_numbers = #tpu.dot_dimension_numbers<[1], [0], [0], [1], [0, 0, 1, 1], [], []>} : vector<8x1xbf16>, vector<1x32xbf16>, vector<8x32xf32> -> vector<8x32xf32>
    %71 = arith.addf %0, %70 : vector<8x32xf32>
    %c0_40 = arith.constant 0 : index
    %c0_41 = arith.constant 0 : index
    %72 = vector.load %arg13[%c0_40, %c0_41] : memref<1x32xf32, #tpu.memory_space<vmem>>, vector<1x32xf32>
    %c0_42 = arith.constant 0 : index
    %c0_43 = arith.constant 0 : index
    %73 = vector.load %arg14[%c0_42, %c0_43] : memref<1x32xf32, #tpu.memory_space<vmem>>, vector<1x32xf32>
    %cst_44 = arith.constant dense<0.000000e+00> : vector<8xf32>
    %74 = vector.multi_reduction <add>, %71, %cst_44 [1] : vector<8x32xf32> to vector<8xf32>
    %75 = vector.shape_cast %74 : vector<8xf32> to vector<8x1xf32>
    %cst_45 = arith.constant 3.200000e+01 : f32
    %76 = vector.broadcast %cst_45 : f32 to vector<8x1xf32>
    %77 = arith.divf %75, %76 : vector<8x1xf32>
    %78 = vector.broadcast %77 : vector<8x1xf32> to vector<8x32xf32>
    %79 = arith.subf %71, %78 : vector<8x32xf32>
    %80 = arith.mulf %79, %79 : vector<8x32xf32>
    %cst_46 = arith.constant dense<0.000000e+00> : vector<8xf32>
    %81 = vector.multi_reduction <add>, %80, %cst_46 [1] : vector<8x32xf32> to vector<8xf32>
    %82 = vector.shape_cast %81 : vector<8xf32> to vector<8x1xf32>
    %cst_47 = arith.constant 3.200000e+01 : f32
    %83 = vector.broadcast %cst_47 : f32 to vector<8x1xf32>
    %84 = arith.divf %82, %83 : vector<8x1xf32>
    %85 = vector.broadcast %77 : vector<8x1xf32> to vector<8x32xf32>
    %86 = arith.subf %71, %85 : vector<8x32xf32>
    %cst_48 = arith.constant 9.99999974E-6 : f32
    %87 = vector.broadcast %cst_48 : f32 to vector<8x1xf32>
    %88 = arith.addf %84, %87 : vector<8x1xf32>
    %89 = math.rsqrt %88 : vector<8x1xf32>
    %90 = vector.broadcast %89 : vector<8x1xf32> to vector<8x32xf32>
    %91 = arith.mulf %86, %90 : vector<8x32xf32>
    %92 = vector.broadcast %72 : vector<1x32xf32> to vector<8x32xf32>
    %93 = arith.mulf %91, %92 : vector<8x32xf32>
    %94 = vector.broadcast %73 : vector<1x32xf32> to vector<8x32xf32>
    %95 = arith.addf %93, %94 : vector<8x32xf32>
    %96 = arith.truncf %95 : vector<8x32xf32> to vector<8x32xbf16>
    %c0_49 = arith.constant 0 : index
    %c0_50 = arith.constant 0 : index
    %97 = vector.load %arg15[%c0_49, %c0_50] : memref<32x128xbf16, #tpu.memory_space<vmem>>, vector<32x128xbf16>
    %cst_51 = arith.constant dense<0.000000e+00> : vector<8x128xf32>
    %98 = tpu.matmul %96, %97, %cst_51 {dimension_numbers = #tpu.dot_dimension_numbers<[1], [0], [0], [1], [0, 0, 1, 1], [], []>} : vector<8x32xbf16>, vector<32x128xbf16>, vector<8x128xf32> -> vector<8x128xf32>
    %c0_52 = arith.constant 0 : index
    %c0_53 = arith.constant 0 : index
    %99 = vector.load %arg16[%c0_52, %c0_53] : memref<1x128xf32, #tpu.memory_space<vmem>>, vector<1x128xf32>
    %100 = vector.broadcast %99 : vector<1x128xf32> to vector<8x128xf32>
    %101 = arith.addf %98, %100 : vector<8x128xf32>
    %cst_54 = arith.constant 5.000000e-01 : f32
    %102 = vector.broadcast %cst_54 : f32 to vector<8x128xf32>
    %103 = arith.mulf %102, %101 : vector<8x128xf32>
    %cst_55 = arith.constant 0.707106769 : f32
    %104 = vector.broadcast %cst_55 : f32 to vector<8x128xf32>
    %105 = arith.mulf %101, %104 : vector<8x128xf32>
    %cst_56 = arith.constant 0.000000e+00 : f32
    %106 = vector.broadcast %cst_56 : f32 to vector<8x128xf32>
    %107 = arith.cmpf oge, %105, %106 : vector<8x128xf32>
    %cst_57 = arith.constant 1.000000e+00 : f32
    %cst_58 = arith.constant -1.000000e+00 : f32
    %108 = vector.broadcast %cst_57 : f32 to vector<8x128xf32>
    %109 = vector.broadcast %cst_58 : f32 to vector<8x128xf32>
    %110 = arith.select %107, %108, %109 : vector<8x128xi1>, vector<8x128xf32>
    %111 = math.absf %105 : vector<8x128xf32>
    %cst_59 = arith.constant 0.327591091 : f32
    %112 = vector.broadcast %cst_59 : f32 to vector<8x128xf32>
    %113 = arith.mulf %112, %111 : vector<8x128xf32>
    %cst_60 = arith.constant 1.000000e+00 : f32
    %114 = vector.broadcast %cst_60 : f32 to vector<8x128xf32>
    %115 = arith.addf %114, %113 : vector<8x128xf32>
    %116 = tpu.reciprocal %115 {approx = true} : vector<8x128xf32> -> vector<8x128xf32>
    %cst_61 = arith.constant 1.06140542 : f32
    %117 = vector.broadcast %cst_61 : f32 to vector<8x128xf32>
    %118 = arith.mulf %117, %116 : vector<8x128xf32>
    %cst_62 = arith.constant -1.45315206 : f32
    %119 = vector.broadcast %cst_62 : f32 to vector<8x128xf32>
    %120 = arith.addf %118, %119 : vector<8x128xf32>
    %121 = arith.mulf %120, %116 : vector<8x128xf32>
    %cst_63 = arith.constant 1.42141378 : f32
    %122 = vector.broadcast %cst_63 : f32 to vector<8x128xf32>
    %123 = arith.addf %121, %122 : vector<8x128xf32>
    %124 = arith.mulf %123, %116 : vector<8x128xf32>
    %cst_64 = arith.constant -0.284496725 : f32
    %125 = vector.broadcast %cst_64 : f32 to vector<8x128xf32>
    %126 = arith.addf %124, %125 : vector<8x128xf32>
    %127 = arith.mulf %126, %116 : vector<8x128xf32>
    %cst_65 = arith.constant 0.254829586 : f32
    %128 = vector.broadcast %cst_65 : f32 to vector<8x128xf32>
    %129 = arith.addf %127, %128 : vector<8x128xf32>
    %130 = arith.mulf %129, %116 : vector<8x128xf32>
    %cst_66 = arith.constant 0.000000e+00 : f32
    %131 = vector.broadcast %cst_66 : f32 to vector<8x128xf32>
    %132 = arith.subf %131, %111 : vector<8x128xf32>
    %133 = arith.mulf %132, %111 : vector<8x128xf32>
    %134 = math.exp %133 : vector<8x128xf32>
    %135 = arith.mulf %130, %134 : vector<8x128xf32>
    %cst_67 = arith.constant 1.000000e+00 : f32
    %136 = vector.broadcast %cst_67 : f32 to vector<8x128xf32>
    %137 = arith.subf %136, %135 : vector<8x128xf32>
    %138 = arith.mulf %110, %137 : vector<8x128xf32>
    %cst_68 = arith.constant 1.000000e+00 : f32
    %139 = vector.broadcast %cst_68 : f32 to vector<8x128xf32>
    %140 = arith.addf %139, %138 : vector<8x128xf32>
    %141 = arith.mulf %103, %140 : vector<8x128xf32>
    %142 = arith.truncf %141 : vector<8x128xf32> to vector<8x128xbf16>
    %c0_69 = arith.constant 0 : index
    %c0_70 = arith.constant 0 : index
    %143 = vector.load %arg17[%c0_69, %c0_70] : memref<128x32xbf16, #tpu.memory_space<vmem>>, vector<128x32xbf16>
    %cst_71 = arith.constant dense<0.000000e+00> : vector<8x32xf32>
    %144 = tpu.matmul %142, %143, %cst_71 {dimension_numbers = #tpu.dot_dimension_numbers<[1], [0], [0], [1], [0, 0, 1, 1], [], []>} : vector<8x128xbf16>, vector<128x32xbf16>, vector<8x32xf32> -> vector<8x32xf32>
    %c0_72 = arith.constant 0 : index
    %c0_73 = arith.constant 0 : index
    %145 = vector.load %arg18[%c0_72, %c0_73] : memref<1x32xf32, #tpu.memory_space<vmem>>, vector<1x32xf32>
    %146 = vector.broadcast %145 : vector<1x32xf32> to vector<8x32xf32>
    %147 = arith.addf %144, %146 : vector<8x32xf32>
    %148 = arith.addf %71, %147 : vector<8x32xf32>
    %c0_74 = arith.constant 0 : index
    %c0_75 = arith.constant 0 : index
    %149 = vector.load %arg19[%c0_74, %c0_75] : memref<8x32xf32, #tpu.memory_space<vmem>>, vector<8x32xf32>
    tpu.vector_store %arg19[%c0_74, %c0_75], %148 {strides = array<i32>} : memref<8x32xf32, #tpu.memory_space<vmem>>, vector<8x32xf32>,
    return
  }
  func.func @transform_0(%arg0: i32) -> (i32, i32) {
    %c0_i32 = arith.constant 0 : i32
    %c0_i32_0 = arith.constant 0 : i32
    return %arg0, %c0_i32 : i32, i32
  }
  func.func @transform_1(%arg0: i32) -> (i32, i32) {
    %c0_i32 = arith.constant 0 : i32
    %c0_i32_0 = arith.constant 0 : i32
    %c0_i32_1 = arith.constant 0 : i32
    return %c0_i32, %c0_i32_0 : i32, i32
  }
  func.func @transform_2(%arg0: i32) -> (i32, i32) {
    %c0_i32 = arith.constant 0 : i32
    %c0_i32_0 = arith.constant 0 : i32
    %c0_i32_1 = arith.constant 0 : i32
    return %c0_i32, %c0_i32_0 : i32, i32
  }
  func.func @transform_3(%arg0: i32) -> (i32, i32) {
    %c0_i32 = arith.constant 0 : i32
    %c0_i32_0 = arith.constant 0 : i32
    %c0_i32_1 = arith.constant 0 : i32
    return %c0_i32, %c0_i32_0 : i32, i32
  }
  func.func @transform_4(%arg0: i32) -> (i32, i32) {
    %c0_i32 = arith.constant 0 : i32
    %c0_i32_0 = arith.constant 0 : i32
    %c0_i32_1 = arith.constant 0 : i32
    return %c0_i32, %c0_i32_0 : i32, i32
  }
  func.func @transform_5(%arg0: i32) -> (i32, i32) {
    %c0_i32 = arith.constant 0 : i32
    %c0_i32_0 = arith.constant 0 : i32
    %c0_i32_1 = arith.constant 0 : i32
    return %c0_i32, %c0_i32_0 : i32, i32
  }
  func.func @transform_6(%arg0: i32) -> (i32, i32) {
    %c0_i32 = arith.constant 0 : i32
    %c0_i32_0 = arith.constant 0 : i32
    %c0_i32_1 = arith.constant 0 : i32
    return %c0_i32, %c0_i32_0 : i32, i32
  }
  func.func @transform_7(%arg0: i32) -> (i32, i32) {
    %c0_i32 = arith.constant 0 : i32
    %c0_i32_0 = arith.constant 0 : i32
    %c0_i32_1 = arith.constant 0 : i32
    return %c0_i32, %c0_i32_0 : i32, i32
  }
  func.func @transform_8(%arg0: i32) -> (i32, i32) {
    %c0_i32 = arith.constant 0 : i32
    %c0_i32_0 = arith.constant 0 : i32
    %c0_i32_1 = arith.constant 0 : i32
    return %c0_i32, %c0_i32_0 : i32, i32
  }
  func.func @transform_9(%arg0: i32) -> (i32, i32) {
    %c0_i32 = arith.constant 0 : i32
    %c0_i32_0 = arith.constant 0 : i32
    %c0_i32_1 = arith.constant 0 : i32
    return %c0_i32, %c0_i32_0 : i32, i32
  }
  func.func @transform_10(%arg0: i32) -> (i32, i32) {
    %c0_i32 = arith.constant 0 : i32
    %c0_i32_0 = arith.constant 0 : i32
    %c0_i32_1 = arith.constant 0 : i32
    return %c0_i32, %c0_i32_0 : i32, i32
  }
  func.func @transform_11(%arg0: i32) -> (i32, i32) {
    %c0_i32 = arith.constant 0 : i32
    %c0_i32_0 = arith.constant 0 : i32
    %c0_i32_1 = arith.constant 0 : i32
    return %c0_i32, %c0_i32_0 : i32, i32
  }
  func.func @transform_12(%arg0: i32) -> (i32, i32) {
    %c0_i32 = arith.constant 0 : i32
    %c0_i32_0 = arith.constant 0 : i32
    %c0_i32_1 = arith.constant 0 : i32
    return %c0_i32, %c0_i32_0 : i32, i32
  }
  func.func @transform_13(%arg0: i32) -> (i32, i32) {
    %c0_i32 = arith.constant 0 : i32
    %c0_i32_0 = arith.constant 0 : i32
    %c0_i32_1 = arith.constant 0 : i32
    return %c0_i32, %c0_i32_0 : i32, i32
  }
  func.func @transform_14(%arg0: i32) -> (i32, i32) {
    %c0_i32 = arith.constant 0 : i32
    %c0_i32_0 = arith.constant 0 : i32
    %c0_i32_1 = arith.constant 0 : i32
    return %c0_i32, %c0_i32_0 : i32, i32
  }
  func.func @transform_15(%arg0: i32) -> (i32, i32) {
    %c0_i32 = arith.constant 0 : i32
    %c0_i32_0 = arith.constant 0 : i32
    %c0_i32_1 = arith.constant 0 : i32
    return %c0_i32, %c0_i32_0 : i32, i32
  }
  func.func @transform_16(%arg0: i32) -> (i32, i32) {
    %c0_i32 = arith.constant 0 : i32
    %c0_i32_0 = arith.constant 0 : i32
    %c0_i32_1 = arith.constant 0 : i32
    return %c0_i32, %c0_i32_0 : i32, i32
  }
  func.func @transform_17(%arg0: i32) -> (i32, i32) {
    %c0_i32 = arith.constant 0 : i32
    %c0_i32_0 = arith.constant 0 : i32
    %c0_i32_1 = arith.constant 0 : i32
    return %c0_i32, %c0_i32_0 : i32, i32
  }
  func.func @transform_18(%arg0: i32) -> (i32, i32) {
    %c0_i32 = arith.constant 0 : i32
    %c0_i32_0 = arith.constant 0 : i32
    return %arg0, %c0_i32 : i32, i32
  }
}

</mosaic_0001>

<llo_original>
// kernel: tpu_custom_call.1
$region0: #{tpu_custom_call.1}
  #allocation0 [shape = 'u32[]', space=smem, size = 0x4, offset = 0x4, fixed_abs, tag = 'smem constant byte address 0x4 - core index']
  #allocation1 [shape = 'u32[144,128]{1,0:T(1,128)}', space=vmem, size = 0x12000, scoped, tag = 'internal scratch']
  %s0 = inlined_call_operand.vmem [shape: f32[16,32], index: 0, kind: input, shape index: {}]
  %s1 = inlined_call_operand.vmem [shape: bf16[1,8], index: 1, kind: input, shape index: {}]
  %s2 = inlined_call_operand.vmem [shape: bf16[1,8], index: 2, kind: input, shape index: {}]
  %s3 = inlined_call_operand.vmem [shape: bf16[8,1], index: 3, kind: input, shape index: {}]
  %s4 = inlined_call_operand.vmem [shape: bf16[32,8], index: 4, kind: input, shape index: {}]
  %s5 = inlined_call_operand.vmem [shape: bf16[8,32], index: 5, kind: input, shape index: {}]
  %s6 = inlined_call_operand.vmem [shape: f32[1,32], index: 6, kind: input, shape index: {}]
  %s7 = inlined_call_operand.vmem [shape: f32[1,32], index: 7, kind: input, shape index: {}]
  %s8 = inlined_call_operand.vmem [shape: bf16[32,32], index: 8, kind: input, shape index: {}]
  %s9 = inlined_call_operand.vmem [shape: bf16[32,64], index: 9, kind: input, shape index: {}]
  %s10 = inlined_call_operand.vmem [shape: bf16[32,32], index: 10, kind: input, shape index: {}]
  %s11 = inlined_call_operand.vmem [shape: f32[1,32], index: 11, kind: input, shape index: {}]
  %s12 = inlined_call_operand.vmem [shape: f32[1,32], index: 12, kind: input, shape index: {}]
  %s13 = inlined_call_operand.vmem [shape: f32[1,32], index: 13, kind: input, shape index: {}]
  %s14 = inlined_call_operand.vmem [shape: bf16[32,128], index: 14, kind: input, shape index: {}]
  %s15 = inlined_call_operand.vmem [shape: f32[1,128], index: 15, kind: input, shape index: {}]
  %s16 = inlined_call_operand.vmem [shape: bf16[128,32], index: 16, kind: input, shape index: {}]
  %s17 = inlined_call_operand.vmem [shape: f32[1,32], index: 17, kind: input, shape index: {}]
  %s18 = inlined_call_operand.hbm [shape: f32[16,32], index: 18, kind: output, shape index: {}]
  %s19 = sld [smem:[#allocation0]]
  $region105: #{tpu_custom_call.1} parent=0
    _
  %s21 = ssub.s32 1, %s19
  %s22 = scalar_select 0, %s21, %s19
  $region1: #{tpu_custom_call.1} parent=0
    #allocation2 [shape = 'u8[8192]{0}', space=vmem, size = 0x2000, scoped, tag = 'output window, operand 0']
    #allocation3 [shape = 's32[2]{0}', space=sflag, size = 0x8, scoped, tag = 'scoped memory for tpu_custom_call.1']
    %23 = vsyncpa [#allocation3], 0
    %s24 = scalar_lea.sflag [#allocation3], 1
    %25 = vsyncpa %s24, 0
    loop: start=0, step=1, limit=4
    $region2: #{tpu_custom_call.1} parent=1 // loop_pre_header
      _
    $region3: #{tpu_custom_call.1} parent=1 // loop_header
      %s27 = sphi 0, %s31
      %p28 = scmp.ge.s32.totalorder %s27, 4
      %s37 = sphi 0, %s39
      %s40 = sphi 0, %s37
      %s41 = sphi 0, %s40
      %s57 = sphi 0, %s41
      %s61 = sphi 0, %s61
      %s63 = sphi 0, %s61
      %s64 = sphi 0, %s63
      %s78 = sphi 0, %s64
      %s82 = sphi 0, %s82
      %s84 = sphi 0, %s82
      %s85 = sphi 0, %s84
      %s99 = sphi 0, %s85
      %s103 = sphi 0, %s103
      %s105 = sphi 0, %s103
      %s106 = sphi 0, %s105
      %s120 = sphi 0, %s106
      %s124 = sphi 0, %s124
      %s126 = sphi 0, %s124
      %s127 = sphi 0, %s126
      %s141 = sphi 0, %s127
      %s145 = sphi 0, %s145
      %s147 = sphi 0, %s145
      %s148 = sphi 0, %s147
      %s162 = sphi 0, %s148
      %s166 = sphi 0, %s166
      %s168 = sphi 0, %s166
      %s169 = sphi 0, %s168
      %s183 = sphi 0, %s169
      %s187 = sphi 0, %s187
      %s189 = sphi 0, %s187
      %s190 = sphi 0, %s189
      %s204 = sphi 0, %s190
      %s208 = sphi 0, %s208
      %s210 = sphi 0, %s208
      %s211 = sphi 0, %s210
      %s225 = sphi 0, %s211
      %s229 = sphi 0, %s229
      %s231 = sphi 0, %s229
      %s232 = sphi 0, %s231
      %s246 = sphi 0, %s232
      %s250 = sphi 0, %s250
      %s252 = sphi 0, %s250
      %s253 = sphi 0, %s252
      %s267 = sphi 0, %s253
      %s271 = sphi 0, %s271
      %s273 = sphi 0, %s271
      %s274 = sphi 0, %s273
      %s288 = sphi 0, %s274
      %s292 = sphi 0, %s292
      %s294 = sphi 0, %s292
      %s295 = sphi 0, %s294
      %s309 = sphi 0, %s295
      %s313 = sphi 0, %s313
      %s315 = sphi 0, %s313
      %s316 = sphi 0, %s315
      %s330 = sphi 0, %s316
      %s334 = sphi 0, %s334
      %s336 = sphi 0, %s334
      %s337 = sphi 0, %s336
      %s351 = sphi 0, %s337
      %s355 = sphi 0, %s355
      %s357 = sphi 0, %s355
      %s358 = sphi 0, %s357
      %s372 = sphi 0, %s358
      %s376 = sphi 0, %s376
      %s378 = sphi 0, %s376
      %s379 = sphi 0, %s378
      %s393 = sphi 0, %s379
      %s397 = sphi 0, %s397
      %s399 = sphi 0, %s397
      %s400 = sphi 0, %s399
      %s414 = sphi 0, %s400
      %s420 = sphi 0, %s422
      %s423 = sphi 0, %s420
      %s424 = sphi 0, %s423
      %s440 = sphi 0, %s424
    $region4: #{tpu_custom_call.1} parent=1 // loop_header_branch
      %30 = sbr.rel (%p28) target = $region8
    $region5: #{tpu_custom_call.1} parent=1 // loop_body
      %s32 = ssub.s32 %s27, 1
      %s33 = ssub.s32 %s27, 2
      %s34 = sadd.s32 %s27, 1
      %s35 = ssub.s32 %s27, %s34
      %p36 = scmp.eq.s32.totalorder %s35, 0
      %s38 = sadd.s32 %s37, 1
      %s39 = scalar_select %p36, %s37, %s38
      %p42 = pneg %p36
      %p43 = scmp.eq.s32.totalorder %s27, 1
      %p44 = por %p42, %p43
      %p45 = scmp.ne.s32.totalorder %s37, %s40
      %p46 = scmp.eq.s32.totalorder %s27, 0
      %p47 = por %p45, %p46
      %p48 = scmp.ne.s32.totalorder %s37, %s40
      %p49 = scmp.eq.s32.totalorder %s32, 1
      %p50 = por %p48, %p49
      %p51 = scmp.ne.s32.totalorder %s40, %s41
      %p52 = scmp.eq.s32.totalorder %s32, 0
      %p53 = por %p51, %p52
      %p54 = scmp.ne.s32.totalorder %s40, %s41
      %p55 = scmp.eq.s32.totalorder %s33, 1
      %p56 = por %p54, %p55
      %p58 = scmp.ne.s32.totalorder %s41, %s57
      %p59 = scmp.eq.s32.totalorder %s33, 0
      %p60 = por %p58, %p59
      %s62 = sadd.s32 %s61, 1
      %p65 = scmp.eq.s32.totalorder %s27, 1
      %p66 = scmp.ne.s32.totalorder %s61, %s63
      %p67 = scmp.eq.s32.totalorder %s27, 0
      %p68 = por %p66, %p67
      %p69 = scmp.ne.s32.totalorder %s61, %s63
      %p70 = scmp.eq.s32.totalorder %s32, 1
      %p71 = por %p69, %p70
      %p72 = scmp.ne.s32.totalorder %s63, %s64
      %p73 = scmp.eq.s32.totalorder %s32, 0
      %p74 = por %p72, %p73
      %p75 = scmp.ne.s32.totalorder %s63, %s64
      %p76 = scmp.eq.s32.totalorder %s33, 1
      %p77 = por %p75, %p76
      %p79 = scmp.ne.s32.totalorder %s64, %s78
      %p80 = scmp.eq.s32.totalorder %s33, 0
      %p81 = por %p79, %p80
      %s83 = sadd.s32 %s82, 1
      %p86 = scmp.eq.s32.totalorder %s27, 1
      %p87 = scmp.ne.s32.totalorder %s82, %s84
      %p88 = scmp.eq.s32.totalorder %s27, 0
      %p89 = por %p87, %p88
      %p90 = scmp.ne.s32.totalorder %s82, %s84
      %p91 = scmp.eq.s32.totalorder %s32, 1
      %p92 = por %p90, %p91
      %p93 = scmp.ne.s32.totalorder %s84, %s85
      %p94 = scmp.eq.s32.totalorder %s32, 0
      %p95 = por %p93, %p94
      %p96 = scmp.ne.s32.totalorder %s84, %s85
      %p97 = scmp.eq.s32.totalorder %s33, 1
      %p98 = por %p96, %p97
      %p100 = scmp.ne.s32.totalorder %s85, %s99
      %p101 = scmp.eq.s32.totalorder %s33, 0
      %p102 = por %p100, %p101
      %s104 = sadd.s32 %s103, 1
      %p107 = scmp.eq.s32.totalorder %s27, 1
      %p108 = scmp.ne.s32.totalorder %s103, %s105
      %p109 = scmp.eq.s32.totalorder %s27, 0
      %p110 = por %p108, %p109
      %p111 = scmp.ne.s32.totalorder %s103, %s105
      %p112 = scmp.eq.s32.totalorder %s32, 1
      %p113 = por %p111, %p112
      %p114 = scmp.ne.s32.totalorder %s105, %s106
      %p115 = scmp.eq.s32.totalorder %s32, 0
      %p116 = por %p114, %p115
      %p117 = scmp.ne.s32.totalorder %s105, %s106
      %p118 = scmp.eq.s32.totalorder %s33, 1
      %p119 = por %p117, %p118
      %p121 = scmp.ne.s32.totalorder %s106, %s120
      %p122 = scmp.eq.s32.totalorder %s33, 0
      %p123 = por %p121, %p122
      %s125 = sadd.s32 %s124, 1
      %p128 = scmp.eq.s32.totalorder %s27, 1
      %p129 = scmp.ne.s32.totalorder %s124, %s126
      %p130 = scmp.eq.s32.totalorder %s27, 0
      %p131 = por %p129, %p130
      %p132 = scmp.ne.s32.totalorder %s124, %s126
      %p133 = scmp.eq.s32.totalorder %s32, 1
      %p134 = por %p132, %p133
      %p135 = scmp.ne.s32.totalorder %s126, %s127
      %p136 = scmp.eq.s32.totalorder %s32, 0
      %p137 = por %p135, %p136
      %p138 = scmp.ne.s32.totalorder %s126, %s127
      %p139 = scmp.eq.s32.totalorder %s33, 1
      %p140 = por %p138, %p139
      %p142 = scmp.ne.s32.totalorder %s127, %s141
      %p143 = scmp.eq.s32.totalorder %s33, 0
      %p144 = por %p142, %p143
      %s146 = sadd.s32 %s145, 1
      %p149 = scmp.eq.s32.totalorder %s27, 1
      %p150 = scmp.ne.s32.totalorder %s145, %s147
      %p151 = scmp.eq.s32.totalorder %s27, 0
      %p152 = por %p150, %p151
      %p153 = scmp.ne.s32.totalorder %s145, %s147
      %p154 = scmp.eq.s32.totalorder %s32, 1
      %p155 = por %p153, %p154
      %p156 = scmp.ne.s32.totalorder %s147, %s148
      %p157 = scmp.eq.s32.totalorder %s32, 0
      %p158 = por %p156, %p157
      %p159 = scmp.ne.s32.totalorder %s147, %s148
      %p160 = scmp.eq.s32.totalorder %s33, 1
      %p161 = por %p159, %p160
      %p163 = scmp.ne.s32.totalorder %s148, %s162
      %p164 = scmp.eq.s32.totalorder %s33, 0
      %p165 = por %p163, %p164
      %s167 = sadd.s32 %s166, 1
      %p170 = scmp.eq.s32.totalorder %s27, 1
      %p171 = scmp.ne.s32.totalorder %s166, %s168
      %p172 = scmp.eq.s32.totalorder %s27, 0
      %p173 = por %p171, %p172
      %p174 = scmp.ne.s32.totalorder %s166, %s168
      %p175 = scmp.eq.s32.totalorder %s32, 1
      %p176 = por %p174, %p175
      %p177 = scmp.ne.s32.totalorder %s168, %s169
      %p178 = scmp.eq.s32.totalorder %s32, 0
      %p179 = por %p177, %p178
      %p180 = scmp.ne.s32.totalorder %s168, %s169
      %p181 = scmp.eq.s32.totalorder %s33, 1
      %p182 = por %p180, %p181
      %p184 = scmp.ne.s32.totalorder %s169, %s183
      %p185 = scmp.eq.s32.totalorder %s33, 0
      %p186 = por %p184, %p185
      %s188 = sadd.s32 %s187, 1
      %p191 = scmp.eq.s32.totalorder %s27, 1
      %p192 = scmp.ne.s32.totalorder %s187, %s189
      %p193 = scmp.eq.s32.totalorder %s27, 0
      %p194 = por %p192, %p193
      %p195 = scmp.ne.s32.totalorder %s187, %s189
      %p196 = scmp.eq.s32.totalorder %s32, 1
      %p197 = por %p195, %p196
      %p198 = scmp.ne.s32.totalorder %s189, %s190
      %p199 = scmp.eq.s32.totalorder %s32, 0
      %p200 = por %p198, %p199
      %p201 = scmp.ne.s32.totalorder %s189, %s190
      %p202 = scmp.eq.s32.totalorder %s33, 1
      %p203 = por %p201, %p202
      %p205 = scmp.ne.s32.totalorder %s190, %s204
      %p206 = scmp.eq.s32.totalorder %s33, 0
      %p207 = por %p205, %p206
      %s209 = sadd.s32 %s208, 1
      %p212 = scmp.eq.s32.totalorder %s27, 1
      %p213 = scmp.ne.s32.totalorder %s208, %s210
      %p214 = scmp.eq.s32.totalorder %s27, 0
      %p215 = por %p213, %p214
      %p216 = scmp.ne.s32.totalorder %s208, %s210
      %p217 = scmp.eq.s32.totalorder %s32, 1
      %p218 = por %p216, %p217
      %p219 = scmp.ne.s32.totalorder %s210, %s211
      %p220 = scmp.eq.s32.totalorder %s32, 0
      %p221 = por %p219, %p220
      %p222 = scmp.ne.s32.totalorder %s210, %s211
      %p223 = scmp.eq.s32.totalorder %s33, 1
      %p224 = por %p222, %p223
      %p226 = scmp.ne.s32.totalorder %s211, %s225
      %p227 = scmp.eq.s32.totalorder %s33, 0
      %p228 = por %p226, %p227
      %s230 = sadd.s32 %s229, 1
      %p233 = scmp.eq.s32.totalorder %s27, 1
      %p234 = scmp.ne.s32.totalorder %s229, %s231
      %p235 = scmp.eq.s32.totalorder %s27, 0
      %p236 = por %p234, %p235
      %p237 = scmp.ne.s32.totalorder %s229, %s231
      %p238 = scmp.eq.s32.totalorder %s32, 1
      %p239 = por %p237, %p238
      %p240 = scmp.ne.s32.totalorder %s231, %s232
      %p241 = scmp.eq.s32.totalorder %s32, 0
      %p242 = por %p240, %p241
      %p243 = scmp.ne.s32.totalorder %s231, %s232
      %p244 = scmp.eq.s32.totalorder %s33, 1
      %p245 = por %p243, %p244
      %p247 = scmp.ne.s32.totalorder %s232, %s246
      %p248 = scmp.eq.s32.totalorder %s33, 0
      %p249 = por %p247, %p248
      %s251 = sadd.s32 %s250, 1
      %p254 = scmp.eq.s32.totalorder %s27, 1
      %p255 = scmp.ne.s32.totalorder %s250, %s252
      %p256 = scmp.eq.s32.totalorder %s27, 0
      %p257 = por %p255, %p256
      %p258 = scmp.ne.s32.totalorder %s250, %s252
      %p259 = scmp.eq.s32.totalorder %s32, 1
      %p260 = por %p258, %p259
      %p261 = scmp.ne.s32.totalorder %s252, %s253
      %p262 = scmp.eq.s32.totalorder %s32, 0
      %p263 = por %p261, %p262
      %p264 = scmp.ne.s32.totalorder %s252, %s253
      %p265 = scmp.eq.s32.totalorder %s33, 1
      %p266 = por %p264, %p265
      %p268 = scmp.ne.s32.totalorder %s253, %s267
      %p269 = scmp.eq.s32.totalorder %s33, 0
      %p270 = por %p268, %p269
      %s272 = sadd.s32 %s271, 1
      %p275 = scmp.eq.s32.totalorder %s27, 1
      %p276 = scmp.ne.s32.totalorder %s271, %s273
      %p277 = scmp.eq.s32.totalorder %s27, 0
      %p278 = por %p276, %p277
      %p279 = scmp.ne.s32.totalorder %s271, %s273
      %p280 = scmp.eq.s32.totalorder %s32, 1
      %p281 = por %p279, %p280
      %p282 = scmp.ne.s32.totalorder %s273, %s274
      %p283 = scmp.eq.s32.totalorder %s32, 0
      %p284 = por %p282, %p283
      %p285 = scmp.ne.s32.totalorder %s273, %s274
      %p286 = scmp.eq.s32.totalorder %s33, 1
      %p287 = por %p285, %p286
      %p289 = scmp.ne.s32.totalorder %s274, %s288
      %p290 = scmp.eq.s32.totalorder %s33, 0
      %p291 = por %p289, %p290
      %s293 = sadd.s32 %s292, 1
      %p296 = scmp.eq.s32.totalorder %s27, 1
      %p297 = scmp.ne.s32.totalorder %s292, %s294
      %p298 = scmp.eq.s32.totalorder %s27, 0
      %p299 = por %p297, %p298
      %p300 = scmp.ne.s32.totalorder %s292, %s294
      %p301 = scmp.eq.s32.totalorder %s32, 1
      %p302 = por %p300, %p301
      %p303 = scmp.ne.s32.totalorder %s294, %s295
      %p304 = scmp.eq.s32.totalorder %s32, 0
      %p305 = por %p303, %p304
      %p306 = scmp.ne.s32.totalorder %s294, %s295
      %p307 = scmp.eq.s32.totalorder %s33, 1
      %p308 = por %p306, %p307
      %p310 = scmp.ne.s32.totalorder %s295, %s309
      %p311 = scmp.eq.s32.totalorder %s33, 0
      %p312 = por %p310, %p311
      %s314 = sadd.s32 %s313, 1
      %p317 = scmp.eq.s32.totalorder %s27, 1
      %p318 = scmp.ne.s32.totalorder %s313, %s315
      %p319 = scmp.eq.s32.totalorder %s27, 0
      %p320 = por %p318, %p319
      %p321 = scmp.ne.s32.totalorder %s313, %s315
      %p322 = scmp.eq.s32.totalorder %s32, 1
      %p323 = por %p321, %p322
      %p324 = scmp.ne.s32.totalorder %s315, %s316
      %p325 = scmp.eq.s32.totalorder %s32, 0
      %p326 = por %p324, %p325
      %p327 = scmp.ne.s32.totalorder %s315, %s316
      %p328 = scmp.eq.s32.totalorder %s33, 1
      %p329 = por %p327, %p328
      %p331 = scmp.ne.s32.totalorder %s316, %s330
      %p332 = scmp.eq.s32.totalorder %s33, 0
      %p333 = por %p331, %p332
      %s335 = sadd.s32 %s334, 1
      %p338 = scmp.eq.s32.totalorder %s27, 1
      %p339 = scmp.ne.s32.totalorder %s334, %s336
      %p340 = scmp.eq.s32.totalorder %s27, 0
      %p341 = por %p339, %p340
      %p342 = scmp.ne.s32.totalorder %s334, %s336
      %p343 = scmp.eq.s32.totalorder %s32, 1
      %p344 = por %p342, %p343
      %p345 = scmp.ne.s32.totalorder %s336, %s337
      %p346 = scmp.eq.s32.totalorder %s32, 0
      %p347 = por %p345, %p346
      %p348 = scmp.ne.s32.totalorder %s336, %s337
      %p349 = scmp.eq.s32.totalorder %s33, 1
      %p350 = por %p348, %p349
      %p352 = scmp.ne.s32.totalorder %s337, %s351
      %p353 = scmp.eq.s32.totalorder %s33, 0
      %p354 = por %p352, %p353
      %s356 = sadd.s32 %s355, 1
      %p359 = scmp.eq.s32.totalorder %s27, 1
      %p360 = scmp.ne.s32.totalorder %s355, %s357
      %p361 = scmp.eq.s32.totalorder %s27, 0
      %p362 = por %p360, %p361
      %p363 = scmp.ne.s32.totalorder %s355, %s357
      %p364 = scmp.eq.s32.totalorder %s32, 1
      %p365 = por %p363, %p364
      %p366 = scmp.ne.s32.totalorder %s357, %s358
      %p367 = scmp.eq.s32.totalorder %s32, 0
      %p368 = por %p366, %p367
      %p369 = scmp.ne.s32.totalorder %s357, %s358
      %p370 = scmp.eq.s32.totalorder %s33, 1
      %p371 = por %p369, %p370
      %p373 = scmp.ne.s32.totalorder %s358, %s372
      %p374 = scmp.eq.s32.totalorder %s33, 0
      %p375 = por %p373, %p374
      %s377 = sadd.s32 %s376, 1
      %p380 = scmp.eq.s32.totalorder %s27, 1
      %p381 = scmp.ne.s32.totalorder %s376, %s378
      %p382 = scmp.eq.s32.totalorder %s27, 0
      %p383 = por %p381, %p382
      %p384 = scmp.ne.s32.totalorder %s376, %s378
      %p385 = scmp.eq.s32.totalorder %s32, 1
      %p386 = por %p384, %p385
      %p387 = scmp.ne.s32.totalorder %s378, %s379
      %p388 = scmp.eq.s32.totalorder %s32, 0
      %p389 = por %p387, %p388
      %p390 = scmp.ne.s32.totalorder %s378, %s379
      %p391 = scmp.eq.s32.totalorder %s33, 1
      %p392 = por %p390, %p391
      %p394 = scmp.ne.s32.totalorder %s379, %s393
      %p395 = scmp.eq.s32.totalorder %s33, 0
      %p396 = por %p394, %p395
      %s398 = sadd.s32 %s397, 1
      %p401 = scmp.eq.s32.totalorder %s27, 1
      %p402 = scmp.ne.s32.totalorder %s397, %s399
      %p403 = scmp.eq.s32.totalorder %s27, 0
      %p404 = por %p402, %p403
      %p405 = scmp.ne.s32.totalorder %s397, %s399
      %p406 = scmp.eq.s32.totalorder %s32, 1
      %p407 = por %p405, %p406
      %p408 = scmp.ne.s32.totalorder %s399, %s400
      %p409 = scmp.eq.s32.totalorder %s32, 0
      %p410 = por %p408, %p409
      %p411 = scmp.ne.s32.totalorder %s399, %s400
      %p412 = scmp.eq.s32.totalorder %s33, 1
      %p413 = por %p411, %p412
      %p415 = scmp.ne.s32.totalorder %s400, %s414
      %p416 = scmp.eq.s32.totalorder %s33, 0
      %p417 = por %p415, %p416
      %s418 = ssub.s32 %s27, %s34
      %p419 = scmp.eq.s32.totalorder %s418, 0
      %s421 = sadd.s32 %s420, 1
      %s422 = scalar_select %p419, %s420, %s421
      %p425 = pneg %p419
      %p426 = scmp.eq.s32.totalorder %s27, 1
      %p427 = por %p425, %p426
      %p428 = scmp.ne.s32.totalorder %s420, %s423
      %p429 = scmp.eq.s32.totalorder %s27, 0
      %p430 = por %p428, %p429
      %p431 = scmp.ne.s32.totalorder %s420, %s423
      %p432 = scmp.eq.s32.totalorder %s32, 1
      %p433 = por %p431, %p432
      %p434 = scmp.ne.s32.totalorder %s423, %s424
      %p435 = scmp.eq.s32.totalorder %s32, 0
      %p436 = por %p434, %p435
      %p437 = scmp.ne.s32.totalorder %s423, %s424
      %p438 = scmp.eq.s32.totalorder %s33, 1
      %p439 = por %p437, %p438
      %p441 = scmp.ne.s32.totalorder %s424, %s440
      %p442 = scmp.eq.s32.totalorder %s33, 0
      %p443 = por %p441, %p442
      %p444 = scmp.le.s32.totalorder 1, %s27
      %p445 = scmp.lt.s32.totalorder %s27, 3
      %p446 = pnand %p444, %p445
      %p447 = pneg %p446
      // Predicated region
      $region9: #{tpu_custom_call.1} parent=5 // pred_check
        _
      $region10: #{tpu_custom_call.1} parent=5 // pred_check_branch
        %449 = sbr.rel (%p446) target = $region12
      $region11: #{tpu_custom_call.1} parent=5 // pred_region
        %s450 = ssub.s32 %s27, 1
        // Predicated region
        $region13: #{tpu_custom_call.1} parent=11 // pred_check
          %p451 = pneg %p74
        $region14: #{tpu_custom_call.1} parent=11 // pred_check_branch
          %453 = sbr.rel (%p451) target = $region16
        $region15: #{tpu_custom_call.1} parent=11 // pred_region
          _
        $region16: #{tpu_custom_call.1} parent=11 // pred_fallthru
          _
        // Predicated region
        $region17: #{tpu_custom_call.1} parent=11 // pred_check
          %p454 = pneg %p95
        $region18: #{tpu_custom_call.1} parent=11 // pred_check_branch
          %456 = sbr.rel (%p454) target = $region20
        $region19: #{tpu_custom_call.1} parent=11 // pred_region
          _
        $region20: #{tpu_custom_call.1} parent=11 // pred_fallthru
          _
        // Predicated region
        $region21: #{tpu_custom_call.1} parent=11 // pred_check
          %p457 = pneg %p116
        $region22: #{tpu_custom_call.1} parent=11 // pred_check_branch
          %459 = sbr.rel (%p457) target = $region24
        $region23: #{tpu_custom_call.1} parent=11 // pred_region
          _
        $region24: #{tpu_custom_call.1} parent=11 // pred_fallthru
          _
        // Predicated region
        $region25: #{tpu_custom_call.1} parent=11 // pred_check
          %p460 = pneg %p137
        $region26: #{tpu_custom_call.1} parent=11 // pred_check_branch
          %462 = sbr.rel (%p460) target = $region28
        $region27: #{tpu_custom_call.1} parent=11 // pred_region
          _
        $region28: #{tpu_custom_call.1} parent=11 // pred_fallthru
          _
        // Predicated region
        $region29: #{tpu_custom_call.1} parent=11 // pred_check
          %p463 = pneg %p158
        $region30: #{tpu_custom_call.1} parent=11 // pred_check_branch
          %465 = sbr.rel (%p463) target = $region32
        $region31: #{tpu_custom_call.1} parent=11 // pred_region
          _
        $region32: #{tpu_custom_call.1} parent=11 // pred_fallthru
          _
        // Predicated region
        $region33: #{tpu_custom_call.1} parent=11 // pred_check
          %p466 = pneg %p179
        $region34: #{tpu_custom_call.1} parent=11 // pred_check_branch
          %468 = sbr.rel (%p466) target = $region36
        $region35: #{tpu_custom_call.1} parent=11 // pred_region
          _
        $region36: #{tpu_custom_call.1} parent=11 // pred_fallthru
          _
        // Predicated region
        $region37: #{tpu_custom_call.1} parent=11 // pred_check
          %p469 = pneg %p200
        $region38: #{tpu_custom_call.1} parent=11 // pred_check_branch
          %471 = sbr.rel (%p469) target = $region40
        $region39: #{tpu_custom_call.1} parent=11 // pred_region
          _
        $region40: #{tpu_custom_call.1} parent=11 // pred_fallthru
          _
        // Predicated region
        $region41: #{tpu_custom_call.1} parent=11 // pred_check
          %p472 = pneg %p221
        $region42: #{tpu_custom_call.1} parent=11 // pred_check_branch
          %474 = sbr.rel (%p472) target = $region44
        $region43: #{tpu_custom_call.1} parent=11 // pred_region
          _
        $region44: #{tpu_custom_call.1} parent=11 // pred_fallthru
          _
        // Predicated region
        $region45: #{tpu_custom_call.1} parent=11 // pred_check
          %p475 = pneg %p242
        $region46: #{tpu_custom_call.1} parent=11 // pred_check_branch
          %477 = sbr.rel (%p475) target = $region48
        $region47: #{tpu_custom_call.1} parent=11 // pred_region
          _
        $region48: #{tpu_custom_call.1} parent=11 // pred_fallthru
          _
        // Predicated region
        $region49: #{tpu_custom_call.1} parent=11 // pred_check
          %p478 = pneg %p263
        $region50: #{tpu_custom_call.1} parent=11 // pred_check_branch
          %480 = sbr.rel (%p478) target = $region52
        $region51: #{tpu_custom_call.1} parent=11 // pred_region
          _
        $region52: #{tpu_custom_call.1} parent=11 // pred_fallthru
          _
        // Predicated region
        $region53: #{tpu_custom_call.1} parent=11 // pred_check
          %p481 = pneg %p284
        $region54: #{tpu_custom_call.1} parent=11 // pred_check_branch
          %483 = sbr.rel (%p481) target = $region56
        $region55: #{tpu_custom_call.1} parent=11 // pred_region
          _
        $region56: #{tpu_custom_call.1} parent=11 // pred_fallthru
          _
        // Predicated region
        $region57: #{tpu_custom_call.1} parent=11 // pred_check
          %p484 = pneg %p305
        $region58: #{tpu_custom_call.1} parent=11 // pred_check_branch
          %486 = sbr.rel (%p484) target = $region60
        $region59: #{tpu_custom_call.1} parent=11 // pred_region
          _
        $region60: #{tpu_custom_call.1} parent=11 // pred_fallthru
          _
        // Predicated region
        $region61: #{tpu_custom_call.1} parent=11 // pred_check
          %p487 = pneg %p326
        $region62: #{tpu_custom_call.1} parent=11 // pred_check_branch
          %489 = sbr.rel (%p487) target = $region64
        $region63: #{tpu_custom_call.1} parent=11 // pred_region
          _
        $region64: #{tpu_custom_call.1} parent=11 // pred_fallthru
          _
        // Predicated region
        $region65: #{tpu_custom_call.1} parent=11 // pred_check
          %p490 = pneg %p347
        $region66: #{tpu_custom_call.1} parent=11 // pred_check_branch
          %492 = sbr.rel (%p490) target = $region68
        $region67: #{tpu_custom_call.1} parent=11 // pred_region
          _
        $region68: #{tpu_custom_call.1} parent=11 // pred_fallthru
          _
        // Predicated region
        $region69: #{tpu_custom_call.1} parent=11 // pred_check
          %p493 = pneg %p368
        $region70: #{tpu_custom_call.1} parent=11 // pred_check_branch
          %495 = sbr.rel (%p493) target = $region72
        $region71: #{tpu_custom_call.1} parent=11 // pred_region
          _
        $region72: #{tpu_custom_call.1} parent=11 // pred_fallthru
          _
        // Predicated region
        $region73: #{tpu_custom_call.1} parent=11 // pred_check
          %p496 = pneg %p389
        $region74: #{tpu_custom_call.1} parent=11 // pred_check_branch
          %498 = sbr.rel (%p496) target = $region76
        $region75: #{tpu_custom_call.1} parent=11 // pred_region
          _
        $region76: #{tpu_custom_call.1} parent=11 // pred_fallthru
          _
        // Predicated region
        $region77: #{tpu_custom_call.1} parent=11 // pred_check
          %p499 = pneg %p410
        $region78: #{tpu_custom_call.1} parent=11 // pred_check_branch
          %501 = sbr.rel (%p499) target = $region80
        $region79: #{tpu_custom_call.1} parent=11 // pred_region
          _
        $region80: #{tpu_custom_call.1} parent=11 // pred_fallthru
          _
      $region12: #{tpu_custom_call.1} parent=5 // pred_fallthru
        _
      %p502 = scmp.lt.s32.totalorder %s27, 2
      // Predicated region
      $region81: #{tpu_custom_call.1} parent=5 // pred_check
        %p503 = pneg %p502
      $region82: #{tpu_custom_call.1} parent=5 // pred_check_branch
        %505 = sbr.rel (%p503) target = $region84
      $region83: #{tpu_custom_call.1} parent=5 // pred_region
        // Predicated region
        $region85: #{tpu_custom_call.1} parent=83 // pred_check
          %p506 = pneg %p47
        $region86: #{tpu_custom_call.1} parent=83 // pred_check_branch
          %508 = sbr.rel (%p506) target = $region88
        $region87: #{tpu_custom_call.1} parent=83 // pred_region
          %p509 = scmp.lt.s32.totalorder %s27, 1
          %s510 = scalar_select %p509, %s27, 1
          %s511 = smul.addr %s510, 8
          %s512 = scalar_lea.vmem %s0, %s511
        $region88: #{tpu_custom_call.1} parent=83 // pred_fallthru
          _
      $region84: #{tpu_custom_call.1} parent=5 // pred_fallthru
        _
      %p513 = scmp.le.s32.totalorder 1, %s27
      %p514 = scmp.lt.s32.totalorder %s27, 3
      %p515 = pnand %p513, %p514
      %p516 = pneg %p515
      // Predicated region
      $region89: #{tpu_custom_call.1} parent=5 // pred_check
        _
      $region90: #{tpu_custom_call.1} parent=5 // pred_check_branch
        %518 = sbr.rel (%p515) target = $region92
      $region91: #{tpu_custom_call.1} parent=5 // pred_region
        %s519 = ssub.s32 %s27, 1
        %p520 = scmp.lt.s32.totalorder %s32, 1
        %s521 = scalar_select %p520, %s32, 1
        %s522 = smul.addr %s521, 8
        %s523 = scalar_lea.vmem %s0, %s522
        %p524 = pneg %p53
        %p525 = pneg %p50
        %p526 = pneg %p74
        %p527 = pneg %p71
        %p528 = pneg %p95
        %p529 = pneg %p92
        %p530 = pneg %p116
        %p531 = pneg %p113
        %p532 = pneg %p137
        %p533 = pneg %p134
        %p534 = pneg %p158
        %p535 = pneg %p155
        %p536 = pneg %p179
        %p537 = pneg %p176
        %p538 = pneg %p200
        %p539 = pneg %p197
        %p540 = pneg %p221
        %p541 = pneg %p218
        %p542 = pneg %p242
        %p543 = pneg %p239
        %p544 = pneg %p263
        %p545 = pneg %p260
        %p546 = pneg %p284
        %p547 = pneg %p281
        %p548 = pneg %p305
        %p549 = pneg %p302
        %p550 = pneg %p326
        %p551 = pneg %p323
        %p552 = pneg %p347
        %p553 = pneg %p344
        %p554 = pneg %p368
        %p555 = pneg %p365
        %p556 = pneg %p389
        %p557 = pneg %p386
        %p558 = pneg %p410
        %p559 = pneg %p407
        %p560 = pneg %p436
        %p561 = pneg %p433
        %s562 = sand.u32 %s423, 1
        %s563 = scalar_lea.sflag [#allocation3], %s562
        %s564 = sand.u32 %s423, 1
        %s565 = smul.addr %s564, 8
        %s566 = scalar_lea.vmem [#allocation2], %s565
        %p567 = scmp.lt.s32.totalorder %s32, 1
        %s568 = scalar_select %p567, %s32, 1
        %s569 = smul.addr %s568, 8
        %s570 = scalar_lea.vmem %s0, %s569
        %v572 = vld [vmem:[%s570] sm:$0xff]
        %v573 = vld [vmem:[%s6] sm:$0x1]
        %v574 = vld [vmem:[%s7] sm:$0x1]
        %vm575 = vcmask 261120
        %v576 = vsel %vm575, %v572, 0.0
        %577 = vadd.xlane.f32.xlu0 %v576
        %v578 = vpop.xlane.xlu0 %577
        %v579 = vrcp.pop 32.0
        %v580 = vmul.f32 %v578, %v579
        %v581 = vsub.f32 %v572, %v580
        %v582 = vmul.f32 %v581, %v581
        %v583 = vsel %vm575, %v582, 0.0
        %584 = vadd.xlane.f32.xlu0 %v583
        %v585 = vpop.xlane.xlu0 %584
        %v586 = vmul.f32 %v585, %v579
        %v587 = vadd.f32 %v586, 1e-05
        %v588 = vrsqrt.pop %v587
        %v589 = vmul.f32 %v581, %v588
        %v591 = vlaneseq
        %v592 = vshrl.u32 %v591, 7
        %v593 = vsub.s32 0, %v592
        %v594 = vrot.slane %v573, %v593
        %v596 = vmul.f32 %v589, %v594
        %v598 = vlaneseq
        %v599 = vshrl.u32 %v598, 7
        %v600 = vsub.s32 0, %v599
        %v601 = vrot.slane %v574, %v600
        %v603 = vadd.f32 %v596, %v601
        %v604 = vpack.c.bf16 %v603, %v603
        %v605 = vld [vmem:[%s9] sm:$0xf]
        %v606 = vld [vmem:[%s9 + $0x4] sm:$0xf]
        %v607 = vld [vmem:[%s9 + $0x8] sm:$0xf]
        %v608 = vld [vmem:[%s9 + $0xc] sm:$0xf]
        %v613 = vunpack.c.l.b16 %v605
        %v614 = vunpack.c.l.b16 %v606
        %v615 = vunpack.c.l.b16 %v607
        %v616 = vunpack.c.l.b16 %v608
        %v617 = vpack.c.b16 %v614, %v613
        %v618 = vpack.c.b16 %v616, %v615
        %v622 = vsel %vm575, %v604, 0
        %624 = vmatprep.subr.bf16.mxu0 0
        %625 = vmatpush1.bf16.msra.mxu0 %v617
        %626 = vmatprep.subr.bf16.mxu0 0
        %627 = vmatpush1.bf16.msra.mxu0 %v618
        %628 = vmatprep.subr.bf16.mxu0 0
        %629 = vmatpush1.bf16.msra.mxu0 0
        %630 = vmatprep.subr.bf16.mxu0 0
        %631 = vmatpush1.bf16.msra.mxu0 0
        %632 = vmatprep.subr.bf16.mxu0 0
        %633 = vmatpush1.bf16.msra.mxu0 0
        %634 = vmatprep.subr.bf16.mxu0 0
        %635 = vmatpush1.bf16.msra.mxu0 0
        %636 = vmatprep.subr.bf16.mxu0 0
        %637 = vmatpush1.bf16.msra.mxu0 0
        %638 = vmatprep.subr.bf16.mxu0 0
        %639 = vmatpush1.bf16.msra.mxu0 0
        %640 = vmatprep.subr.bf16.mxu0 0
        %641 = vmatpush1.bf16.msra.mxu0 0
        %642 = vmatprep.subr.bf16.mxu0 0
        %643 = vmatpush1.bf16.msra.mxu0 0
        %644 = vmatprep.subr.bf16.mxu0 0
        %645 = vmatpush1.bf16.msra.mxu0 0
        %646 = vmatprep.subr.bf16.mxu0 0
        %647 = vmatpush1.bf16.msra.mxu0 0
        %648 = vmatprep.subr.bf16.mxu0 0
        %649 = vmatpush1.bf16.msra.mxu0 0
        %650 = vmatprep.subr.bf16.mxu0 0
        %651 = vmatpush1.bf16.msra.mxu0 0
        %652 = vmatprep.subr.bf16.mxu0 0
        %653 = vmatpush1.bf16.msra.mxu0 0
        %654 = vmatprep.subr.bf16.mxu0 0
        %655 = vmatpush1.bf16.msra.mxu0 0
        %656 = vmatprep.mubr.bf16.mxu0 0
        %657 = vmatmul.mubr.bf16.gmra.mrb[0].mxu0 %v622
        %v658 = vpop.f32.mrb[0].mxu0
        %v659 = vadd.f32 0.0, %v658
        %v660 = vpop.f32.mrb[0].mxu0
        %v661 = vpop.f32.mrb[0].mxu0
        %v662 = vpop.f32.mrb[0].mxu0
        %663 = vdwg.mxu0
        %v664 = vld [vmem:[%s1] sm:$0x1]
        %vm665 = vcmask 64512
        %v667 = vsel %vm665, %v664, 0
        %vm669 = vcmask 1043456
        %v670 = vsel %vm669, %v604, 0
        %672 = vmatprep.subr.bf16.mxu0 0
        %673 = vmatpush1.bf16.msra.mxu0 %v670
        %674 = vmatprep.subr.bf16.mxu0 0
        %675 = vmatpush1.bf16.msra.mxu0 0
        %676 = vmatprep.subr.bf16.mxu0 0
        %677 = vmatpush1.bf16.msra.mxu0 0
        %678 = vmatprep.subr.bf16.mxu0 0
        %679 = vmatpush1.bf16.msra.mxu0 0
        %680 = vmatprep.subr.bf16.mxu0 0
        %681 = vmatpush1.bf16.msra.mxu0 0
        %682 = vmatprep.subr.bf16.mxu0 0
        %683 = vmatpush1.bf16.msra.mxu0 0
        %684 = vmatprep.subr.bf16.mxu0 0
        %685 = vmatpush1.bf16.msra.mxu0 0
        %686 = vmatprep.subr.bf16.mxu0 0
        %687 = vmatpush1.bf16.msra.mxu0 0
        %688 = vmatprep.subr.bf16.mxu0 0
        %689 = vmatpush1.bf16.msra.mxu0 0
        %690 = vmatprep.subr.bf16.mxu0 0
        %691 = vmatpush1.bf16.msra.mxu0 0
        %692 = vmatprep.subr.bf16.mxu0 0
        %693 = vmatpush1.bf16.msra.mxu0 0
        %694 = vmatprep.subr.bf16.mxu0 0
        %695 = vmatpush1.bf16.msra.mxu0 0
        %696 = vmatprep.subr.bf16.mxu0 0
        %697 = vmatpush1.bf16.msra.mxu0 0
        %698 = vmatprep.subr.bf16.mxu0 0
        %699 = vmatpush1.bf16.msra.mxu0 0
        %700 = vmatprep.subr.bf16.mxu0 0
        %701 = vmatpush1.bf16.msra.mxu0 0
        %702 = vmatprep.subr.bf16.mxu0 0
        %703 = vmatpush1.bf16.msra.mxu0 0
        %704 = vmatprep.mubr.bf16.mxu0 0
        %705 = vmatmul.mubr.bf16.gmra.mrb[0].mxu0 %v667
        %v706 = vpop.f32.mrb[0].mxu0
        %v707 = vadd.f32 0.0, %v706
        %v708 = vpop.f32.mrb[0].mxu0
        %v709 = vpop.f32.mrb[0].mxu0
        %v710 = vpop.f32.mrb[0].mxu0
        %711 = vdwg.mxu0
        %v712 = vpack.c.bf16 %v707, %v707
        %v713 = vld [vmem:[%s8] sm:$0xf]
        %v714 = vld [vmem:[%s8 + $0x4] sm:$0xf]
        %v715 = vld [vmem:[%s8 + $0x8] sm:$0xf]
        %v716 = vld [vmem:[%s8 + $0xc] sm:$0xf]
        %v721 = vunpack.c.l.b16 %v713
        %v722 = vunpack.c.l.b16 %v714
        %v723 = vunpack.c.l.b16 %v715
        %v724 = vunpack.c.l.b16 %v716
        %v725 = vpack.c.b16 %v722, %v721
        %v726 = vpack.c.b16 %v724, %v723
        %v730 = vsel %vm575, %v712, 0
        %732 = vmatprep.subr.bf16.mxu0 0
        %733 = vmatpush1.bf16.msra.mxu0 %v725
        %734 = vmatprep.subr.bf16.mxu0 0
        %735 = vmatpush1.bf16.msra.mxu0 %v726
        %736 = vmatprep.subr.bf16.mxu0 0
        %737 = vmatpush1.bf16.msra.mxu0 0
        %738 = vmatprep.subr.bf16.mxu0 0
        %739 = vmatpush1.bf16.msra.mxu0 0
        %740 = vmatprep.subr.bf16.mxu0 0
        %741 = vmatpush1.bf16.msra.mxu0 0
        %742 = vmatprep.subr.bf16.mxu0 0
        %743 = vmatpush1.bf16.msra.mxu0 0
        %744 = vmatprep.subr.bf16.mxu0 0
        %745 = vmatpush1.bf16.msra.mxu0 0
        %746 = vmatprep.subr.bf16.mxu0 0
        %747 = vmatpush1.bf16.msra.mxu0 0
        %748 = vmatprep.subr.bf16.mxu0 0
        %749 = vmatpush1.bf16.msra.mxu0 0
        %750 = vmatprep.subr.bf16.mxu0 0
        %751 = vmatpush1.bf16.msra.mxu0 0
        %752 = vmatprep.subr.bf16.mxu0 0
        %753 = vmatpush1.bf16.msra.mxu0 0
        %754 = vmatprep.subr.bf16.mxu0 0
        %755 = vmatpush1.bf16.msra.mxu0 0
        %756 = vmatprep.subr.bf16.mxu0 0
        %757 = vmatpush1.bf16.msra.mxu0 0
        %758 = vmatprep.subr.bf16.mxu0 0
        %759 = vmatpush1.bf16.msra.mxu0 0
        %760 = vmatprep.subr.bf16.mxu0 0
        %761 = vmatpush1.bf16.msra.mxu0 0
        %762 = vmatprep.subr.bf16.mxu0 0
        %763 = vmatpush1.bf16.msra.mxu0 0
        %764 = vmatprep.mubr.bf16.mxu0 0
        %765 = vmatmul.mubr.bf16.gmra.mrb[0].mxu0 %v730
        %v766 = vpop.f32.mrb[0].mxu0
        %v767 = vadd.f32 0.0, %v766
        %v768 = vpop.f32.mrb[0].mxu0
        %v769 = vpop.f32.mrb[0].mxu0
        %v770 = vpop.f32.mrb[0].mxu0
        %771 = vdwg.mxu0
        %v772 = vld [vmem:[%s3] sm:$0xf]
        %v773 = vpack.c.bf16 %v767, %v767
        %vm774 = vcmask 7168
        %v776 = vsel %vm774, %v772, 0
        %vm778 = vcmask 1040384
        %v779 = vsel 0, 4294967295, 65535
        %v780 = vsel %vm778, %v779, 0
        %v782 = vand.u32 %v773, %v780
        %784 = vmatprep.subr.bf16.mxu0 0
        %785 = vmatpush1.bf16.msra.mxu0 %v782
        %786 = vmatprep.subr.bf16.mxu0 0
        %787 = vmatpush1.bf16.msra.mxu0 0
        %788 = vmatprep.subr.bf16.mxu0 0
        %789 = vmatpush1.bf16.msra.mxu0 0
        %790 = vmatprep.subr.bf16.mxu0 0
        %791 = vmatpush1.bf16.msra.mxu0 0
        %792 = vmatprep.subr.bf16.mxu0 0
        %793 = vmatpush1.bf16.msra.mxu0 0
        %794 = vmatprep.subr.bf16.mxu0 0
        %795 = vmatpush1.bf16.msra.mxu0 0
        %796 = vmatprep.subr.bf16.mxu0 0
        %797 = vmatpush1.bf16.msra.mxu0 0
        %798 = vmatprep.subr.bf16.mxu0 0
        %799 = vmatpush1.bf16.msra.mxu0 0
        %800 = vmatprep.subr.bf16.mxu0 0
        %801 = vmatpush1.bf16.msra.mxu0 0
        %802 = vmatprep.subr.bf16.mxu0 0
        %803 = vmatpush1.bf16.msra.mxu0 0
        %804 = vmatprep.subr.bf16.mxu0 0
        %805 = vmatpush1.bf16.msra.mxu0 0
        %806 = vmatprep.subr.bf16.mxu0 0
        %807 = vmatpush1.bf16.msra.mxu0 0
        %808 = vmatprep.subr.bf16.mxu0 0
        %809 = vmatpush1.bf16.msra.mxu0 0
        %810 = vmatprep.subr.bf16.mxu0 0
        %811 = vmatpush1.bf16.msra.mxu0 0
        %812 = vmatprep.subr.bf16.mxu0 0
        %813 = vmatpush1.bf16.msra.mxu0 0
        %814 = vmatprep.subr.bf16.mxu0 0
        %815 = vmatpush1.bf16.msra.mxu0 0
        %816 = vmatprep.mubr.bf16.mxu0 0
        %817 = vmatmul.mubr.bf16.gmra.mrb[0].mxu0 %v776
        %v818 = vpop.f32.mrb[0].mxu0
        %v819 = vadd.f32 0.0, %v818
        %v820 = vpop.f32.mrb[0].mxu0
        %v821 = vpop.f32.mrb[0].mxu0
        %v822 = vpop.f32.mrb[0].mxu0
        %823 = vdwg.mxu0
        %v824 = vpack.c.bf16 %v659, %v659
        %v825 = vpack.c.bf16 %v819, %v819
        %v826 = vmul.bf16 %v824, %v825
        %v827 = vld [vmem:[%s4] sm:$0xf]
        %v828 = vld [vmem:[%s4 + $0x4] sm:$0xf]
        %v829 = vld [vmem:[%s4 + $0x8] sm:$0xf]
        %v830 = vld [vmem:[%s4 + $0xc] sm:$0xf]
        %v835 = vunpack.c.l.b16 %v827
        %v836 = vunpack.c.l.b16 %v828
        %v837 = vunpack.c.l.b16 %v829
        %v838 = vunpack.c.l.b16 %v830
        %v839 = vpack.c.b16 %v836, %v835
        %v840 = vpack.c.b16 %v838, %v837
        %v844 = vsel %vm575, %v826, 0
        %846 = vmatprep.subr.bf16.mxu0 0
        %847 = vmatpush1.bf16.msra.mxu0 %v839
        %848 = vmatprep.subr.bf16.mxu0 0
        %849 = vmatpush1.bf16.msra.mxu0 %v840
        %850 = vmatprep.subr.bf16.mxu0 0
        %851 = vmatpush1.bf16.msra.mxu0 0
        %852 = vmatprep.subr.bf16.mxu0 0
        %853 = vmatpush1.bf16.msra.mxu0 0
        %854 = vmatprep.subr.bf16.mxu0 0
        %855 = vmatpush1.bf16.msra.mxu0 0
        %856 = vmatprep.subr.bf16.mxu0 0
        %857 = vmatpush1.bf16.msra.mxu0 0
        %858 = vmatprep.subr.bf16.mxu0 0
        %859 = vmatpush1.bf16.msra.mxu0 0
        %860 = vmatprep.subr.bf16.mxu0 0
        %861 = vmatpush1.bf16.msra.mxu0 0
        %862 = vmatprep.subr.bf16.mxu0 0
        %863 = vmatpush1.bf16.msra.mxu0 0
        %864 = vmatprep.subr.bf16.mxu0 0
        %865 = vmatpush1.bf16.msra.mxu0 0
        %866 = vmatprep.subr.bf16.mxu0 0
        %867 = vmatpush1.bf16.msra.mxu0 0
        %868 = vmatprep.subr.bf16.mxu0 0
        %869 = vmatpush1.bf16.msra.mxu0 0
        %870 = vmatprep.subr.bf16.mxu0 0
        %871 = vmatpush1.bf16.msra.mxu0 0
        %872 = vmatprep.subr.bf16.mxu0 0
        %873 = vmatpush1.bf16.msra.mxu0 0
        %874 = vmatprep.subr.bf16.mxu0 0
        %875 = vmatpush1.bf16.msra.mxu0 0
        %876 = vmatprep.subr.bf16.mxu0 0
        %877 = vmatpush1.bf16.msra.mxu0 0
        %878 = vmatprep.mubr.bf16.mxu0 0
        %879 = vmatmul.mubr.bf16.gmra.mrb[0].mxu0 %v844
        %v880 = vpop.f32.mrb[0].mxu0
        %v881 = vadd.f32 0.0, %v880
        %v882 = vpop.f32.mrb[0].mxu0
        %v883 = vpop.f32.mrb[0].mxu0
        %v884 = vpop.f32.mrb[0].mxu0
        %885 = vdwg.mxu0
        %v886 = vsel %vm665, %v881, -inf
        %v887 = vrot.slane %v886, 4
        %v888 = vmax.f32 %v886, %v887
        %v889 = vrot.slane %v888, 2
        %v890 = vmax.f32 %v888, %v889
        %v891 = vrot.slane %v890, 1
        %v892 = vmax.f32 %v890, %v891
        %v893 = vsub.f32 %v881, %v892
        %v894 = vmul.f32 %v893, 1.442695
        %v895 = vpow.pop %v894
        %v896 = vsel %vm665, %v895, 0.0
        %v897 = vrot.slane %v896, 4
        %v898 = vadd.f32 %v896, %v897
        %v899 = vrot.slane %v898, 2
        %v900 = vadd.f32 %v898, %v899
        %v901 = vrot.slane %v900, 1
        %v902 = vadd.f32 %v900, %v901
        %v903 = vrcp.pop %v902
        %v904 = vmul.f32 %v895, %v903
        %v905 = vpack.c.bf16 %v904, %v904
        %v906 = vld [vmem:[%s5] sm:$0xf]
        %v908 = vsel %vm665, %v905, 0
        %v911 = vsel %vm669, %v906, 0
        %913 = vmatprep.subr.bf16.mxu0 0
        %914 = vmatpush1.bf16.msra.mxu0 %v911
        %915 = vmatprep.subr.bf16.mxu0 0
        %916 = vmatpush1.bf16.msra.mxu0 0
        %917 = vmatprep.subr.bf16.mxu0 0
        %918 = vmatpush1.bf16.msra.mxu0 0
        %919 = vmatprep.subr.bf16.mxu0 0
        %920 = vmatpush1.bf16.msra.mxu0 0
        %921 = vmatprep.subr.bf16.mxu0 0
        %922 = vmatpush1.bf16.msra.mxu0 0
        %923 = vmatprep.subr.bf16.mxu0 0
        %924 = vmatpush1.bf16.msra.mxu0 0
        %925 = vmatprep.subr.bf16.mxu0 0
        %926 = vmatpush1.bf16.msra.mxu0 0
        %927 = vmatprep.subr.bf16.mxu0 0
        %928 = vmatpush1.bf16.msra.mxu0 0
        %929 = vmatprep.subr.bf16.mxu0 0
        %930 = vmatpush1.bf16.msra.mxu0 0
        %931 = vmatprep.subr.bf16.mxu0 0
        %932 = vmatpush1.bf16.msra.mxu0 0
        %933 = vmatprep.subr.bf16.mxu0 0
        %934 = vmatpush1.bf16.msra.mxu0 0
        %935 = vmatprep.subr.bf16.mxu0 0
        %936 = vmatpush1.bf16.msra.mxu0 0
        %937 = vmatprep.subr.bf16.mxu0 0
        %938 = vmatpush1.bf16.msra.mxu0 0
        %939 = vmatprep.subr.bf16.mxu0 0
        %940 = vmatpush1.bf16.msra.mxu0 0
        %941 = vmatprep.subr.bf16.mxu0 0
        %942 = vmatpush1.bf16.msra.mxu0 0
        %943 = vmatprep.subr.bf16.mxu0 0
        %944 = vmatpush1.bf16.msra.mxu0 0
        %945 = vmatprep.mubr.bf16.mxu0 0
        %946 = vmatmul.mubr.bf16.gmra.mrb[0].mxu0 %v908
        %v947 = vpop.f32.mrb[0].mxu0
        %v948 = vadd.f32 0.0, %v947
        %v949 = vpop.f32.mrb[0].mxu0
        %v950 = vpop.f32.mrb[0].mxu0
        %v951 = vpop.f32.mrb[0].mxu0
        %952 = vdwg.mxu0
        %v953 = vpack.c.bf16 %v948, %v948
        %955 = vrot.lane.b32.xlu0 %v824, 96
        %v956 = vpop.permute.xlu0 %955
        %v958 = vmul.bf16 %v953, %v956
        %v959 = vld [vmem:[%s2] sm:$0x1]
        %v961 = vsel %vm665, %v959, 0
        %v964 = vsel %vm669, %v958, 0
        %966 = vmatprep.subr.bf16.mxu0 0
        %967 = vmatpush1.bf16.msra.mxu0 %v964
        %968 = vmatprep.subr.bf16.mxu0 0
        %969 = vmatpush1.bf16.msra.mxu0 0
        %970 = vmatprep.subr.bf16.mxu0 0
        %971 = vmatpush1.bf16.msra.mxu0 0
        %972 = vmatprep.subr.bf16.mxu0 0
        %973 = vmatpush1.bf16.msra.mxu0 0
        %974 = vmatprep.subr.bf16.mxu0 0
        %975 = vmatpush1.bf16.msra.mxu0 0
        %976 = vmatprep.subr.bf16.mxu0 0
        %977 = vmatpush1.bf16.msra.mxu0 0
        %978 = vmatprep.subr.bf16.mxu0 0
        %979 = vmatpush1.bf16.msra.mxu0 0
        %980 = vmatprep.subr.bf16.mxu0 0
        %981 = vmatpush1.bf16.msra.mxu0 0
        %982 = vmatprep.subr.bf16.mxu0 0
        %983 = vmatpush1.bf16.msra.mxu0 0
        %984 = vmatprep.subr.bf16.mxu0 0
        %985 = vmatpush1.bf16.msra.mxu0 0
        %986 = vmatprep.subr.bf16.mxu0 0
        %987 = vmatpush1.bf16.msra.mxu0 0
        %988 = vmatprep.subr.bf16.mxu0 0
        %989 = vmatpush1.bf16.msra.mxu0 0
        %990 = vmatprep.subr.bf16.mxu0 0
        %991 = vmatpush1.bf16.msra.mxu0 0
        %992 = vmatprep.subr.bf16.mxu0 0
        %993 = vmatpush1.bf16.msra.mxu0 0
        %994 = vmatprep.subr.bf16.mxu0 0
        %995 = vmatpush1.bf16.msra.mxu0 0
        %996 = vmatprep.subr.bf16.mxu0 0
        %997 = vmatpush1.bf16.msra.mxu0 0
        %998 = vmatprep.mubr.bf16.mxu0 0
        %999 = vmatmul.mubr.bf16.gmra.mrb[0].mxu0 %v961
        %v1000 = vpop.f32.mrb[0].mxu0
        %v1001 = vadd.f32 0.0, %v1000
        %v1002 = vpop.f32.mrb[0].mxu0
        %v1003 = vpop.f32.mrb[0].mxu0
        %v1004 = vpop.f32.mrb[0].mxu0
        %1005 = vdwg.mxu0
        %v1006 = vpack.c.bf16 %v1001, %v1001
        %v1007 = vld [vmem:[%s10] sm:$0xf]
        %v1008 = vld [vmem:[%s10 + $0x4] sm:$0xf]
        %v1009 = vld [vmem:[%s10 + $0x8] sm:$0xf]
        %v1010 = vld [vmem:[%s10 + $0xc] sm:$0xf]
        %v1011 = vld [vmem:[%s11] sm:$0x1]
        %v1016 = vunpack.c.l.b16 %v1007
        %v1017 = vunpack.c.l.b16 %v1008
        %v1018 = vunpack.c.l.b16 %v1009
        %v1019 = vunpack.c.l.b16 %v1010
        %v1020 = vpack.c.b16 %v1017, %v1016
        %v1021 = vpack.c.b16 %v1019, %v1018
        %v1025 = vsel %vm575, %v1006, 0
        %1027 = vmatprep.subr.bf16.mxu0 0
        %1028 = vmatpush1.bf16.msra.mxu0 %v1020
        %1029 = vmatprep.subr.bf16.mxu0 0
        %1030 = vmatpush1.bf16.msra.mxu0 %v1021
        %1031 = vmatprep.subr.bf16.mxu0 0
        %1032 = vmatpush1.bf16.msra.mxu0 0
        %1033 = vmatprep.subr.bf16.mxu0 0
        %1034 = vmatpush1.bf16.msra.mxu0 0
        %1035 = vmatprep.subr.bf16.mxu0 0
        %1036 = vmatpush1.bf16.msra.mxu0 0
        %1037 = vmatprep.subr.bf16.mxu0 0
        %1038 = vmatpush1.bf16.msra.mxu0 0
        %1039 = vmatprep.subr.bf16.mxu0 0
        %1040 = vmatpush1.bf16.msra.mxu0 0
        %1041 = vmatprep.subr.bf16.mxu0 0
        %1042 = vmatpush1.bf16.msra.mxu0 0
        %1043 = vmatprep.subr.bf16.mxu0 0
        %1044 = vmatpush1.bf16.msra.mxu0 0
        %1045 = vmatprep.subr.bf16.mxu0 0
        %1046 = vmatpush1.bf16.msra.mxu0 0
        %1047 = vmatprep.subr.bf16.mxu0 0
        %1048 = vmatpush1.bf16.msra.mxu0 0
        %1049 = vmatprep.subr.bf16.mxu0 0
        %1050 = vmatpush1.bf16.msra.mxu0 0
        %1051 = vmatprep.subr.bf16.mxu0 0
        %1052 = vmatpush1.bf16.msra.mxu0 0
        %1053 = vmatprep.subr.bf16.mxu0 0
        %1054 = vmatpush1.bf16.msra.mxu0 0
        %1055 = vmatprep.subr.bf16.mxu0 0
        %1056 = vmatpush1.bf16.msra.mxu0 0
        %1057 = vmatprep.subr.bf16.mxu0 0
        %1058 = vmatpush1.bf16.msra.mxu0 0
        %1059 = vmatprep.mubr.bf16.mxu0 0
        %1060 = vmatmul.mubr.bf16.gmra.mrb[0].mxu0 %v1025
        %v1061 = vpop.f32.mrb[0].mxu0
        %v1062 = vadd.f32 %v1011, %v1061
        %v1063 = vpop.f32.mrb[0].mxu0
        %v1064 = vpop.f32.mrb[0].mxu0
        %v1065 = vpop.f32.mrb[0].mxu0
        %1066 = vdwg.mxu0
        %v1067 = vpack.c.bf16 %v1062, %v1062
        %v1069 = vand.u32 %v1067, %v780
        %1071 = vmatprep.subr.bf16.mxu0 0
        %1072 = vmatpush1.bf16.msra.mxu0 %v1069
        %1073 = vmatprep.subr.bf16.mxu0 0
        %1074 = vmatpush1.bf16.msra.mxu0 0
        %1075 = vmatprep.subr.bf16.mxu0 0
        %1076 = vmatpush1.bf16.msra.mxu0 0
        %1077 = vmatprep.subr.bf16.mxu0 0
        %1078 = vmatpush1.bf16.msra.mxu0 0
        %1079 = vmatprep.subr.bf16.mxu0 0
        %1080 = vmatpush1.bf16.msra.mxu0 0
        %1081 = vmatprep.subr.bf16.mxu0 0
        %1082 = vmatpush1.bf16.msra.mxu0 0
        %1083 = vmatprep.subr.bf16.mxu0 0
        %1084 = vmatpush1.bf16.msra.mxu0 0
        %1085 = vmatprep.subr.bf16.mxu0 0
        %1086 = vmatpush1.bf16.msra.mxu0 0
        %1087 = vmatprep.subr.bf16.mxu0 0
        %1088 = vmatpush1.bf16.msra.mxu0 0
        %1089 = vmatprep.subr.bf16.mxu0 0
        %1090 = vmatpush1.bf16.msra.mxu0 0
        %1091 = vmatprep.subr.bf16.mxu0 0
        %1092 = vmatpush1.bf16.msra.mxu0 0
        %1093 = vmatprep.subr.bf16.mxu0 0
        %1094 = vmatpush1.bf16.msra.mxu0 0
        %1095 = vmatprep.subr.bf16.mxu0 0
        %1096 = vmatpush1.bf16.msra.mxu0 0
        %1097 = vmatprep.subr.bf16.mxu0 0
        %1098 = vmatpush1.bf16.msra.mxu0 0
        %1099 = vmatprep.subr.bf16.mxu0 0
        %1100 = vmatpush1.bf16.msra.mxu0 0
        %1101 = vmatprep.subr.bf16.mxu0 0
        %1102 = vmatpush1.bf16.msra.mxu0 0
        %1103 = vmatprep.mubr.bf16.mxu0 0
        %1104 = vmatmul.mubr.bf16.gmra.mrb[0].mxu0 %v776
        %v1105 = vpop.f32.mrb[0].mxu0
        %v1106 = vadd.f32 0.0, %v1105
        %v1107 = vpop.f32.mrb[0].mxu0
        %v1108 = vpop.f32.mrb[0].mxu0
        %v1109 = vpop.f32.mrb[0].mxu0
        %1110 = vdwg.mxu0
        %v1111 = vadd.f32 %v572, %v1106
        %v1112 = vld [vmem:[%s12] sm:$0x1]
        %v1113 = vld [vmem:[%s13] sm:$0x1]
        %v1114 = vsel %vm575, %v1111, 0.0
        %1115 = vadd.xlane.f32.xlu0 %v1114
        %v1116 = vpop.xlane.xlu0 %1115
        %v1117 = vmul.f32 %v1116, %v579
        %v1118 = vsub.f32 %v1111, %v1117
        %v1119 = vmul.f32 %v1118, %v1118
        %v1120 = vsel %vm575, %v1119, 0.0
        %1121 = vadd.xlane.f32.xlu0 %v1120
        %v1122 = vpop.xlane.xlu0 %1121
        %v1123 = vmul.f32 %v1122, %v579
        %v1124 = vadd.f32 %v1123, 1e-05
        %v1125 = vrsqrt.pop %v1124
        %v1126 = vmul.f32 %v1118, %v1125
        %v1128 = vlaneseq
        %v1129 = vshrl.u32 %v1128, 7
        %v1130 = vsub.s32 0, %v1129
        %v1131 = vrot.slane %v1112, %v1130
        %v1133 = vmul.f32 %v1126, %v1131
        %v1135 = vlaneseq
        %v1136 = vshrl.u32 %v1135, 7
        %v1137 = vsub.s32 0, %v1136
        %v1138 = vrot.slane %v1113, %v1137
        %v1140 = vadd.f32 %v1133, %v1138
        %v1141 = vpack.c.bf16 %v1140, %v1140
        %v1142 = vld [vmem:[%s14] sm:$0xf]
        %v1143 = vld [vmem:[%s14 + $0x4] sm:$0xf]
        %v1144 = vld [vmem:[%s14 + $0x8] sm:$0xf]
        %v1145 = vld [vmem:[%s14 + $0xc] sm:$0xf]
        %v1146 = vld [vmem:[%s15] sm:$0x1]
        %v1148 = vlaneseq
        %v1149 = vshrl.u32 %v1148, 7
        %v1150 = vsub.s32 0, %v1149
        %v1151 = vrot.slane %v1146, %v1150
        %v1157 = vunpack.c.l.b16 %v1142
        %v1158 = vunpack.c.l.b16 %v1143
        %v1159 = vunpack.c.l.b16 %v1144
        %v1160 = vunpack.c.l.b16 %v1145
        %v1161 = vpack.c.b16 %v1158, %v1157
        %v1162 = vpack.c.b16 %v1160, %v1159
        %v1166 = vsel %vm575, %v1141, 0
        %1168 = vmatprep.subr.bf16.mxu0 0
        %1169 = vmatpush1.bf16.msra.mxu0 %v1161
        %1170 = vmatprep.subr.bf16.mxu0 0
        %1171 = vmatpush1.bf16.msra.mxu0 %v1162
        %1172 = vmatprep.subr.bf16.mxu0 0
        %1173 = vmatpush1.bf16.msra.mxu0 0
        %1174 = vmatprep.subr.bf16.mxu0 0
        %1175 = vmatpush1.bf16.msra.mxu0 0
        %1176 = vmatprep.subr.bf16.mxu0 0
        %1177 = vmatpush1.bf16.msra.mxu0 0
        %1178 = vmatprep.subr.bf16.mxu0 0
        %1179 = vmatpush1.bf16.msra.mxu0 0
        %1180 = vmatprep.subr.bf16.mxu0 0
        %1181 = vmatpush1.bf16.msra.mxu0 0
        %1182 = vmatprep.subr.bf16.mxu0 0
        %1183 = vmatpush1.bf16.msra.mxu0 0
        %1184 = vmatprep.subr.bf16.mxu0 0
        %1185 = vmatpush1.bf16.msra.mxu0 0
        %1186 = vmatprep.subr.bf16.mxu0 0
        %1187 = vmatpush1.bf16.msra.mxu0 0
        %1188 = vmatprep.subr.bf16.mxu0 0
        %1189 = vmatpush1.bf16.msra.mxu0 0
        %1190 = vmatprep.subr.bf16.mxu0 0
        %1191 = vmatpush1.bf16.msra.mxu0 0
        %1192 = vmatprep.subr.bf16.mxu0 0
        %1193 = vmatpush1.bf16.msra.mxu0 0
        %1194 = vmatprep.subr.bf16.mxu0 0
        %1195 = vmatpush1.bf16.msra.mxu0 0
        %1196 = vmatprep.subr.bf16.mxu0 0
        %1197 = vmatpush1.bf16.msra.mxu0 0
        %1198 = vmatprep.subr.bf16.mxu0 0
        %1199 = vmatpush1.bf16.msra.mxu0 0
        %1200 = vmatprep.mubr.bf16.mxu0 0
        %1201 = vmatmul.mubr.bf16.gmra.mrb[0].mxu0 %v1166
        %v1202 = vpop.f32.mrb[0].mxu0
        %v1203 = vadd.f32 %v1151, %v1202
        %v1204 = vpop.f32.mrb[0].mxu0
        %v1205 = vpop.f32.mrb[0].mxu0
        %v1206 = vpop.f32.mrb[0].mxu0
        %1207 = vdwg.mxu0
        %v1208 = vmul.f32 %v1203, 0.5
        %v1209 = vmul.f32 %v1203, 0.70710677
        %vm1210 = vcmp.ge.f32.partialorder %v1209, 0.0
        %v1211 = vsel %vm1210, 1.0, -1.0
        %v1212 = vand.u32 2147483647, %v1209
        %v1213 = vmul.f32 %v1212, 0.3275911
        %v1214 = vadd.f32 %v1213, 1.0
        %v1215 = vrcp.pop %v1214
        %v1216 = vmul.f32 %v1215, 1.0614054
        %v1217 = vadd.f32 %v1216, -1.4531521
        %v1218 = vmul.f32 %v1217, %v1215
        %v1219 = vadd.f32 %v1218, 1.4214138
        %v1220 = vmul.f32 %v1219, %v1215
        %v1221 = vadd.f32 %v1220, -0.28449672
        %v1222 = vmul.f32 %v1221, %v1215
        %v1223 = vadd.f32 %v1222, 0.2548296
        %v1224 = vmul.f32 %v1223, %v1215
        %v1225 = vsub.f32 0.0, %v1212
        %v1226 = vmul.f32 %v1225, %v1212
        %v1227 = vmul.f32 %v1226, 1.442695
        %v1228 = vpow.pop %v1227
        %v1229 = vmul.f32 %v1224, %v1228
        %v1230 = vsub.f32 1.0, %v1229
        %v1231 = vmul.f32 %v1211, %v1230
        %v1232 = vadd.f32 %v1231, 1.0
        %v1233 = vmul.f32 %v1208, %v1232
        %v1234 = vpack.c.bf16 %v1233, %v1233
        %v1235 = vld [vmem:[%s16] sm:$0xf]
        %v1236 = vld [vmem:[%s16 + $0x4] sm:$0xf]
        %v1237 = vld [vmem:[%s16 + $0x8] sm:$0xf]
        %v1238 = vld [vmem:[%s16 + $0xc] sm:$0xf]
        %v1239 = vld [vmem:[%s16 + $0x10] sm:$0xf]
        %v1240 = vld [vmem:[%s16 + $0x14] sm:$0xf]
        %v1241 = vld [vmem:[%s16 + $0x18] sm:$0xf]
        %v1242 = vld [vmem:[%s16 + $0x1c] sm:$0xf]
        %v1243 = vld [vmem:[%s16 + $0x20] sm:$0xf]
        %v1244 = vld [vmem:[%s16 + $0x24] sm:$0xf]
        %v1245 = vld [vmem:[%s16 + $0x28] sm:$0xf]
        %v1246 = vld [vmem:[%s16 + $0x2c] sm:$0xf]
        %v1247 = vld [vmem:[%s16 + $0x30] sm:$0xf]
        %v1248 = vld [vmem:[%s16 + $0x34] sm:$0xf]
        %v1249 = vld [vmem:[%s16 + $0x38] sm:$0xf]
        %v1250 = vld [vmem:[%s16 + $0x3c] sm:$0xf]
        %v1251 = vld [vmem:[%s17] sm:$0x1]
        %v1253 = vlaneseq
        %v1254 = vshrl.u32 %v1253, 7
        %v1255 = vsub.s32 0, %v1254
        %v1256 = vrot.slane %v1251, %v1255
        %v1274 = vunpack.c.l.b16 %v1235
        %v1275 = vunpack.c.l.b16 %v1236
        %v1276 = vunpack.c.l.b16 %v1237
        %v1277 = vunpack.c.l.b16 %v1238
        %v1278 = vunpack.c.l.b16 %v1239
        %v1279 = vunpack.c.l.b16 %v1240
        %v1280 = vunpack.c.l.b16 %v1241
        %v1281 = vunpack.c.l.b16 %v1242
        %v1282 = vunpack.c.l.b16 %v1243
        %v1283 = vunpack.c.l.b16 %v1244
        %v1284 = vunpack.c.l.b16 %v1245
        %v1285 = vunpack.c.l.b16 %v1246
        %v1286 = vunpack.c.l.b16 %v1247
        %v1287 = vunpack.c.l.b16 %v1248
        %v1288 = vunpack.c.l.b16 %v1249
        %v1289 = vunpack.c.l.b16 %v1250
        %v1290 = vpack.c.b16 %v1275, %v1274
        %v1291 = vpack.c.b16 %v1277, %v1276
        %v1292 = vpack.c.b16 %v1279, %v1278
        %v1293 = vpack.c.b16 %v1281, %v1280
        %v1294 = vpack.c.b16 %v1283, %v1282
        %v1295 = vpack.c.b16 %v1285, %v1284
        %v1296 = vpack.c.b16 %v1287, %v1286
        %v1297 = vpack.c.b16 %v1289, %v1288
        %1306 = vmatprep.subr.bf16.mxu0 0
        %1307 = vmatpush1.bf16.msra.mxu0 %v1290
        %1308 = vmatprep.subr.bf16.mxu0 0
        %1309 = vmatpush1.bf16.msra.mxu0 %v1291
        %1310 = vmatprep.subr.bf16.mxu0 0
        %1311 = vmatpush1.bf16.msra.mxu0 %v1292
        %1312 = vmatprep.subr.bf16.mxu0 0
        %1313 = vmatpush1.bf16.msra.mxu0 %v1293
        %1314 = vmatprep.subr.bf16.mxu0 0
        %1315 = vmatpush1.bf16.msra.mxu0 %v1294
        %1316 = vmatprep.subr.bf16.mxu0 0
        %1317 = vmatpush1.bf16.msra.mxu0 %v1295
        %1318 = vmatprep.subr.bf16.mxu0 0
        %1319 = vmatpush1.bf16.msra.mxu0 %v1296
        %1320 = vmatprep.subr.bf16.mxu0 0
        %1321 = vmatpush1.bf16.msra.mxu0 %v1297
        %1322 = vmatprep.subr.bf16.mxu0 0
        %1323 = vmatpush1.bf16.msra.mxu0 0
        %1324 = vmatprep.subr.bf16.mxu0 0
        %1325 = vmatpush1.bf16.msra.mxu0 0
        %1326 = vmatprep.subr.bf16.mxu0 0
        %1327 = vmatpush1.bf16.msra.mxu0 0
        %1328 = vmatprep.subr.bf16.mxu0 0
        %1329 = vmatpush1.bf16.msra.mxu0 0
        %1330 = vmatprep.subr.bf16.mxu0 0
        %1331 = vmatpush1.bf16.msra.mxu0 0
        %1332 = vmatprep.subr.bf16.mxu0 0
        %1333 = vmatpush1.bf16.msra.mxu0 0
        %1334 = vmatprep.subr.bf16.mxu0 0
        %1335 = vmatpush1.bf16.msra.mxu0 0
        %1336 = vmatprep.subr.bf16.mxu0 0
        %1337 = vmatpush1.bf16.msra.mxu0 0
        %1338 = vmatprep.mubr.bf16.mxu0 0
        %1339 = vmatmul.mubr.bf16.gmra.mrb[0].mxu0 %v1234
        %v1340 = vpop.f32.mrb[0].mxu0
        %v1341 = vadd.f32 %v1256, %v1340
        %v1342 = vpop.f32.mrb[0].mxu0
        %v1343 = vpop.f32.mrb[0].mxu0
        %v1344 = vpop.f32.mrb[0].mxu0
        %1345 = vdwg.mxu0
        %v1346 = vadd.f32 %v1111, %v1341
        %1347 = vst.msk [vmem:[%s566] sm:$0xff] %vm575, %v1346
        %s1348 = sand.u32 %s423, 1
        %s1349 = scalar_lea.sflag [#allocation3], %s1348
        %s1350 = sand.u32 %s423, 1
        %s1351 = smul.addr %s1350, 8
        %s1352 = scalar_lea.vmem [#allocation2], %s1351
        // Predicated region
        $region93: #{tpu_custom_call.1} parent=91 // pred_check
          %p1353 = pneg %p433
        $region94: #{tpu_custom_call.1} parent=91 // pred_check_branch
          %1355 = sbr.rel (%p1353) target = $region96
        $region95: #{tpu_custom_call.1} parent=91 // pred_region
          %s1357 = ssub.s32 128, 128
          %1358 = vsyncadd %s1349, %s1357
          %s1359 = smul.addr %s32, 128
          %s1360 = scalar_lea.hbm %s18, %s1359
          %s1362 = sshll.u32 %s1352, 4
          %s1363 = int_to_ptr.vmem [resolvable:$true] %s1362
          %1365 = dma.vmem_to_hbm [thread:$0]  %s1363, 128, %s1360, %s1349
        $region96: #{tpu_custom_call.1} parent=91 // pred_fallthru
          _
      $region92: #{tpu_custom_call.1} parent=5 // pred_fallthru
        _
      %p1366 = scmp.le.s32.totalorder 2, %s27
      // Predicated region
      $region97: #{tpu_custom_call.1} parent=5 // pred_check
        %p1367 = pneg %p1366
      $region98: #{tpu_custom_call.1} parent=5 // pred_check_branch
        %1369 = sbr.rel (%p1367) target = $region100
      $region99: #{tpu_custom_call.1} parent=5 // pred_region
        %s1370 = ssub.s32 %s27, 2
        // Predicated region
        $region101: #{tpu_custom_call.1} parent=99 // pred_check
          %p1371 = pneg %p439
        $region102: #{tpu_custom_call.1} parent=99 // pred_check_branch
          %1373 = sbr.rel (%p1371) target = $region104
        $region103: #{tpu_custom_call.1} parent=99 // pred_region
          %s1374 = sand.u32 %s424, 1
          %s1375 = scalar_lea.sflag [#allocation3], %s1374
          %s1376 = sand.u32 %s424, 1
          %s1377 = smul.addr %s1376, 8
          %s1378 = scalar_lea.vmem [#allocation2], %s1377
          %1379 = dma.done %s1375, 128
        $region104: #{tpu_custom_call.1} parent=99 // pred_fallthru
          _
      $region100: #{tpu_custom_call.1} parent=5 // pred_fallthru
        _
    $region6: #{tpu_custom_call.1} parent=1 // loop_footer
      %s31 = sadd.s32 1, %s27
    $region7: #{tpu_custom_call.1} parent=1 // loop_footer_branch
      %26 = sbr.rel target = $region3
    $region8: #{tpu_custom_call.1} parent=1 // loop_exit
      _
    %1380 = vsyncpa [#allocation3], 1
    %s1381 = scalar_lea.sflag [#allocation3], 1
    %1382 = vsyncpa %s1381, 1

// kernel: tpu_custom_call.1
$region0: #{tpu_custom_call.1}
  #allocation0 [shape = 'u32[]', space=smem, size = 0x4, offset = 0x4, fixed_abs, tag = 'smem constant byte address 0x4 - core index']
  #allocation1 [shape = 'u32[144,128]{1,0:T(1,128)}', space=vmem, size = 0x12000, scoped, tag = 'internal scratch']
  %s0 = inlined_call_operand.vmem [shape: f32[16,32], index: 0, kind: input, shape index: {}]
  %s1 = inlined_call_operand.vmem [shape: bf16[1,8], index: 1, kind: input, shape index: {}]
  %s2 = inlined_call_operand.vmem [shape: bf16[1,8], index: 2, kind: input, shape index: {}]
  %s3 = inlined_call_operand.vmem [shape: bf16[8,1], index: 3, kind: input, shape index: {}]
  %s4 = inlined_call_operand.vmem [shape: bf16[32,8], index: 4, kind: input, shape index: {}]
  %s5 = inlined_call_operand.vmem [shape: bf16[8,32], index: 5, kind: input, shape index: {}]
  %s6 = inlined_call_operand.vmem [shape: f32[1,32], index: 6, kind: input, shape index: {}]
  %s7 = inlined_call_operand.vmem [shape: f32[1,32], index: 7, kind: input, shape index: {}]
  %s8 = inlined_call_operand.vmem [shape: bf16[32,32], index: 8, kind: input, shape index: {}]
  %s9 = inlined_call_operand.vmem [shape: bf16[32,64], index: 9, kind: input, shape index: {}]
  %s10 = inlined_call_operand.vmem [shape: bf16[32,32], index: 10, kind: input, shape index: {}]
  %s11 = inlined_call_operand.vmem [shape: f32[1,32], index: 11, kind: input, shape index: {}]
  %s12 = inlined_call_operand.vmem [shape: f32[1,32], index: 12, kind: input, shape index: {}]
  %s13 = inlined_call_operand.vmem [shape: f32[1,32], index: 13, kind: input, shape index: {}]
  %s14 = inlined_call_operand.vmem [shape: bf16[32,128], index: 14, kind: input, shape index: {}]
  %s15 = inlined_call_operand.vmem [shape: f32[1,128], index: 15, kind: input, shape index: {}]
  %s16 = inlined_call_operand.vmem [shape: bf16[128,32], index: 16, kind: input, shape index: {}]
  %s17 = inlined_call_operand.vmem [shape: f32[1,32], index: 17, kind: input, shape index: {}]
  %s18 = inlined_call_operand.hbm [shape: f32[16,32], index: 18, kind: output, shape index: {}]
  %s19 = sld [smem:[#allocation0]]
  $region105: #{tpu_custom_call.1} parent=0
    _
  %s21 = ssub.s32 1, %s19
  %s22 = scalar_select 0, %s21, %s19
  $region1: #{tpu_custom_call.1} parent=0
    #allocation2 [shape = 'u8[8192]{0}', space=vmem, size = 0x2000, scoped, tag = 'output window, operand 0']
    #allocation3 [shape = 's32[2]{0}', space=sflag, size = 0x8, scoped, tag = 'scoped memory for tpu_custom_call.1']
    %23 = vsyncpa [#allocation3], 0
    %s24 = scalar_lea.sflag [#allocation3], 1
    %25 = vsyncpa %s24, 0
    loop: start=0, step=1, limit=4
    $region2: #{tpu_custom_call.1} parent=1 // loop_pre_header
      _
    $region3: #{tpu_custom_call.1} parent=1 // loop_header
      %s27 = sphi 0, %s31
      %p28 = scmp.ge.s32.totalorder %s27, 4
      %s37 = sphi 0, %s39
      %s40 = sphi 0, %s37
      %s41 = sphi 0, %s40
      %s57 = sphi 0, %s41
      %s61 = sphi 0, %s61
      %s63 = sphi 0, %s61
      %s64 = sphi 0, %s63
      %s78 = sphi 0, %s64
      %s82 = sphi 0, %s82
      %s84 = sphi 0, %s82
      %s85 = sphi 0, %s84
      %s99 = sphi 0, %s85
      %s103 = sphi 0, %s103
      %s105 = sphi 0, %s103
      %s106 = sphi 0, %s105
      %s120 = sphi 0, %s106
      %s124 = sphi 0, %s124
      %s126 = sphi 0, %s124
      %s127 = sphi 0, %s126
      %s141 = sphi 0, %s127
      %s145 = sphi 0, %s145
      %s147 = sphi 0, %s145
      %s148 = sphi 0, %s147
      %s162 = sphi 0, %s148
      %s166 = sphi 0, %s166
      %s168 = sphi 0, %s166
      %s169 = sphi 0, %s168
      %s183 = sphi 0, %s169
      %s187 = sphi 0, %s187
      %s189 = sphi 0, %s187
      %s190 = sphi 0, %s189
      %s204 = sphi 0, %s190
      %s208 = sphi 0, %s208
      %s210 = sphi 0, %s208
      %s211 = sphi 0, %s210
      %s225 = sphi 0, %s211
      %s229 = sphi 0, %s229
      %s231 = sphi 0, %s229
      %s232 = sphi 0, %s231
      %s246 = sphi 0, %s232
      %s250 = sphi 0, %s250
      %s252 = sphi 0, %s250
      %s253 = sphi 0, %s252
      %s267 = sphi 0, %s253
      %s271 = sphi 0, %s271
      %s273 = sphi 0, %s271
      %s274 = sphi 0, %s273
      %s288 = sphi 0, %s274
      %s292 = sphi 0, %s292
      %s294 = sphi 0, %s292
      %s295 = sphi 0, %s294
      %s309 = sphi 0, %s295
      %s313 = sphi 0, %s313
      %s315 = sphi 0, %s313
      %s316 = sphi 0, %s315
      %s330 = sphi 0, %s316
      %s334 = sphi 0, %s334
      %s336 = sphi 0, %s334
      %s337 = sphi 0, %s336
      %s351 = sphi 0, %s337
      %s355 = sphi 0, %s355
      %s357 = sphi 0, %s355
      %s358 = sphi 0, %s357
      %s372 = sphi 0, %s358
      %s376 = sphi 0, %s376
      %s378 = sphi 0, %s376
      %s379 = sphi 0, %s378
      %s393 = sphi 0, %s379
      %s397 = sphi 0, %s397
      %s399 = sphi 0, %s397
      %s400 = sphi 0, %s399
      %s414 = sphi 0, %s400
      %s420 = sphi 0, %s422
      %s423 = sphi 0, %s420
      %s424 = sphi 0, %s423
      %s440 = sphi 0, %s424
    $region4: #{tpu_custom_call.1} parent=1 // loop_header_branch
      %30 = sbr.rel (%p28) target = $region8
    $region5: #{tpu_custom_call.1} parent=1 // loop_body
      %s32 = ssub.s32 %s27, 1
      %s33 = ssub.s32 %s27, 2
      %s34 = sadd.s32 %s27, 1
      %s35 = ssub.s32 %s27, %s34
      %p36 = scmp.eq.s32.totalorder %s35, 0
      %s38 = sadd.s32 %s37, 1
      %s39 = scalar_select %p36, %s37, %s38
      %p42 = pneg %p36
      %p43 = scmp.eq.s32.totalorder %s27, 1
      %p44 = por %p42, %p43
      %p45 = scmp.ne.s32.totalorder %s37, %s40
      %p46 = scmp.eq.s32.totalorder %s27, 0
      %p47 = por %p45, %p46
      %p48 = scmp.ne.s32.totalorder %s37, %s40
      %p49 = scmp.eq.s32.totalorder %s32, 1
      %p50 = por %p48, %p49
      %p51 = scmp.ne.s32.totalorder %s40, %s41
      %p52 = scmp.eq.s32.totalorder %s32, 0
      %p53 = por %p51, %p52
      %p54 = scmp.ne.s32.totalorder %s40, %s41
      %p55 = scmp.eq.s32.totalorder %s33, 1
      %p56 = por %p54, %p55
      %p58 = scmp.ne.s32.totalorder %s41, %s57
      %p59 = scmp.eq.s32.totalorder %s33, 0
      %p60 = por %p58, %p59
      %s62 = sadd.s32 %s61, 1
      %p65 = scmp.eq.s32.totalorder %s27, 1
      %p66 = scmp.ne.s32.totalorder %s61, %s63
      %p67 = scmp.eq.s32.totalorder %s27, 0
      %p68 = por %p66, %p67
      %p69 = scmp.ne.s32.totalorder %s61, %s63
      %p70 = scmp.eq.s32.totalorder %s32, 1
      %p71 = por %p69, %p70
      %p72 = scmp.ne.s32.totalorder %s63, %s64
      %p73 = scmp.eq.s32.totalorder %s32, 0
      %p74 = por %p72, %p73
      %p75 = scmp.ne.s32.totalorder %s63, %s64
      %p76 = scmp.eq.s32.totalorder %s33, 1
      %p77 = por %p75, %p76
      %p79 = scmp.ne.s32.totalorder %s64, %s78
      %p80 = scmp.eq.s32.totalorder %s33, 0
      %p81 = por %p79, %p80
      %s83 = sadd.s32 %s82, 1
      %p86 = scmp.eq.s32.totalorder %s27, 1
      %p87 = scmp.ne.s32.totalorder %s82, %s84
      %p88 = scmp.eq.s32.totalorder %s27, 0
      %p89 = por %p87, %p88
      %p90 = scmp.ne.s32.totalorder %s82, %s84
      %p91 = scmp.eq.s32.totalorder %s32, 1
      %p92 = por %p90, %p91
      %p93 = scmp.ne.s32.totalorder %s84, %s85
      %p94 = scmp.eq.s32.totalorder %s32, 0
      %p95 = por %p93, %p94
      %p96 = scmp.ne.s32.totalorder %s84, %s85
      %p97 = scmp.eq.s32.totalorder %s33, 1
      %p98 = por %p96, %p97
      %p100 = scmp.ne.s32.totalorder %s85, %s99
      %p101 = scmp.eq.s32.totalorder %s33, 0
      %p102 = por %p100, %p101
      %s104 = sadd.s32 %s103, 1
      %p107 = scmp.eq.s32.totalorder %s27, 1
      %p108 = scmp.ne.s32.totalorder %s103, %s105
      %p109 = scmp.eq.s32.totalorder %s27, 0
      %p110 = por %p108, %p109
      %p111 = scmp.ne.s32.totalorder %s103, %s105
      %p112 = scmp.eq.s32.totalorder %s32, 1
      %p113 = por %p111, %p112
      %p114 = scmp.ne.s32.totalorder %s105, %s106
      %p115 = scmp.eq.s32.totalorder %s32, 0
      %p116 = por %p114, %p115
      %p117 = scmp.ne.s32.totalorder %s105, %s106
      %p118 = scmp.eq.s32.totalorder %s33, 1
      %p119 = por %p117, %p118
      %p121 = scmp.ne.s32.totalorder %s106, %s120
      %p122 = scmp.eq.s32.totalorder %s33, 0
      %p123 = por %p121, %p122
      %s125 = sadd.s32 %s124, 1
      %p128 = scmp.eq.s32.totalorder %s27, 1
      %p129 = scmp.ne.s32.totalorder %s124, %s126
      %p130 = scmp.eq.s32.totalorder %s27, 0
      %p131 = por %p129, %p130
      %p132 = scmp.ne.s32.totalorder %s124, %s126
      %p133 = scmp.eq.s32.totalorder %s32, 1
      %p134 = por %p132, %p133
      %p135 = scmp.ne.s32.totalorder %s126, %s127
      %p136 = scmp.eq.s32.totalorder %s32, 0
      %p137 = por %p135, %p136
      %p138 = scmp.ne.s32.totalorder %s126, %s127
      %p139 = scmp.eq.s32.totalorder %s33, 1
      %p140 = por %p138, %p139
      %p142 = scmp.ne.s32.totalorder %s127, %s141
      %p143 = scmp.eq.s32.totalorder %s33, 0
      %p144 = por %p142, %p143
      %s146 = sadd.s32 %s145, 1
      %p149 = scmp.eq.s32.totalorder %s27, 1
      %p150 = scmp.ne.s32.totalorder %s145, %s147
      %p151 = scmp.eq.s32.totalorder %s27, 0
      %p152 = por %p150, %p151
      %p153 = scmp.ne.s32.totalorder %s145, %s147
      %p154 = scmp.eq.s32.totalorder %s32, 1
      %p155 = por %p153, %p154
      %p156 = scmp.ne.s32.totalorder %s147, %s148
      %p157 = scmp.eq.s32.totalorder %s32, 0
      %p158 = por %p156, %p157
      %p159 = scmp.ne.s32.totalorder %s147, %s148
      %p160 = scmp.eq.s32.totalorder %s33, 1
      %p161 = por %p159, %p160
      %p163 = scmp.ne.s32.totalorder %s148, %s162
      %p164 = scmp.eq.s32.totalorder %s33, 0
      %p165 = por %p163, %p164
      %s167 = sadd.s32 %s166, 1
      %p170 = scmp.eq.s32.totalorder %s27, 1
      %p171 = scmp.ne.s32.totalorder %s166, %s168
      %p172 = scmp.eq.s32.totalorder %s27, 0
      %p173 = por %p171, %p172
      %p174 = scmp.ne.s32.totalorder %s166, %s168
      %p175 = scmp.eq.s32.totalorder %s32, 1
      %p176 = por %p174, %p175
      %p177 = scmp.ne.s32.totalorder %s168, %s169
      %p178 = scmp.eq.s32.totalorder %s32, 0
      %p179 = por %p177, %p178
      %p180 = scmp.ne.s32.totalorder %s168, %s169
      %p181 = scmp.eq.s32.totalorder %s33, 1
      %p182 = por %p180, %p181
      %p184 = scmp.ne.s32.totalorder %s169, %s183
      %p185 = scmp.eq.s32.totalorder %s33, 0
      %p186 = por %p184, %p185
      %s188 = sadd.s32 %s187, 1
      %p191 = scmp.eq.s32.totalorder %s27, 1
      %p192 = scmp.ne.s32.totalorder %s187, %s189
      %p193 = scmp.eq.s32.totalorder %s27, 0
      %p194 = por %p192, %p193
      %p195 = scmp.ne.s32.totalorder %s187, %s189
      %p196 = scmp.eq.s32.totalorder %s32, 1
      %p197 = por %p195, %p196
      %p198 = scmp.ne.s32.totalorder %s189, %s190
      %p199 = scmp.eq.s32.totalorder %s32, 0
      %p200 = por %p198, %p199
      %p201 = scmp.ne.s32.totalorder %s189, %s190
      %p202 = scmp.eq.s32.totalorder %s33, 1
      %p203 = por %p201, %p202
      %p205 = scmp.ne.s32.totalorder %s190, %s204
      %p206 = scmp.eq.s32.totalorder %s33, 0
      %p207 = por %p205, %p206
      %s209 = sadd.s32 %s208, 1
      %p212 = scmp.eq.s32.totalorder %s27, 1
      %p213 = scmp.ne.s32.totalorder %s208, %s210
      %p214 = scmp.eq.s32.totalorder %s27, 0
      %p215 = por %p213, %p214
      %p216 = scmp.ne.s32.totalorder %s208, %s210
      %p217 = scmp.eq.s32.totalorder %s32, 1
      %p218 = por %p216, %p217
      %p219 = scmp.ne.s32.totalorder %s210, %s211
      %p220 = scmp.eq.s32.totalorder %s32, 0
      %p221 = por %p219, %p220
      %p222 = scmp.ne.s32.totalorder %s210, %s211
      %p223 = scmp.eq.s32.totalorder %s33, 1
      %p224 = por %p222, %p223
      %p226 = scmp.ne.s32.totalorder %s211, %s225
      %p227 = scmp.eq.s32.totalorder %s33, 0
      %p228 = por %p226, %p227
      %s230 = sadd.s32 %s229, 1
      %p233 = scmp.eq.s32.totalorder %s27, 1
      %p234 = scmp.ne.s32.totalorder %s229, %s231
      %p235 = scmp.eq.s32.totalorder %s27, 0
      %p236 = por %p234, %p235
      %p237 = scmp.ne.s32.totalorder %s229, %s231
      %p238 = scmp.eq.s32.totalorder %s32, 1
      %p239 = por %p237, %p238
      %p240 = scmp.ne.s32.totalorder %s231, %s232
      %p241 = scmp.eq.s32.totalorder %s32, 0
      %p242 = por %p240, %p241
      %p243 = scmp.ne.s32.totalorder %s231, %s232
      %p244 = scmp.eq.s32.totalorder %s33, 1
      %p245 = por %p243, %p244
      %p247 = scmp.ne.s32.totalorder %s232, %s246
      %p248 = scmp.eq.s32.totalorder %s33, 0
      %p249 = por %p247, %p248
      %s251 = sadd.s32 %s250, 1
      %p254 = scmp.eq.s32.totalorder %s27, 1
      %p255 = scmp.ne.s32.totalorder %s250, %s252
      %p256 = scmp.eq.s32.totalorder %s27, 0
      %p257 = por %p255, %p256
      %p258 = scmp.ne.s32.totalorder %s250, %s252
      %p259 = scmp.eq.s32.totalorder %s32, 1
      %p260 = por %p258, %p259
      %p261 = scmp.ne.s32.totalorder %s252, %s253
      %p262 = scmp.eq.s32.totalorder %s32, 0
      %p263 = por %p261, %p262
      %p264 = scmp.ne.s32.totalorder %s252, %s253
      %p265 = scmp.eq.s32.totalorder %s33, 1
      %p266 = por %p264, %p265
      %p268 = scmp.ne.s32.totalorder %s253, %s267
      %p269 = scmp.eq.s32.totalorder %s33, 0
      %p270 = por %p268, %p269
      %s272 = sadd.s32 %s271, 1
      %p275 = scmp.eq.s32.totalorder %s27, 1
      %p276 = scmp.ne.s32.totalorder %s271, %s273
      %p277 = scmp.eq.s32.totalorder %s27, 0
      %p278 = por %p276, %p277
      %p279 = scmp.ne.s32.totalorder %s271, %s273
      %p280 = scmp.eq.s32.totalorder %s32, 1
      %p281 = por %p279, %p280
      %p282 = scmp.ne.s32.totalorder %s273, %s274
      %p283 = scmp.eq.s32.totalorder %s32, 0
      %p284 = por %p282, %p283
      %p285 = scmp.ne.s32.totalorder %s273, %s274
      %p286 = scmp.eq.s32.totalorder %s33, 1
      %p287 = por %p285, %p286
      %p289 = scmp.ne.s32.totalorder %s274, %s288
      %p290 = scmp.eq.s32.totalorder %s33, 0
      %p291 = por %p289, %p290
      %s293 = sadd.s32 %s292, 1
      %p296 = scmp.eq.s32.totalorder %s27, 1
      %p297 = scmp.ne.s32.totalorder %s292, %s294
      %p298 = scmp.eq.s32.totalorder %s27, 0
      %p299 = por %p297, %p298
      %p300 = scmp.ne.s32.totalorder %s292, %s294
      %p301 = scmp.eq.s32.totalorder %s32, 1
      %p302 = por %p300, %p301
      %p303 = scmp.ne.s32.totalorder %s294, %s295
      %p304 = scmp.eq.s32.totalorder %s32, 0
      %p305 = por %p303, %p304
      %p306 = scmp.ne.s32.totalorder %s294, %s295
      %p307 = scmp.eq.s32.totalorder %s33, 1
      %p308 = por %p306, %p307
      %p310 = scmp.ne.s32.totalorder %s295, %s309
      %p311 = scmp.eq.s32.totalorder %s33, 0
      %p312 = por %p310, %p311
      %s314 = sadd.s32 %s313, 1
      %p317 = scmp.eq.s32.totalorder %s27, 1
      %p318 = scmp.ne.s32.totalorder %s313, %s315
      %p319 = scmp.eq.s32.totalorder %s27, 0
      %p320 = por %p318, %p319
      %p321 = scmp.ne.s32.totalorder %s313, %s315
      %p322 = scmp.eq.s32.totalorder %s32, 1
      %p323 = por %p321, %p322
      %p324 = scmp.ne.s32.totalorder %s315, %s316
      %p325 = scmp.eq.s32.totalorder %s32, 0
      %p326 = por %p324, %p325
      %p327 = scmp.ne.s32.totalorder %s315, %s316
      %p328 = scmp.eq.s32.totalorder %s33, 1
      %p329 = por %p327, %p328
      %p331 = scmp.ne.s32.totalorder %s316, %s330
      %p332 = scmp.eq.s32.totalorder %s33, 0
      %p333 = por %p331, %p332
      %s335 = sadd.s32 %s334, 1
      %p338 = scmp.eq.s32.totalorder %s27, 1
      %p339 = scmp.ne.s32.totalorder %s334, %s336
      %p340 = scmp.eq.s32.totalorder %s27, 0
      %p341 = por %p339, %p340
      %p342 = scmp.ne.s32.totalorder %s334, %s336
      %p343 = scmp.eq.s32.totalorder %s32, 1
      %p344 = por %p342, %p343
      %p345 = scmp.ne.s32.totalorder %s336, %s337
      %p346 = scmp.eq.s32.totalorder %s32, 0
      %p347 = por %p345, %p346
      %p348 = scmp.ne.s32.totalorder %s336, %s337
      %p349 = scmp.eq.s32.totalorder %s33, 1
      %p350 = por %p348, %p349
      %p352 = scmp.ne.s32.totalorder %s337, %s351
      %p353 = scmp.eq.s32.totalorder %s33, 0
      %p354 = por %p352, %p353
      %s356 = sadd.s32 %s355, 1
      %p359 = scmp.eq.s32.totalorder %s27, 1
      %p360 = scmp.ne.s32.totalorder %s355, %s357
      %p361 = scmp.eq.s32.totalorder %s27, 0
      %p362 = por %p360, %p361
      %p363 = scmp.ne.s32.totalorder %s355, %s357
      %p364 = scmp.eq.s32.totalorder %s32, 1
      %p365 = por %p363, %p364
      %p366 = scmp.ne.s32.totalorder %s357, %s358
      %p367 = scmp.eq.s32.totalorder %s32, 0
      %p368 = por %p366, %p367
      %p369 = scmp.ne.s32.totalorder %s357, %s358
      %p370 = scmp.eq.s32.totalorder %s33, 1
      %p371 = por %p369, %p370
      %p373 = scmp.ne.s32.totalorder %s358, %s372
      %p374 = scmp.eq.s32.totalorder %s33, 0
      %p375 = por %p373, %p374
      %s377 = sadd.s32 %s376, 1
      %p380 = scmp.eq.s32.totalorder %s27, 1
      %p381 = scmp.ne.s32.totalorder %s376, %s378
      %p382 = scmp.eq.s32.totalorder %s27, 0
      %p383 = por %p381, %p382
      %p384 = scmp.ne.s32.totalorder %s376, %s378
      %p385 = scmp.eq.s32.totalorder %s32, 1
      %p386 = por %p384, %p385
      %p387 = scmp.ne.s32.totalorder %s378, %s379
      %p388 = scmp.eq.s32.totalorder %s32, 0
      %p389 = por %p387, %p388
      %p390 = scmp.ne.s32.totalorder %s378, %s379
      %p391 = scmp.eq.s32.totalorder %s33, 1
      %p392 = por %p390, %p391
      %p394 = scmp.ne.s32.totalorder %s379, %s393
      %p395 = scmp.eq.s32.totalorder %s33, 0
      %p396 = por %p394, %p395
      %s398 = sadd.s32 %s397, 1
      %p401 = scmp.eq.s32.totalorder %s27, 1
      %p402 = scmp.ne.s32.totalorder %s397, %s399
      %p403 = scmp.eq.s32.totalorder %s27, 0
      %p404 = por %p402, %p403
      %p405 = scmp.ne.s32.totalorder %s397, %s399
      %p406 = scmp.eq.s32.totalorder %s32, 1
      %p407 = por %p405, %p406
      %p408 = scmp.ne.s32.totalorder %s399, %s400
      %p409 = scmp.eq.s32.totalorder %s32, 0
      %p410 = por %p408, %p409
      %p411 = scmp.ne.s32.totalorder %s399, %s400
      %p412 = scmp.eq.s32.totalorder %s33, 1
      %p413 = por %p411, %p412
      %p415 = scmp.ne.s32.totalorder %s400, %s414
      %p416 = scmp.eq.s32.totalorder %s33, 0
      %p417 = por %p415, %p416
      %s418 = ssub.s32 %s27, %s34
      %p419 = scmp.eq.s32.totalorder %s418, 0
      %s421 = sadd.s32 %s420, 1
      %s422 = scalar_select %p419, %s420, %s421
      %p425 = pneg %p419
      %p426 = scmp.eq.s32.totalorder %s27, 1
      %p427 = por %p425, %p426
      %p428 = scmp.ne.s32.totalorder %s420, %s423
      %p429 = scmp.eq.s32.totalorder %s27, 0
      %p430 = por %p428, %p429
      %p431 = scmp.ne.s32.totalorder %s420, %s423
      %p432 = scmp.eq.s32.totalorder %s32, 1
      %p433 = por %p431, %p432
      %p434 = scmp.ne.s32.totalorder %s423, %s424
      %p435 = scmp.eq.s32.totalorder %s32, 0
      %p436 = por %p434, %p435
      %p437 = scmp.ne.s32.totalorder %s423, %s424
      %p438 = scmp.eq.s32.totalorder %s33, 1
      %p439 = por %p437, %p438
      %p441 = scmp.ne.s32.totalorder %s424, %s440
      %p442 = scmp.eq.s32.totalorder %s33, 0
      %p443 = por %p441, %p442
      %p444 = scmp.le.s32.totalorder 1, %s27
      %p445 = scmp.lt.s32.totalorder %s27, 3
      %p446 = pnand %p444, %p445
      %p447 = pneg %p446
      // Predicated region
      $region9: #{tpu_custom_call.1} parent=5 // pred_check
        _
      $region10: #{tpu_custom_call.1} parent=5 // pred_check_branch
        %449 = sbr.rel (%p446) target = $region12
      $region11: #{tpu_custom_call.1} parent=5 // pred_region
        %s450 = ssub.s32 %s27, 1
        // Predicated region
        $region13: #{tpu_custom_call.1} parent=11 // pred_check
          %p451 = pneg %p74
        $region14: #{tpu_custom_call.1} parent=11 // pred_check_branch
          %453 = sbr.rel (%p451) target = $region16
        $region15: #{tpu_custom_call.1} parent=11 // pred_region
          _
        $region16: #{tpu_custom_call.1} parent=11 // pred_fallthru
          _
        // Predicated region
        $region17: #{tpu_custom_call.1} parent=11 // pred_check
          %p454 = pneg %p95
        $region18: #{tpu_custom_call.1} parent=11 // pred_check_branch
          %456 = sbr.rel (%p454) target = $region20
        $region19: #{tpu_custom_call.1} parent=11 // pred_region
          _
        $region20: #{tpu_custom_call.1} parent=11 // pred_fallthru
          _
        // Predicated region
        $region21: #{tpu_custom_call.1} parent=11 // pred_check
          %p457 = pneg %p116
        $region22: #{tpu_custom_call.1} parent=11 // pred_check_branch
          %459 = sbr.rel (%p457) target = $region24
        $region23: #{tpu_custom_call.1} parent=11 // pred_region
          _
        $region24: #{tpu_custom_call.1} parent=11 // pred_fallthru
          _
        // Predicated region
        $region25: #{tpu_custom_call.1} parent=11 // pred_check
          %p460 = pneg %p137
        $region26: #{tpu_custom_call.1} parent=11 // pred_check_branch
          %462 = sbr.rel (%p460) target = $region28
        $region27: #{tpu_custom_call.1} parent=11 // pred_region
          _
        $region28: #{tpu_custom_call.1} parent=11 // pred_fallthru
          _
        // Predicated region
        $region29: #{tpu_custom_call.1} parent=11 // pred_check
          %p463 = pneg %p158
        $region30: #{tpu_custom_call.1} parent=11 // pred_check_branch
          %465 = sbr.rel (%p463) target = $region32
        $region31: #{tpu_custom_call.1} parent=11 // pred_region
          _
        $region32: #{tpu_custom_call.1} parent=11 // pred_fallthru
          _
        // Predicated region
        $region33: #{tpu_custom_call.1} parent=11 // pred_check
          %p466 = pneg %p179
        $region34: #{tpu_custom_call.1} parent=11 // pred_check_branch
          %468 = sbr.rel (%p466) target = $region36
        $region35: #{tpu_custom_call.1} parent=11 // pred_region
          _
        $region36: #{tpu_custom_call.1} parent=11 // pred_fallthru
          _
        // Predicated region
        $region37: #{tpu_custom_call.1} parent=11 // pred_check
          %p469 = pneg %p200
        $region38: #{tpu_custom_call.1} parent=11 // pred_check_branch
          %471 = sbr.rel (%p469) target = $region40
        $region39: #{tpu_custom_call.1} parent=11 // pred_region
          _
        $region40: #{tpu_custom_call.1} parent=11 // pred_fallthru
          _
        // Predicated region
        $region41: #{tpu_custom_call.1} parent=11 // pred_check
          %p472 = pneg %p221
        $region42: #{tpu_custom_call.1} parent=11 // pred_check_branch
          %474 = sbr.rel (%p472) target = $region44
        $region43: #{tpu_custom_call.1} parent=11 // pred_region
          _
        $region44: #{tpu_custom_call.1} parent=11 // pred_fallthru
          _
        // Predicated region
        $region45: #{tpu_custom_call.1} parent=11 // pred_check
          %p475 = pneg %p242
        $region46: #{tpu_custom_call.1} parent=11 // pred_check_branch
          %477 = sbr.rel (%p475) target = $region48
        $region47: #{tpu_custom_call.1} parent=11 // pred_region
          _
        $region48: #{tpu_custom_call.1} parent=11 // pred_fallthru
          _
        // Predicated region
        $region49: #{tpu_custom_call.1} parent=11 // pred_check
          %p478 = pneg %p263
        $region50: #{tpu_custom_call.1} parent=11 // pred_check_branch
          %480 = sbr.rel (%p478) target = $region52
        $region51: #{tpu_custom_call.1} parent=11 // pred_region
          _
        $region52: #{tpu_custom_call.1} parent=11 // pred_fallthru
          _
        // Predicated region
        $region53: #{tpu_custom_call.1} parent=11 // pred_check
          %p481 = pneg %p284
        $region54: #{tpu_custom_call.1} parent=11 // pred_check_branch
          %483 = sbr.rel (%p481) target = $region56
        $region55: #{tpu_custom_call.1} parent=11 // pred_region
          _
        $region56: #{tpu_custom_call.1} parent=11 // pred_fallthru
          _
        // Predicated region
        $region57: #{tpu_custom_call.1} parent=11 // pred_check
          %p484 = pneg %p305
        $region58: #{tpu_custom_call.1} parent=11 // pred_check_branch
          %486 = sbr.rel (%p484) target = $region60
        $region59: #{tpu_custom_call.1} parent=11 // pred_region
          _
        $region60: #{tpu_custom_call.1} parent=11 // pred_fallthru
          _
        // Predicated region
        $region61: #{tpu_custom_call.1} parent=11 // pred_check
          %p487 = pneg %p326
        $region62: #{tpu_custom_call.1} parent=11 // pred_check_branch
          %489 = sbr.rel (%p487) target = $region64
        $region63: #{tpu_custom_call.1} parent=11 // pred_region
          _
        $region64: #{tpu_custom_call.1} parent=11 // pred_fallthru
          _
        // Predicated region
        $region65: #{tpu_custom_call.1} parent=11 // pred_check
          %p490 = pneg %p347
        $region66: #{tpu_custom_call.1} parent=11 // pred_check_branch
          %492 = sbr.rel (%p490) target = $region68
        $region67: #{tpu_custom_call.1} parent=11 // pred_region
          _
        $region68: #{tpu_custom_call.1} parent=11 // pred_fallthru
          _
        // Predicated region
        $region69: #{tpu_custom_call.1} parent=11 // pred_check
          %p493 = pneg %p368
        $region70: #{tpu_custom_call.1} parent=11 // pred_check_branch
          %495 = sbr.rel (%p493) target = $region72
        $region71: #{tpu_custom_call.1} parent=11 // pred_region
          _
        $region72: #{tpu_custom_call.1} parent=11 // pred_fallthru
          _
        // Predicated region
        $region73: #{tpu_custom_call.1} parent=11 // pred_check
          %p496 = pneg %p389
        $region74: #{tpu_custom_call.1} parent=11 // pred_check_branch
          %498 = sbr.rel (%p496) target = $region76
        $region75: #{tpu_custom_call.1} parent=11 // pred_region
          _
        $region76: #{tpu_custom_call.1} parent=11 // pred_fallthru
          _
        // Predicated region
        $region77: #{tpu_custom_call.1} parent=11 // pred_check
          %p499 = pneg %p410
        $region78: #{tpu_custom_call.1} parent=11 // pred_check_branch
          %501 = sbr.rel (%p499) target = $region80
        $region79: #{tpu_custom_call.1} parent=11 // pred_region
          _
        $region80: #{tpu_custom_call.1} parent=11 // pred_fallthru
          _
      $region12: #{tpu_custom_call.1} parent=5 // pred_fallthru
        _
      %p502 = scmp.lt.s32.totalorder %s27, 2
      // Predicated region
      $region81: #{tpu_custom_call.1} parent=5 // pred_check
        %p503 = pneg %p502
      $region82: #{tpu_custom_call.1} parent=5 // pred_check_branch
        %505 = sbr.rel (%p503) target = $region84
      $region83: #{tpu_custom_call.1} parent=5 // pred_region
        // Predicated region
        $region85: #{tpu_custom_call.1} parent=83 // pred_check
          %p506 = pneg %p47
        $region86: #{tpu_custom_call.1} parent=83 // pred_check_branch
          %508 = sbr.rel (%p506) target = $region88
        $region87: #{tpu_custom_call.1} parent=83 // pred_region
          %p509 = scmp.lt.s32.totalorder %s27, 1
          %s510 = scalar_select %p509, %s27, 1
          %s511 = smul.addr %s510, 8
          %s512 = scalar_lea.vmem %s0, %s511
        $region88: #{tpu_custom_call.1} parent=83 // pred_fallthru
          _
      $region84: #{tpu_custom_call.1} parent=5 // pred_fallthru
        _
      %p513 = scmp.le.s32.totalorder 1, %s27
      %p514 = scmp.lt.s32.totalorder %s27, 3
      %p515 = pnand %p513, %p514
      %p516 = pneg %p515
      // Predicated region
      $region89: #{tpu_custom_call.1} parent=5 // pred_check
        _
      $region90: #{tpu_custom_call.1} parent=5 // pred_check_branch
        %518 = sbr.rel (%p515) target = $region92
      $region91: #{tpu_custom_call.1} parent=5 // pred_region
        %s519 = ssub.s32 %s27, 1
        %p520 = scmp.lt.s32.totalorder %s32, 1
        %s521 = scalar_select %p520, %s32, 1
        %s522 = smul.addr %s521, 8
        %s523 = scalar_lea.vmem %s0, %s522
        %p524 = pneg %p53
        %p525 = pneg %p50
        %p526 = pneg %p74
        %p527 = pneg %p71
        %p528 = pneg %p95
        %p529 = pneg %p92
        %p530 = pneg %p116
        %p531 = pneg %p113
        %p532 = pneg %p137
        %p533 = pneg %p134
        %p534 = pneg %p158
        %p535 = pneg %p155
        %p536 = pneg %p179
        %p537 = pneg %p176
        %p538 = pneg %p200
        %p539 = pneg %p197
        %p540 = pneg %p221
        %p541 = pneg %p218
        %p542 = pneg %p242
        %p543 = pneg %p239
        %p544 = pneg %p263
        %p545 = pneg %p260
        %p546 = pneg %p284
        %p547 = pneg %p281
        %p548 = pneg %p305
        %p549 = pneg %p302
        %p550 = pneg %p326
        %p551 = pneg %p323
        %p552 = pneg %p347
        %p553 = pneg %p344
        %p554 = pneg %p368
        %p555 = pneg %p365
        %p556 = pneg %p389
        %p557 = pneg %p386
        %p558 = pneg %p410
        %p559 = pneg %p407
        %p560 = pneg %p436
        %p561 = pneg %p433
        %s562 = sand.u32 %s423, 1
        %s563 = scalar_lea.sflag [#allocation3], %s562
        %s564 = sand.u32 %s423, 1
        %s565 = smul.addr %s564, 8
        %s566 = scalar_lea.vmem [#allocation2], %s565
        %p567 = scmp.lt.s32.totalorder %s32, 1
        %s568 = scalar_select %p567, %s32, 1
        %s569 = smul.addr %s568, 8
        %s570 = scalar_lea.vmem %s0, %s569
        %v572 = vld [vmem:[%s570] sm:$0xff]
        %v573 = vld [vmem:[%s6] sm:$0x1]
        %v574 = vld [vmem:[%s7] sm:$0x1]
        %vm575 = vcmask 261120
        %v576 = vsel %vm575, %v572, 0.0
        %577 = vadd.xlane.f32.xlu0 %v576
        %v578 = vpop.xlane.xlu0 %577
        %v579 = vrcp.pop 32.0
        %v580 = vmul.f32 %v578, %v579
        %v581 = vsub.f32 %v572, %v580
        %v582 = vmul.f32 %v581, %v581
        %v583 = vsel %vm575, %v582, 0.0
        %584 = vadd.xlane.f32.xlu0 %v583
        %v585 = vpop.xlane.xlu0 %584
        %v586 = vmul.f32 %v585, %v579
        %v587 = vadd.f32 %v586, 1e-05
        %v588 = vrsqrt.pop %v587
        %v589 = vmul.f32 %v581, %v588
        %v591 = vlaneseq
        %v592 = vshrl.u32 %v591, 7
        %v593 = vsub.s32 0, %v592
        %v594 = vrot.slane %v573, %v593
        %v596 = vmul.f32 %v589, %v594
        %v598 = vlaneseq
        %v599 = vshrl.u32 %v598, 7
        %v600 = vsub.s32 0, %v599
        %v601 = vrot.slane %v574, %v600
        %v603 = vadd.f32 %v596, %v601
        %v604 = vpack.c.bf16 %v603, %v603
        %v605 = vld [vmem:[%s9] sm:$0xf]
        %v606 = vld [vmem:[%s9 + $0x4] sm:$0xf]
        %v607 = vld [vmem:[%s9 + $0x8] sm:$0xf]
        %v608 = vld [vmem:[%s9 + $0xc] sm:$0xf]
        %v613 = vunpack.c.l.b16 %v605
        %v614 = vunpack.c.l.b16 %v606
        %v615 = vunpack.c.l.b16 %v607
        %v616 = vunpack.c.l.b16 %v608
        %v617 = vpack.c.b16 %v614, %v613
        %v618 = vpack.c.b16 %v616, %v615
        %v622 = vsel %vm575, %v604, 0
        %624 = vmatprep.subr.bf16.mxu0 0
        %625 = vmatpush1.bf16.msra.mxu0 %v617
        %626 = vmatprep.subr.bf16.mxu0 0
        %627 = vmatpush1.bf16.msra.mxu0 %v618
        %628 = vmatprep.subr.bf16.mxu0 0
        %629 = vmatpush1.bf16.msra.mxu0 0
        %630 = vmatprep.subr.bf16.mxu0 0
        %631 = vmatpush1.bf16.msra.mxu0 0
        %632 = vmatprep.subr.bf16.mxu0 0
        %633 = vmatpush1.bf16.msra.mxu0 0
        %634 = vmatprep.subr.bf16.mxu0 0
        %635 = vmatpush1.bf16.msra.mxu0 0
        %636 = vmatprep.subr.bf16.mxu0 0
        %637 = vmatpush1.bf16.msra.mxu0 0
        %638 = vmatprep.subr.bf16.mxu0 0
        %639 = vmatpush1.bf16.msra.mxu0 0
        %640 = vmatprep.subr.bf16.mxu0 0
        %641 = vmatpush1.bf16.msra.mxu0 0
        %642 = vmatprep.subr.bf16.mxu0 0
        %643 = vmatpush1.bf16.msra.mxu0 0
        %644 = vmatprep.subr.bf16.mxu0 0
        %645 = vmatpush1.bf16.msra.mxu0 0
        %646 = vmatprep.subr.bf16.mxu0 0
        %647 = vmatpush1.bf16.msra.mxu0 0
        %648 = vmatprep.subr.bf16.mxu0 0
        %649 = vmatpush1.bf16.msra.mxu0 0
        %650 = vmatprep.subr.bf16.mxu0 0
        %651 = vmatpush1.bf16.msra.mxu0 0
        %652 = vmatprep.subr.bf16.mxu0 0
        %653 = vmatpush1.bf16.msra.mxu0 0
        %654 = vmatprep.subr.bf16.mxu0 0
        %655 = vmatpush1.bf16.msra.mxu0 0
        %656 = vmatprep.mubr.bf16.mxu0 0
        %657 = vmatmul.mubr.bf16.gmra.mrb[0].mxu0 %v622
        %v658 = vpop.f32.mrb[0].mxu0
        %v659 = vadd.f32 0.0, %v658
        %v660 = vpop.f32.mrb[0].mxu0
        %v661 = vpop.f32.mrb[0].mxu0
        %v662 = vpop.f32.mrb[0].mxu0
        %663 = vdwg.mxu0
        %v664 = vld [vmem:[%s1] sm:$0x1]
        %vm665 = vcmask 64512
        %v667 = vsel %vm665, %v664, 0
        %vm669 = vcmask 1043456
        %v670 = vsel %vm669, %v604, 0
        %672 = vmatprep.subr.bf16.mxu0 0
        %673 = vmatpush1.bf16.msra.mxu0 %v670
        %674 = vmatprep.subr.bf16.mxu0 0
        %675 = vmatpush1.bf16.msra.mxu0 0
        %676 = vmatprep.subr.bf16.mxu0 0
        %677 = vmatpush1.bf16.msra.mxu0 0
        %678 = vmatprep.subr.bf16.mxu0 0
        %679 = vmatpush1.bf16.msra.mxu0 0
        %680 = vmatprep.subr.bf16.mxu0 0
        %681 = vmatpush1.bf16.msra.mxu0 0
        %682 = vmatprep.subr.bf16.mxu0 0
        %683 = vmatpush1.bf16.msra.mxu0 0
        %684 = vmatprep.subr.bf16.mxu0 0
        %685 = vmatpush1.bf16.msra.mxu0 0
        %686 = vmatprep.subr.bf16.mxu0 0
        %687 = vmatpush1.bf16.msra.mxu0 0
        %688 = vmatprep.subr.bf16.mxu0 0
        %689 = vmatpush1.bf16.msra.mxu0 0
        %690 = vmatprep.subr.bf16.mxu0 0
        %691 = vmatpush1.bf16.msra.mxu0 0
        %692 = vmatprep.subr.bf16.mxu0 0
        %693 = vmatpush1.bf16.msra.mxu0 0
        %694 = vmatprep.subr.bf16.mxu0 0
        %695 = vmatpush1.bf16.msra.mxu0 0
        %696 = vmatprep.subr.bf16.mxu0 0
        %697 = vmatpush1.bf16.msra.mxu0 0
        %698 = vmatprep.subr.bf16.mxu0 0
        %699 = vmatpush1.bf16.msra.mxu0 0
        %700 = vmatprep.subr.bf16.mxu0 0
        %701 = vmatpush1.bf16.msra.mxu0 0
        %702 = vmatprep.subr.bf16.mxu0 0
        %703 = vmatpush1.bf16.msra.mxu0 0
        %704 = vmatprep.mubr.bf16.mxu0 0
        %705 = vmatmul.mubr.bf16.gmra.mrb[0].mxu0 %v667
        %v706 = vpop.f32.mrb[0].mxu0
        %v707 = vadd.f32 0.0, %v706
        %v708 = vpop.f32.mrb[0].mxu0
        %v709 = vpop.f32.mrb[0].mxu0
        %v710 = vpop.f32.mrb[0].mxu0
        %711 = vdwg.mxu0
        %v712 = vpack.c.bf16 %v707, %v707
        %v713 = vld [vmem:[%s8] sm:$0xf]
        %v714 = vld [vmem:[%s8 + $0x4] sm:$0xf]
        %v715 = vld [vmem:[%s8 + $0x8] sm:$0xf]
        %v716 = vld [vmem:[%s8 + $0xc] sm:$0xf]
        %v721 = vunpack.c.l.b16 %v713
        %v722 = vunpack.c.l.b16 %v714
        %v723 = vunpack.c.l.b16 %v715
        %v724 = vunpack.c.l.b16 %v716
        %v725 = vpack.c.b16 %v722, %v721
        %v726 = vpack.c.b16 %v724, %v723
        %v730 = vsel %vm575, %v712, 0
        %732 = vmatprep.subr.bf16.mxu0 0
        %733 = vmatpush1.bf16.msra.mxu0 %v725
        %734 = vmatprep.subr.bf16.mxu0 0
        %735 = vmatpush1.bf16.msra.mxu0 %v726
        %736 = vmatprep.subr.bf16.mxu0 0
        %737 = vmatpush1.bf16.msra.mxu0 0
        %738 = vmatprep.subr.bf16.mxu0 0
        %739 = vmatpush1.bf16.msra.mxu0 0
        %740 = vmatprep.subr.bf16.mxu0 0
        %741 = vmatpush1.bf16.msra.mxu0 0
        %742 = vmatprep.subr.bf16.mxu0 0
        %743 = vmatpush1.bf16.msra.mxu0 0
        %744 = vmatprep.subr.bf16.mxu0 0
        %745 = vmatpush1.bf16.msra.mxu0 0
        %746 = vmatprep.subr.bf16.mxu0 0
        %747 = vmatpush1.bf16.msra.mxu0 0
        %748 = vmatprep.subr.bf16.mxu0 0
        %749 = vmatpush1.bf16.msra.mxu0 0
        %750 = vmatprep.subr.bf16.mxu0 0
        %751 = vmatpush1.bf16.msra.mxu0 0
        %752 = vmatprep.subr.bf16.mxu0 0
        %753 = vmatpush1.bf16.msra.mxu0 0
        %754 = vmatprep.subr.bf16.mxu0 0
        %755 = vmatpush1.bf16.msra.mxu0 0
        %756 = vmatprep.subr.bf16.mxu0 0
        %757 = vmatpush1.bf16.msra.mxu0 0
        %758 = vmatprep.subr.bf16.mxu0 0
        %759 = vmatpush1.bf16.msra.mxu0 0
        %760 = vmatprep.subr.bf16.mxu0 0
        %761 = vmatpush1.bf16.msra.mxu0 0
        %762 = vmatprep.subr.bf16.mxu0 0
        %763 = vmatpush1.bf16.msra.mxu0 0
        %764 = vmatprep.mubr.bf16.mxu0 0
        %765 = vmatmul.mubr.bf16.gmra.mrb[0].mxu0 %v730
        %v766 = vpop.f32.mrb[0].mxu0
        %v767 = vadd.f32 0.0, %v766
        %v768 = vpop.f32.mrb[0].mxu0
        %v769 = vpop.f32.mrb[0].mxu0
        %v770 = vpop.f32.mrb[0].mxu0
        %771 = vdwg.mxu0
        %v772 = vld [vmem:[%s3] sm:$0xf]
        %v773 = vpack.c.bf16 %v767, %v767
        %vm774 = vcmask 7168
        %v776 = vsel %vm774, %v772, 0
        %vm778 = vcmask 1040384
        %v779 = vsel 0, 4294967295, 65535
        %v780 = vsel %vm778, %v779, 0
        %v782 = vand.u32 %v773, %v780
        %784 = vmatprep.subr.bf16.mxu0 0
        %785 = vmatpush1.bf16.msra.mxu0 %v782
        %786 = vmatprep.subr.bf16.mxu0 0
        %787 = vmatpush1.bf16.msra.mxu0 0
        %788 = vmatprep.subr.bf16.mxu0 0
        %789 = vmatpush1.bf16.msra.mxu0 0
        %790 = vmatprep.subr.bf16.mxu0 0
        %791 = vmatpush1.bf16.msra.mxu0 0
        %792 = vmatprep.subr.bf16.mxu0 0
        %793 = vmatpush1.bf16.msra.mxu0 0
        %794 = vmatprep.subr.bf16.mxu0 0
        %795 = vmatpush1.bf16.msra.mxu0 0
        %796 = vmatprep.subr.bf16.mxu0 0
        %797 = vmatpush1.bf16.msra.mxu0 0
        %798 = vmatprep.subr.bf16.mxu0 0
        %799 = vmatpush1.bf16.msra.mxu0 0
        %800 = vmatprep.subr.bf16.mxu0 0
        %801 = vmatpush1.bf16.msra.mxu0 0
        %802 = vmatprep.subr.bf16.mxu0 0
        %803 = vmatpush1.bf16.msra.mxu0 0
        %804 = vmatprep.subr.bf16.mxu0 0
        %805 = vmatpush1.bf16.msra.mxu0 0
        %806 = vmatprep.subr.bf16.mxu0 0
        %807 = vmatpush1.bf16.msra.mxu0 0
        %808 = vmatprep.subr.bf16.mxu0 0
        %809 = vmatpush1.bf16.msra.mxu0 0
        %810 = vmatprep.subr.bf16.mxu0 0
        %811 = vmatpush1.bf16.msra.mxu0 0
        %812 = vmatprep.subr.bf16.mxu0 0
        %813 = vmatpush1.bf16.msra.mxu0 0
        %814 = vmatprep.subr.bf16.mxu0 0
        %815 = vmatpush1.bf16.msra.mxu0 0
        %816 = vmatprep.mubr.bf16.mxu0 0
        %817 = vmatmul.mubr.bf16.gmra.mrb[0].mxu0 %v776
        %v818 = vpop.f32.mrb[0].mxu0
        %v819 = vadd.f32 0.0, %v818
        %v820 = vpop.f32.mrb[0].mxu0
        %v821 = vpop.f32.mrb[0].mxu0
        %v822 = vpop.f32.mrb[0].mxu0
        %823 = vdwg.mxu0
        %v824 = vpack.c.bf16 %v659, %v659
        %v825 = vpack.c.bf16 %v819, %v819
        %v826 = vmul.bf16 %v824, %v825
        %v827 = vld [vmem:[%s4] sm:$0xf]
        %v828 = vld [vmem:[%s4 + $0x4] sm:$0xf]
        %v829 = vld [vmem:[%s4 + $0x8] sm:$0xf]
        %v830 = vld [vmem:[%s4 + $0xc] sm:$0xf]
        %v835 = vunpack.c.l.b16 %v827
        %v836 = vunpack.c.l.b16 %v828
        %v837 = vunpack.c.l.b16 %v829
        %v838 = vunpack.c.l.b16 %v830
        %v839 = vpack.c.b16 %v836, %v835
        %v840 = vpack.c.b16 %v838, %v837
        %v844 = vsel %vm575, %v826, 0
        %846 = vmatprep.subr.bf16.mxu0 0
        %847 = vmatpush1.bf16.msra.mxu0 %v839
        %848 = vmatprep.subr.bf16.mxu0 0
        %849 = vmatpush1.bf16.msra.mxu0 %v840
        %850 = vmatprep.subr.bf16.mxu0 0
        %851 = vmatpush1.bf16.msra.mxu0 0
        %852 = vmatprep.subr.bf16.mxu0 0
        %853 = vmatpush1.bf16.msra.mxu0 0
        %854 = vmatprep.subr.bf16.mxu0 0
        %855 = vmatpush1.bf16.msra.mxu0 0
        %856 = vmatprep.subr.bf16.mxu0 0
        %857 = vmatpush1.bf16.msra.mxu0 0
        %858 = vmatprep.subr.bf16.mxu0 0
        %859 = vmatpush1.bf16.msra.mxu0 0
        %860 = vmatprep.subr.bf16.mxu0 0
        %861 = vmatpush1.bf16.msra.mxu0 0
        %862 = vmatprep.subr.bf16.mxu0 0
        %863 = vmatpush1.bf16.msra.mxu0 0
        %864 = vmatprep.subr.bf16.mxu0 0
        %865 = vmatpush1.bf16.msra.mxu0 0
        %866 = vmatprep.subr.bf16.mxu0 0
        %867 = vmatpush1.bf16.msra.mxu0 0
        %868 = vmatprep.subr.bf16.mxu0 0
        %869 = vmatpush1.bf16.msra.mxu0 0
        %870 = vmatprep.subr.bf16.mxu0 0
        %871 = vmatpush1.bf16.msra.mxu0 0
        %872 = vmatprep.subr.bf16.mxu0 0
        %873 = vmatpush1.bf16.msra.mxu0 0
        %874 = vmatprep.subr.bf16.mxu0 0
        %875 = vmatpush1.bf16.msra.mxu0 0
        %876 = vmatprep.subr.bf16.mxu0 0
        %877 = vmatpush1.bf16.msra.mxu0 0
        %878 = vmatprep.mubr.bf16.mxu0 0
        %879 = vmatmul.mubr.bf16.gmra.mrb[0].mxu0 %v844
        %v880 = vpop.f32.mrb[0].mxu0
        %v881 = vadd.f32 0.0, %v880
        %v882 = vpop.f32.mrb[0].mxu0
        %v883 = vpop.f32.mrb[0].mxu0
        %v884 = vpop.f32.mrb[0].mxu0
        %885 = vdwg.mxu0
        %v886 = vsel %vm665, %v881, -inf
        %v887 = vrot.slane %v886, 4
        %v888 = vmax.f32 %v886, %v887
        %v889 = vrot.slane %v888, 2
        %v890 = vmax.f32 %v888, %v889
        %v891 = vrot.slane %v890, 1
        %v892 = vmax.f32 %v890, %v891
        %v893 = vsub.f32 %v881, %v892
        %v894 = vmul.f32 %v893, 1.442695
        %v895 = vpow.pop %v894
        %v896 = vsel %vm665, %v895, 0.0
        %v897 = vrot.slane %v896, 4
        %v898 = vadd.f32 %v896, %v897
        %v899 = vrot.slane %v898, 2
        %v900 = vadd.f32 %v898, %v899
        %v901 = vrot.slane %v900, 1
        %v902 = vadd.f32 %v900, %v901
        %v903 = vrcp.pop %v902
        %v904 = vmul.f32 %v895, %v903
        %v905 = vpack.c.bf16 %v904, %v904
        %v906 = vld [vmem:[%s5] sm:$0xf]
        %v908 = vsel %vm665, %v905, 0
        %v911 = vsel %vm669, %v906, 0
        %913 = vmatprep.subr.bf16.mxu0 0
        %914 = vmatpush1.bf16.msra.mxu0 %v911
        %915 = vmatprep.subr.bf16.mxu0 0
        %916 = vmatpush1.bf16.msra.mxu0 0
        %917 = vmatprep.subr.bf16.mxu0 0
        %918 = vmatpush1.bf16.msra.mxu0 0
        %919 = vmatprep.subr.bf16.mxu0 0
        %920 = vmatpush1.bf16.msra.mxu0 0
        %921 = vmatprep.subr.bf16.mxu0 0
        %922 = vmatpush1.bf16.msra.mxu0 0
        %923 = vmatprep.subr.bf16.mxu0 0
        %924 = vmatpush1.bf16.msra.mxu0 0
        %925 = vmatprep.subr.bf16.mxu0 0
        %926 = vmatpush1.bf16.msra.mxu0 0
        %927 = vmatprep.subr.bf16.mxu0 0
        %928 = vmatpush1.bf16.msra.mxu0 0
        %929 = vmatprep.subr.bf16.mxu0 0
        %930 = vmatpush1.bf16.msra.mxu0 0
        %931 = vmatprep.subr.bf16.mxu0 0
        %932 = vmatpush1.bf16.msra.mxu0 0
        %933 = vmatprep.subr.bf16.mxu0 0
        %934 = vmatpush1.bf16.msra.mxu0 0
        %935 = vmatprep.subr.bf16.mxu0 0
        %936 = vmatpush1.bf16.msra.mxu0 0
        %937 = vmatprep.subr.bf16.mxu0 0
        %938 = vmatpush1.bf16.msra.mxu0 0
        %939 = vmatprep.subr.bf16.mxu0 0
        %940 = vmatpush1.bf16.msra.mxu0 0
        %941 = vmatprep.subr.bf16.mxu0 0
        %942 = vmatpush1.bf16.msra.mxu0 0
        %943 = vmatprep.subr.bf16.mxu0 0
        %944 = vmatpush1.bf16.msra.mxu0 0
        %945 = vmatprep.mubr.bf16.mxu0 0
        %946 = vmatmul.mubr.bf16.gmra.mrb[0].mxu0 %v908
        %v947 = vpop.f32.mrb[0].mxu0
        %v948 = vadd.f32 0.0, %v947
        %v949 = vpop.f32.mrb[0].mxu0
        %v950 = vpop.f32.mrb[0].mxu0
        %v951 = vpop.f32.mrb[0].mxu0
        %952 = vdwg.mxu0
        %v953 = vpack.c.bf16 %v948, %v948
        %955 = vrot.lane.b32.xlu0 %v824, 96
        %v956 = vpop.permute.xlu0 %955
        %v958 = vmul.bf16 %v953, %v956
        %v959 = vld [vmem:[%s2] sm:$0x1]
        %v961 = vsel %vm665, %v959, 0
        %v964 = vsel %vm669, %v958, 0
        %966 = vmatprep.subr.bf16.mxu0 0
        %967 = vmatpush1.bf16.msra.mxu0 %v964
        %968 = vmatprep.subr.bf16.mxu0 0
        %969 = vmatpush1.bf16.msra.mxu0 0
        %970 = vmatprep.subr.bf16.mxu0 0
        %971 = vmatpush1.bf16.msra.mxu0 0
        %972 = vmatprep.subr.bf16.mxu0 0
        %973 = vmatpush1.bf16.msra.mxu0 0
        %974 = vmatprep.subr.bf16.mxu0 0
        %975 = vmatpush1.bf16.msra.mxu0 0
        %976 = vmatprep.subr.bf16.mxu0 0
        %977 = vmatpush1.bf16.msra.mxu0 0
        %978 = vmatprep.subr.bf16.mxu0 0
        %979 = vmatpush1.bf16.msra.mxu0 0
        %980 = vmatprep.subr.bf16.mxu0 0
        %981 = vmatpush1.bf16.msra.mxu0 0
        %982 = vmatprep.subr.bf16.mxu0 0
        %983 = vmatpush1.bf16.msra.mxu0 0
        %984 = vmatprep.subr.bf16.mxu0 0
        %985 = vmatpush1.bf16.msra.mxu0 0
        %986 = vmatprep.subr.bf16.mxu0 0
        %987 = vmatpush1.bf16.msra.mxu0 0
        %988 = vmatprep.subr.bf16.mxu0 0
        %989 = vmatpush1.bf16.msra.mxu0 0
        %990 = vmatprep.subr.bf16.mxu0 0
        %991 = vmatpush1.bf16.msra.mxu0 0
        %992 = vmatprep.subr.bf16.mxu0 0
        %993 = vmatpush1.bf16.msra.mxu0 0
        %994 = vmatprep.subr.bf16.mxu0 0
        %995 = vmatpush1.bf16.msra.mxu0 0
        %996 = vmatprep.subr.bf16.mxu0 0
        %997 = vmatpush1.bf16.msra.mxu0 0
        %998 = vmatprep.mubr.bf16.mxu0 0
        %999 = vmatmul.mubr.bf16.gmra.mrb[0].mxu0 %v961
        %v1000 = vpop.f32.mrb[0].mxu0
        %v1001 = vadd.f32 0.0, %v1000
        %v1002 = vpop.f32.mrb[0].mxu0
        %v1003 = vpop.f32.mrb[0].mxu0
        %v1004 = vpop.f32.mrb[0].mxu0
        %1005 = vdwg.mxu0
        %v1006 = vpack.c.bf16 %v1001, %v1001
        %v1007 = vld [vmem:[%s10] sm:$0xf]
        %v1008 = vld [vmem:[%s10 + $0x4] sm:$0xf]
        %v1009 = vld [vmem:[%s10 + $0x8] sm:$0xf]
        %v1010 = vld [vmem:[%s10 + $0xc] sm:$0xf]
        %v1011 = vld [vmem:[%s11] sm:$0x1]
        %v1016 = vunpack.c.l.b16 %v1007
        %v1017 = vunpack.c.l.b16 %v1008
        %v1018 = vunpack.c.l.b16 %v1009
        %v1019 = vunpack.c.l.b16 %v1010
        %v1020 = vpack.c.b16 %v1017, %v1016
        %v1021 = vpack.c.b16 %v1019, %v1018
        %v1025 = vsel %vm575, %v1006, 0
        %1027 = vmatprep.subr.bf16.mxu0 0
        %1028 = vmatpush1.bf16.msra.mxu0 %v1020
        %1029 = vmatprep.subr.bf16.mxu0 0
        %1030 = vmatpush1.bf16.msra.mxu0 %v1021
        %1031 = vmatprep.subr.bf16.mxu0 0
        %1032 = vmatpush1.bf16.msra.mxu0 0
        %1033 = vmatprep.subr.bf16.mxu0 0
        %1034 = vmatpush1.bf16.msra.mxu0 0
        %1035 = vmatprep.subr.bf16.mxu0 0
        %1036 = vmatpush1.bf16.msra.mxu0 0
        %1037 = vmatprep.subr.bf16.mxu0 0
        %1038 = vmatpush1.bf16.msra.mxu0 0
        %1039 = vmatprep.subr.bf16.mxu0 0
        %1040 = vmatpush1.bf16.msra.mxu0 0
        %1041 = vmatprep.subr.bf16.mxu0 0
        %1042 = vmatpush1.bf16.msra.mxu0 0
        %1043 = vmatprep.subr.bf16.mxu0 0
        %1044 = vmatpush1.bf16.msra.mxu0 0
        %1045 = vmatprep.subr.bf16.mxu0 0
        %1046 = vmatpush1.bf16.msra.mxu0 0
        %1047 = vmatprep.subr.bf16.mxu0 0
        %1048 = vmatpush1.bf16.msra.mxu0 0
        %1049 = vmatprep.subr.bf16.mxu0 0
        %1050 = vmatpush1.bf16.msra.mxu0 0
        %1051 = vmatprep.subr.bf16.mxu0 0
        %1052 = vmatpush1.bf16.msra.mxu0 0
        %1053 = vmatprep.subr.bf16.mxu0 0
        %1054 = vmatpush1.bf16.msra.mxu0 0
        %1055 = vmatprep.subr.bf16.mxu0 0
        %1056 = vmatpush1.bf16.msra.mxu0 0
        %1057 = vmatprep.subr.bf16.mxu0 0
        %1058 = vmatpush1.bf16.msra.mxu0 0
        %1059 = vmatprep.mubr.bf16.mxu0 0
        %1060 = vmatmul.mubr.bf16.gmra.mrb[0].mxu0 %v1025
        %v1061 = vpop.f32.mrb[0].mxu0
        %v1062 = vadd.f32 %v1011, %v1061
        %v1063 = vpop.f32.mrb[0].mxu0
        %v1064 = vpop.f32.mrb[0].mxu0
        %v1065 = vpop.f32.mrb[0].mxu0
        %1066 = vdwg.mxu0
        %v1067 = vpack.c.bf16 %v1062, %v1062
        %v1069 = vand.u32 %v1067, %v780
        %1071 = vmatprep.subr.bf16.mxu0 0
        %1072 = vmatpush1.bf16.msra.mxu0 %v1069
        %1073 = vmatprep.subr.bf16.mxu0 0
        %1074 = vmatpush1.bf16.msra.mxu0 0
        %1075 = vmatprep.subr.bf16.mxu0 0
        %1076 = vmatpush1.bf16.msra.mxu0 0
        %1077 = vmatprep.subr.bf16.mxu0 0
        %1078 = vmatpush1.bf16.msra.mxu0 0
        %1079 = vmatprep.subr.bf16.mxu0 0
        %1080 = vmatpush1.bf16.msra.mxu0 0
        %1081 = vmatprep.subr.bf16.mxu0 0
        %1082 = vmatpush1.bf16.msra.mxu0 0
        %1083 = vmatprep.subr.bf16.mxu0 0
        %1084 = vmatpush1.bf16.msra.mxu0 0
        %1085 = vmatprep.subr.bf16.mxu0 0
        %1086 = vmatpush1.bf16.msra.mxu0 0
        %1087 = vmatprep.subr.bf16.mxu0 0
        %1088 = vmatpush1.bf16.msra.mxu0 0
        %1089 = vmatprep.subr.bf16.mxu0 0
        %1090 = vmatpush1.bf16.msra.mxu0 0
        %1091 = vmatprep.subr.bf16.mxu0 0
        %1092 = vmatpush1.bf16.msra.mxu0 0
        %1093 = vmatprep.subr.bf16.mxu0 0
        %1094 = vmatpush1.bf16.msra.mxu0 0
        %1095 = vmatprep.subr.bf16.mxu0 0
        %1096 = vmatpush1.bf16.msra.mxu0 0
        %1097 = vmatprep.subr.bf16.mxu0 0
        %1098 = vmatpush1.bf16.msra.mxu0 0
        %1099 = vmatprep.subr.bf16.mxu0 0
        %1100 = vmatpush1.bf16.msra.mxu0 0
        %1101 = vmatprep.subr.bf16.mxu0 0
        %1102 = vmatpush1.bf16.msra.mxu0 0
        %1103 = vmatprep.mubr.bf16.mxu0 0
        %1104 = vmatmul.mubr.bf16.gmra.mrb[0].mxu0 %v776
        %v1105 = vpop.f32.mrb[0].mxu0
        %v1106 = vadd.f32 0.0, %v1105
        %v1107 = vpop.f32.mrb[0].mxu0
        %v1108 = vpop.f32.mrb[0].mxu0
        %v1109 = vpop.f32.mrb[0].mxu0
        %1110 = vdwg.mxu0
        %v1111 = vadd.f32 %v572, %v1106
        %v1112 = vld [vmem:[%s12] sm:$0x1]
        %v1113 = vld [vmem:[%s13] sm:$0x1]
        %v1114 = vsel %vm575, %v1111, 0.0
        %1115 = vadd.xlane.f32.xlu0 %v1114
        %v1116 = vpop.xlane.xlu0 %1115
        %v1117 = vmul.f32 %v1116, %v579
        %v1118 = vsub.f32 %v1111, %v1117
        %v1119 = vmul.f32 %v1118, %v1118
        %v1120 = vsel %vm575, %v1119, 0.0
        %1121 = vadd.xlane.f32.xlu0 %v1120
        %v1122 = vpop.xlane.xlu0 %1121
        %v1123 = vmul.f32 %v1122, %v579
        %v1124 = vadd.f32 %v1123, 1e-05
        %v1125 = vrsqrt.pop %v1124
        %v1126 = vmul.f32 %v1118, %v1125
        %v1128 = vlaneseq
        %v1129 = vshrl.u32 %v1128, 7
        %v1130 = vsub.s32 0, %v1129
        %v1131 = vrot.slane %v1112, %v1130
        %v1133 = vmul.f32 %v1126, %v1131
        %v1135 = vlaneseq
        %v1136 = vshrl.u32 %v1135, 7
        %v1137 = vsub.s32 0, %v1136
        %v1138 = vrot.slane %v1113, %v1137
        %v1140 = vadd.f32 %v1133, %v1138
        %v1141 = vpack.c.bf16 %v1140, %v1140
        %v1142 = vld [vmem:[%s14] sm:$0xf]
        %v1143 = vld [vmem:[%s14 + $0x4] sm:$0xf]
        %v1144 = vld [vmem:[%s14 + $0x8] sm:$0xf]
        %v1145 = vld [vmem:[%s14 + $0xc] sm:$0xf]
        %v1146 = vld [vmem:[%s15] sm:$0x1]
        %v1148 = vlaneseq
        %v1149 = vshrl.u32 %v1148, 7
        %v1150 = vsub.s32 0, %v1149
        %v1151 = vrot.slane %v1146, %v1150
        %v1157 = vunpack.c.l.b16 %v1142
        %v1158 = vunpack.c.l.b16 %v1143
        %v1159 = vunpack.c.l.b16 %v1144
        %v1160 = vunpack.c.l.b16 %v1145
        %v1161 = vpack.c.b16 %v1158, %v1157
        %v1162 = vpack.c.b16 %v1160, %v1159
        %v1166 = vsel %vm575, %v1141, 0
        %1168 = vmatprep.subr.bf16.mxu0 0
        %1169 = vmatpush1.bf16.msra.mxu0 %v1161
        %1170 = vmatprep.subr.bf16.mxu0 0
        %1171 = vmatpush1.bf16.msra.mxu0 %v1162
        %1172 = vmatprep.subr.bf16.mxu0 0
        %1173 = vmatpush1.bf16.msra.mxu0 0
        %1174 = vmatprep.subr.bf16.mxu0 0
        %1175 = vmatpush1.bf16.msra.mxu0 0
        %1176 = vmatprep.subr.bf16.mxu0 0
        %1177 = vmatpush1.bf16.msra.mxu0 0
        %1178 = vmatprep.subr.bf16.mxu0 0
        %1179 = vmatpush1.bf16.msra.mxu0 0
        %1180 = vmatprep.subr.bf16.mxu0 0
        %1181 = vmatpush1.bf16.msra.mxu0 0
        %1182 = vmatprep.subr.bf16.mxu0 0
        %1183 = vmatpush1.bf16.msra.mxu0 0
        %1184 = vmatprep.subr.bf16.mxu0 0
        %1185 = vmatpush1.bf16.msra.mxu0 0
        %1186 = vmatprep.subr.bf16.mxu0 0
        %1187 = vmatpush1.bf16.msra.mxu0 0
        %1188 = vmatprep.subr.bf16.mxu0 0
        %1189 = vmatpush1.bf16.msra.mxu0 0
        %1190 = vmatprep.subr.bf16.mxu0 0
        %1191 = vmatpush1.bf16.msra.mxu0 0
        %1192 = vmatprep.subr.bf16.mxu0 0
        %1193 = vmatpush1.bf16.msra.mxu0 0
        %1194 = vmatprep.subr.bf16.mxu0 0
        %1195 = vmatpush1.bf16.msra.mxu0 0
        %1196 = vmatprep.subr.bf16.mxu0 0
        %1197 = vmatpush1.bf16.msra.mxu0 0
        %1198 = vmatprep.subr.bf16.mxu0 0
        %1199 = vmatpush1.bf16.msra.mxu0 0
        %1200 = vmatprep.mubr.bf16.mxu0 0
        %1201 = vmatmul.mubr.bf16.gmra.mrb[0].mxu0 %v1166
        %v1202 = vpop.f32.mrb[0].mxu0
        %v1203 = vadd.f32 %v1151, %v1202
        %v1204 = vpop.f32.mrb[0].mxu0
        %v1205 = vpop.f32.mrb[0].mxu0
        %v1206 = vpop.f32.mrb[0].mxu0
        %1207 = vdwg.mxu0
        %v1208 = vmul.f32 %v1203, 0.5
        %v1209 = vmul.f32 %v1203, 0.70710677
        %vm1210 = vcmp.ge.f32.partialorder %v1209, 0.0
        %v1211 = vsel %vm1210, 1.0, -1.0
        %v1212 = vand.u32 2147483647, %v1209
        %v1213 = vmul.f32 %v1212, 0.3275911
        %v1214 = vadd.f32 %v1213, 1.0
        %v1215 = vrcp.pop %v1214
        %v1216 = vmul.f32 %v1215, 1.0614054
        %v1217 = vadd.f32 %v1216, -1.4531521
        %v1218 = vmul.f32 %v1217, %v1215
        %v1219 = vadd.f32 %v1218, 1.4214138
        %v1220 = vmul.f32 %v1219, %v1215
        %v1221 = vadd.f32 %v1220, -0.28449672
        %v1222 = vmul.f32 %v1221, %v1215
        %v1223 = vadd.f32 %v1222, 0.2548296
        %v1224 = vmul.f32 %v1223, %v1215
        %v1225 = vsub.f32 0.0, %v1212
        %v1226 = vmul.f32 %v1225, %v1212
        %v1227 = vmul.f32 %v1226, 1.442695
        %v1228 = vpow.pop %v1227
        %v1229 = vmul.f32 %v1224, %v1228
        %v1230 = vsub.f32 1.0, %v1229
        %v1231 = vmul.f32 %v1211, %v1230
        %v1232 = vadd.f32 %v1231, 1.0
        %v1233 = vmul.f32 %v1208, %v1232
        %v1234 = vpack.c.bf16 %v1233, %v1233
        %v1235 = vld [vmem:[%s16] sm:$0xf]
        %v1236 = vld [vmem:[%s16 + $0x4] sm:$0xf]
        %v1237 = vld [vmem:[%s16 + $0x8] sm:$0xf]
        %v1238 = vld [vmem:[%s16 + $0xc] sm:$0xf]
        %v1239 = vld [vmem:[%s16 + $0x10] sm:$0xf]
        %v1240 = vld [vmem:[%s16 + $0x14] sm:$0xf]
        %v1241 = vld [vmem:[%s16 + $0x18] sm:$0xf]
        %v1242 = vld [vmem:[%s16 + $0x1c] sm:$0xf]
        %v1243 = vld [vmem:[%s16 + $0x20] sm:$0xf]
        %v1244 = vld [vmem:[%s16 + $0x24] sm:$0xf]
        %v1245 = vld [vmem:[%s16 + $0x28] sm:$0xf]
        %v1246 = vld [vmem:[%s16 + $0x2c] sm:$0xf]
        %v1247 = vld [vmem:[%s16 + $0x30] sm:$0xf]
        %v1248 = vld [vmem:[%s16 + $0x34] sm:$0xf]
        %v1249 = vld [vmem:[%s16 + $0x38] sm:$0xf]
        %v1250 = vld [vmem:[%s16 + $0x3c] sm:$0xf]
        %v1251 = vld [vmem:[%s17] sm:$0x1]
        %v1253 = vlaneseq
        %v1254 = vshrl.u32 %v1253, 7
        %v1255 = vsub.s32 0, %v1254
        %v1256 = vrot.slane %v1251, %v1255
        %v1274 = vunpack.c.l.b16 %v1235
        %v1275 = vunpack.c.l.b16 %v1236
        %v1276 = vunpack.c.l.b16 %v1237
        %v1277 = vunpack.c.l.b16 %v1238
        %v1278 = vunpack.c.l.b16 %v1239
        %v1279 = vunpack.c.l.b16 %v1240
        %v1280 = vunpack.c.l.b16 %v1241
        %v1281 = vunpack.c.l.b16 %v1242
        %v1282 = vunpack.c.l.b16 %v1243
        %v1283 = vunpack.c.l.b16 %v1244
        %v1284 = vunpack.c.l.b16 %v1245
        %v1285 = vunpack.c.l.b16 %v1246
        %v1286 = vunpack.c.l.b16 %v1247
        %v1287 = vunpack.c.l.b16 %v1248
        %v1288 = vunpack.c.l.b16 %v1249
        %v1289 = vunpack.c.l.b16 %v1250
        %v1290 = vpack.c.b16 %v1275, %v1274
        %v1291 = vpack.c.b16 %v1277, %v1276
        %v1292 = vpack.c.b16 %v1279, %v1278
        %v1293 = vpack.c.b16 %v1281, %v1280
        %v1294 = vpack.c.b16 %v1283, %v1282
        %v1295 = vpack.c.b16 %v1285, %v1284
        %v1296 = vpack.c.b16 %v1287, %v1286
        %v1297 = vpack.c.b16 %v1289, %v1288
        %1306 = vmatprep.subr.bf16.mxu0 0
        %1307 = vmatpush1.bf16.msra.mxu0 %v1290
        %1308 = vmatprep.subr.bf16.mxu0 0
        %1309 = vmatpush1.bf16.msra.mxu0 %v1291
        %1310 = vmatprep.subr.bf16.mxu0 0
        %1311 = vmatpush1.bf16.msra.mxu0 %v1292
        %1312 = vmatprep.subr.bf16.mxu0 0
        %1313 = vmatpush1.bf16.msra.mxu0 %v1293
        %1314 = vmatprep.subr.bf16.mxu0 0
        %1315 = vmatpush1.bf16.msra.mxu0 %v1294
        %1316 = vmatprep.subr.bf16.mxu0 0
        %1317 = vmatpush1.bf16.msra.mxu0 %v1295
        %1318 = vmatprep.subr.bf16.mxu0 0
        %1319 = vmatpush1.bf16.msra.mxu0 %v1296
        %1320 = vmatprep.subr.bf16.mxu0 0
        %1321 = vmatpush1.bf16.msra.mxu0 %v1297
        %1322 = vmatprep.subr.bf16.mxu0 0
        %1323 = vmatpush1.bf16.msra.mxu0 0
        %1324 = vmatprep.subr.bf16.mxu0 0
        %1325 = vmatpush1.bf16.msra.mxu0 0
        %1326 = vmatprep.subr.bf16.mxu0 0
        %1327 = vmatpush1.bf16.msra.mxu0 0
        %1328 = vmatprep.subr.bf16.mxu0 0
        %1329 = vmatpush1.bf16.msra.mxu0 0
        %1330 = vmatprep.subr.bf16.mxu0 0
        %1331 = vmatpush1.bf16.msra.mxu0 0
        %1332 = vmatprep.subr.bf16.mxu0 0
        %1333 = vmatpush1.bf16.msra.mxu0 0
        %1334 = vmatprep.subr.bf16.mxu0 0
        %1335 = vmatpush1.bf16.msra.mxu0 0
        %1336 = vmatprep.subr.bf16.mxu0 0
        %1337 = vmatpush1.bf16.msra.mxu0 0
        %1338 = vmatprep.mubr.bf16.mxu0 0
        %1339 = vmatmul.mubr.bf16.gmra.mrb[0].mxu0 %v1234
        %v1340 = vpop.f32.mrb[0].mxu0
        %v1341 = vadd.f32 %v1256, %v1340
        %v1342 = vpop.f32.mrb[0].mxu0
        %v1343 = vpop.f32.mrb[0].mxu0
        %v1344 = vpop.f32.mrb[0].mxu0
        %1345 = vdwg.mxu0
        %v1346 = vadd.f32 %v1111, %v1341
        %1347 = vst.msk [vmem:[%s566] sm:$0xff] %vm575, %v1346
        %s1348 = sand.u32 %s423, 1
        %s1349 = scalar_lea.sflag [#allocation3], %s1348
        %s1350 = sand.u32 %s423, 1
        %s1351 = smul.addr %s1350, 8
        %s1352 = scalar_lea.vmem [#allocation2], %s1351
        // Predicated region
        $region93: #{tpu_custom_call.1} parent=91 // pred_check
          %p1353 = pneg %p433
        $region94: #{tpu_custom_call.1} parent=91 // pred_check_branch
          %1355 = sbr.rel (%p1353) target = $region96
        $region95: #{tpu_custom_call.1} parent=91 // pred_region
          %s1357 = ssub.s32 128, 128
          %1358 = vsyncadd %s1349, %s1357
          %s1359 = smul.addr %s32, 128
          %s1360 = scalar_lea.hbm %s18, %s1359
          %s1362 = sshll.u32 %s1352, 4
          %s1363 = int_to_ptr.vmem [resolvable:$true] %s1362
          %1365 = dma.vmem_to_hbm [thread:$0]  %s1363, 128, %s1360, %s1349
        $region96: #{tpu_custom_call.1} parent=91 // pred_fallthru
          _
      $region92: #{tpu_custom_call.1} parent=5 // pred_fallthru
        _
      %p1366 = scmp.le.s32.totalorder 2, %s27
      // Predicated region
      $region97: #{tpu_custom_call.1} parent=5 // pred_check
        %p1367 = pneg %p1366
      $region98: #{tpu_custom_call.1} parent=5 // pred_check_branch
        %1369 = sbr.rel (%p1367) target = $region100
      $region99: #{tpu_custom_call.1} parent=5 // pred_region
        %s1370 = ssub.s32 %s27, 2
        // Predicated region
        $region101: #{tpu_custom_call.1} parent=99 // pred_check
          %p1371 = pneg %p439
        $region102: #{tpu_custom_call.1} parent=99 // pred_check_branch
          %1373 = sbr.rel (%p1371) target = $region104
        $region103: #{tpu_custom_call.1} parent=99 // pred_region
          %s1374 = sand.u32 %s424, 1
          %s1375 = scalar_lea.sflag [#allocation3], %s1374
          %s1376 = sand.u32 %s424, 1
          %s1377 = smul.addr %s1376, 8
          %s1378 = scalar_lea.vmem [#allocation2], %s1377
          %1379 = dma.done %s1375, 128
        $region104: #{tpu_custom_call.1} parent=99 // pred_fallthru
          _
      $region100: #{tpu_custom_call.1} parent=5 // pred_fallthru
        _
    $region6: #{tpu_custom_call.1} parent=1 // loop_footer
      %s31 = sadd.s32 1, %s27
    $region7: #{tpu_custom_call.1} parent=1 // loop_footer_branch
      %26 = sbr.rel target = $region3
    $region8: #{tpu_custom_call.1} parent=1 // loop_exit
      _
    %1380 = vsyncpa [#allocation3], 1
    %s1381 = scalar_lea.sflag [#allocation3], 1
    %1382 = vsyncpa %s1381, 1

</llo_original>
